<compile_context>
chip_gen: v7x
topology: tpu7x:2x2x1
jax: 0.10.0
libtpu: 0.0.40
codegen_flags: <defaults>
</compile_context>

<pallas_src>
import functools

import jax
import jax.numpy as jnp
from jax.experimental import pallas as pl
from jax.experimental.pallas import tpu as pltpu

HIDDEN_SIZE = 32      # scaled down from 500 for the example
N_LAYERS = 2
INPUT_SIZE = 20       # vocab size
DROPOUT = 0.5         # TODO(synk): inter-layer dropout is train-only; eval forward is identity.
TIME_CHUNK = 64       # max timesteps resident per VMEM chunk
LANE = 128
SUBLANE = 8


def _round_up(x, m):
    return ((x + m - 1) // m) * m


def _chunk_index(d, c, nc):
    """Forward (d=0) walks chunks 0..nc-1; backward (d=1) walks nc-1..0."""
    return c + d * (nc - 1 - 2 * c)


def _sigmoid(x):
    # sigmoid(x) == 0.5 * (tanh(0.5*x) + 1): one EUP push per element
    # instead of exp + reciprocal.
    return 0.5 * (jnp.tanh(0.5 * x) + 1.0)


def _bilstm_layer_kernel(len_ref, gx_ref, whh_ref, out_ref, hn_ref, cn_ref,
                         h_sc, c_sc, *, nc):
    """One grid step == one time-chunk of one direction of a masked LSTM layer.

    len_ref: (B, 1) int32 valid lengths (0 for padded batch rows).
    gx_ref:  (Tt, B, 4H) bf16   x @ W_ih + b for this direction / chunk.
    whh_ref: (H, 4H)     bf16   recurrent weights for this direction.
    out_ref: (Tt, B, H)  f32    outputs (zeros at padded positions).
    hn_ref / cn_ref: (B, H) f32 final states (resident across the chunk axis).
    h_sc / c_sc: (B, H) f32 VMEM scratch carrying state across chunks.
    """
    d = pl.program_id(0)                      # 0 = forward, 1 = backward
    c = pl.program_id(1)                      # time-chunk grid index
    Tt, B, G = gx_ref.shape
    H = G // 4

    @pl.when(c == 0)
    def _init():
        h_sc[...] = jnp.zeros_like(h_sc)
        c_sc[...] = jnp.zeros_like(c_sc)

    lengths = len_ref[...]                    # (B, 1) int32
    w_hh = whh_ref[...]                       # (H, 4H) bf16, loop-resident
    t_base = _chunk_index(d, c, nc) * Tt      # global time of local step 0

    def run(reverse):
        def step(s, carry):
            h, cst = carry
            t_local = (Tt - 1 - s) if reverse else s            # affine index
            gates = (gx_ref[t_local].astype(jnp.float32)
                     + jnp.dot(h.astype(jnp.bfloat16), w_hh,
                               preferred_element_type=jnp.float32))
            i_g = _sigmoid(gates[:, 0:H])
            f_g = _sigmoid(gates[:, H:2 * H])
            g_g = jnp.tanh(gates[:, 2 * H:3 * H])
            o_g = _sigmoid(gates[:, 3 * H:4 * H])

            c_new = f_g * cst + i_g * g_g
            h_new = o_g * jnp.tanh(c_new)

            valid = (t_base + t_local) < lengths                # (B, 1) bool
            out_ref[t_local] = jnp.where(valid, h_new, 0.0)     # pad_packed zeros
            return (jnp.where(valid, h_new, h),                 # masked: no update
                    jnp.where(valid, c_new, cst))

        # TODO(synk): at production batch (>=64 rows) tile the batch inside
        # `step` so h/c and the (B,4H) gates temporary don't occupy the whole
        # vreg file.
        h_fin, c_fin = jax.lax.fori_loop(0, Tt, step,
                                         (h_sc[...], c_sc[...]), unroll=8)
        h_sc[...] = h_fin
        c_sc[...] = c_fin

    @pl.when(d == 0)
    def _fwd():
        run(False)

    @pl.when(d == 1)
    def _bwd():
        run(True)

    hn_ref[...] = h_sc[...]   # resident across chunks; last chunk's write wins
    cn_ref[...] = c_sc[...]


def _bilstm_layer(lengths_2d, gates_x, w_hh, *, time_chunk):
    """gates_x: (2, Tp, B, 4H) bf16, w_hh: (2, H, 4H) bf16, lengths: (B,1) i32."""
    _, Tp, Bp, G = gates_x.shape
    Hp = G // 4
    Tt = time_chunk
    nc = Tp // Tt
    cidx = functools.partial(_chunk_index, nc=nc)

    out, h_n, c_n = pl.pallas_call(
        functools.partial(_bilstm_layer_kernel, nc=nc),
        out_shape=(jax.ShapeDtypeStruct((2, Tp, Bp, Hp), jnp.float32),
                   jax.ShapeDtypeStruct((2, Bp, Hp), jnp.float32),
                   jax.ShapeDtypeStruct((2, Bp, Hp), jnp.float32)),
        grid_spec=pltpu.PrefetchScalarGridSpec(
            num_scalar_prefetch=0,
            grid=(2, nc),                                  # (direction, chunk)
            in_specs=[
                pl.BlockSpec((Bp, 1), lambda d, c: (0, 0)),
                pl.BlockSpec((None, Tt, Bp, G),
                             lambda d, c: (d, cidx(d, c), 0, 0)),
                pl.BlockSpec((None, Hp, G), lambda d, c: (d, 0, 0)),
            ],
            out_specs=[
                pl.BlockSpec((None, Tt, Bp, Hp),
                             lambda d, c: (d, cidx(d, c), 0, 0)),
                pl.BlockSpec((None, Bp, Hp), lambda d, c: (d, 0, 0)),
                pl.BlockSpec((None, Bp, Hp), lambda d, c: (d, 0, 0)),
            ],
            scratch_shapes=[pltpu.VMEM((Bp, Hp), jnp.float32),
                            pltpu.VMEM((Bp, Hp), jnp.float32)],
        ),
        compiler_params=pltpu.CompilerParams(
            # direction axis: independent (core-shardable on 2-TC v7x);
            # time-chunk axis carries h/c state -> "arbitrary".
            dimension_semantics=("parallel", "arbitrary"),
            vmem_limit_bytes=64 * 1024 * 1024),
    )(lengths_2d, gates_x, w_hh)
    return out, h_n, c_n


def init_params(key, input_size, hidden_size, n_layers):
    """PyTorch-equivalent parameter shapes / init (unpadded, f32)."""
    params = {"lstm": []}
    k_emb, key = jax.random.split(key)
    # nn.Embedding default init: N(0, 1)
    params["embedding"] = jax.random.normal(
        k_emb, (input_size, hidden_size), dtype=jnp.float32)

    bound = 1.0 / (hidden_size ** 0.5)   # nn.LSTM default: U(-1/sqrt(H), 1/sqrt(H))
    for layer in range(n_layers):
        d_in = hidden_size if layer == 0 else 2 * hidden_size
        key, k1, k2, k3, k4 = jax.random.split(key, 5)
        w_ih = jax.random.uniform(k1, (2, d_in, 4 * hidden_size),
                                  minval=-bound, maxval=bound, dtype=jnp.float32)
        w_hh = jax.random.uniform(k2, (2, hidden_size, 4 * hidden_size),
                                  minval=-bound, maxval=bound, dtype=jnp.float32)
        b_ih = jax.random.uniform(k3, (2, 4 * hidden_size),
                                  minval=-bound, maxval=bound, dtype=jnp.float32)
        b_hh = jax.random.uniform(k4, (2, 4 * hidden_size),
                                  minval=-bound, maxval=bound, dtype=jnp.float32)
        params["lstm"].append((w_ih, w_hh, b_ih + b_hh))
    return params


def _pad_gate_dim(w, H, Hp):
    """Pad the trailing 4H gate axis to 4Hp, per gate block (i, f, g, o)."""
    lead = w.shape[:-1]
    w4 = w.reshape(lead + (4, H))
    w4 = jnp.pad(w4, [(0, 0)] * len(lead) + [(0, 0), (0, Hp - H)])
    return w4.reshape(lead + (4 * Hp,))


def _prepare_padded_params(params, H, Hp, n_layers):
    """Pad hidden dims to Hp (lane multiple) with zeros and cast MXU operands
    to bf16.  Padded hidden units get zero pre-activations forever, so they
    stay exactly zero and the real H columns are unchanged.
    TODO(synk): in production, pad/cast once at weight-load time, not per call.
    """
    out = {"embedding": jnp.pad(params["embedding"], ((0, 0), (0, Hp - H))),
           "lstm": []}
    for layer in range(n_layers):
        w_ih, w_hh, b = params["lstm"][layer]
        n_halves = w_ih.shape[1] // H
        w_ih = w_ih.reshape(2, n_halves, H, 4 * H)
        w_ih = jnp.pad(w_ih, ((0, 0), (0, 0), (0, Hp - H), (0, 0)))
        w_ih = _pad_gate_dim(w_ih, H, Hp).astype(jnp.bfloat16)
        w_hh = jnp.pad(w_hh, ((0, 0), (0, Hp - H), (0, 0)))
        w_hh = _pad_gate_dim(w_hh, H, Hp).astype(jnp.bfloat16)
        b = _pad_gate_dim(b, H, Hp)                      # bias stays f32
        out["lstm"].append({"w_ih": w_ih, "w_hh": w_hh, "b": b})
    return out


def encoder_rnn_forward(params, input_seqs, input_lengths,
                        hidden_size=HIDDEN_SIZE, n_layers=N_LAYERS):
    """Equivalent of EncoderRNN.forward (eval mode).

    input_seqs:    (T, B) int32 token ids (sorted by decreasing length).
    input_lengths: (B,) int32 valid lengths.
    Returns (outputs (T, B, H), (h_n (2*n_layers, B, H), c_n (2*n_layers, B, H))).
    """
    T, B = input_seqs.shape
    H = hidden_size
    Hp = _round_up(H, LANE)                 # lane-aligned gate slices / stores
    Bp = _round_up(B, SUBLANE)              # sublane-aligned batch
    Tt = min(TIME_CHUNK, T)
    Tp = pl.cdiv(T, Tt) * Tt                # time padded to whole chunks

    padded = _prepare_padded_params(params, H, Hp, n_layers)

    embedded = padded["embedding"][input_seqs]            # (T, B, Hp) f32
    embedded = jnp.pad(embedded, ((0, Tp - T), (0, Bp - B), (0, 0)))
    lengths = jnp.pad(input_lengths.astype(jnp.int32), (0, Bp - B))
    lengths_2d = lengths.reshape(Bp, 1)

    # x_dirs: (n_input_halves, Tp, Bp, Hp).  Layer 0 has a single "half" (the
    # embedding); deeper layers consume both direction halves without ever
    # materializing the (T, B, 2H) concat.
    x_dirs = embedded[None]
    h_list, c_list = [], []
    out_dirs = None
    for layer in range(n_layers):
        lp = padded["lstm"][layer]
        # Hoisted input projection: one bf16 MXU einsum covering every
        # timestep and both directions, f32 accumulation, bf16 storage
        # (halves the dominant HBM traffic into the recurrence).
        gates_x = jnp.einsum('itbh,dihg->dtbg',
                             x_dirs.astype(jnp.bfloat16), lp["w_ih"],
                             preferred_element_type=jnp.float32)
        gates_x = (gates_x + lp["b"][:, None, None, :]).astype(jnp.bfloat16)

        out_dirs, h_n_l, c_n_l = _bilstm_layer(lengths_2d, gates_x,
                                               lp["w_hh"], time_chunk=Tt)
        h_list.append(h_n_l)
        c_list.append(c_n_l)
        x_dirs = out_dirs                                 # (2, Tp, Bp, Hp)
        # inter-layer dropout skipped (eval-mode forward)

    outputs = (out_dirs[0] + out_dirs[1])[:T, :B, :H]     # sum directions
    h_n = jnp.concatenate(h_list, axis=0)[:, :B, :H]      # (2*n_layers, B, H)
    c_n = jnp.concatenate(c_list, axis=0)[:, :B, :H]
    return outputs, (h_n, c_n)


if __name__ == "__main__":
    key = jax.random.PRNGKey(0)
    k_params, k_tokens = jax.random.split(key)

    T, B = 8, 2
    params = init_params(k_params, INPUT_SIZE, HIDDEN_SIZE, N_LAYERS)

    input_seqs = jax.random.randint(k_tokens, (T, B), 0, INPUT_SIZE,
                                    dtype=jnp.int32)
    input_lengths = jnp.array([8, 6], dtype=jnp.int32)   # sorted descending

    fwd = jax.jit(functools.partial(encoder_rnn_forward,
                                    hidden_size=HIDDEN_SIZE,
                                    n_layers=N_LAYERS))
    outputs, (h_n, c_n) = fwd(params, input_seqs, input_lengths)
    jax.block_until_ready((outputs, h_n, c_n))

    assert outputs.shape == (T, B, HIDDEN_SIZE)
    assert h_n.shape == (2 * N_LAYERS, B, HIDDEN_SIZE)
    assert c_n.shape == (2 * N_LAYERS, B, HIDDEN_SIZE)
    # pad_packed semantics: positions past the valid length are exactly zero.
    assert bool(jnp.all(outputs[int(input_lengths[1]):, 1, :] == 0.0))
    print("KERNEL_OK")
</pallas_src>

<mosaic_0001>
module attributes {stable_mosaic.version = 11 : i64} {
  func.func @_bilstm_layer_kernel(%arg0: i32, %arg1: i32, %arg2: memref<8x1xi32, #tpu.memory_space<vmem>>, %arg3: memref<1x8x8x512xbf16, #tpu.memory_space<vmem>>, %arg4: memref<1x128x512xbf16, #tpu.memory_space<vmem>>, %arg5: memref<1x8x8x128xf32, #tpu.memory_space<vmem>>, %arg6: memref<1x8x128xf32, #tpu.memory_space<vmem>>, %arg7: memref<1x8x128xf32, #tpu.memory_space<vmem>>, %arg8: memref<8x128xf32, #tpu.memory_space<vmem>>, %arg9: memref<8x128xf32, #tpu.memory_space<vmem>>) attributes {dimension_semantics = [#tpu.dimension_semantics<parallel>, #tpu.dimension_semantics<arbitrary>], iteration_bounds = array<i64: 2, 1>, scalar_prefetch = 0 : i64, scratch_operands = 2 : i64, tpu.core_type = #tpu.core_type<tc>, window_params = [{pipeline_mode = #tpu.pipeline_mode<synchronous>, transform_indices = @transform_0, window_bounds = array<i64: 8, 1>}, {transform_indices = @transform_1, window_bounds = array<i64: 1, 8, 8, 512>}, {transform_indices = @transform_2, window_bounds = array<i64: 1, 128, 512>}, {transform_indices = @transform_3, window_bounds = array<i64: 1, 8, 8, 128>}, {transform_indices = @transform_4, window_bounds = array<i64: 1, 8, 128>}, {transform_indices = @transform_5, window_bounds = array<i64: 1, 8, 128>}]} {
    %c0_i32 = arith.constant 0 : i32
    %0 = arith.cmpi eq, %arg1, %c0_i32 : i32
    %1 = arith.extui %0 : i1 to i32
    %c0_i32_0 = arith.constant 0 : i32
    %2 = arith.cmpi ne, %1, %c0_i32_0 : i32
    scf.if %2 {
      %cst = arith.constant 0.000000e+00 : f32
      %25 = vector.broadcast %cst : f32 to vector<8x128xf32>
      %c0_19 = arith.constant 0 : index
      %c0_20 = arith.constant 0 : index
      %26 = vector.load %arg8[%c0_19, %c0_20] : memref<8x128xf32, #tpu.memory_space<vmem>>, vector<8x128xf32>
      tpu.vector_store %arg8[%c0_19, %c0_20], %25 {strides = array<i32>} : memref<8x128xf32, #tpu.memory_space<vmem>>, vector<8x128xf32>,
      %cst_21 = arith.constant 0.000000e+00 : f32
      %27 = vector.broadcast %cst_21 : f32 to vector<8x128xf32>
      %c0_22 = arith.constant 0 : index
      %c0_23 = arith.constant 0 : index
      %28 = vector.load %arg9[%c0_22, %c0_23] : memref<8x128xf32, #tpu.memory_space<vmem>>, vector<8x128xf32>
      tpu.vector_store %arg9[%c0_22, %c0_23], %27 {strides = array<i32>} : memref<8x128xf32, #tpu.memory_space<vmem>>, vector<8x128xf32>,
    } else {
    }
    %c0 = arith.constant 0 : index
    %c0_1 = arith.constant 0 : index
    %3 = vector.load %arg2[%c0, %c0_1] : memref<8x1xi32, #tpu.memory_space<vmem>>, vector<8x1xi32>
    %c0_2 = arith.constant 0 : index
    %c0_3 = arith.constant 0 : index
    %c0_4 = arith.constant 0 : index
    %4 = vector.load %arg4[%c0_2, %c0_3, %c0_4] : memref<1x128x512xbf16, #tpu.memory_space<vmem>>, vector<1x128x512xbf16>
    %5 = vector.shape_cast %4 : vector<1x128x512xbf16> to vector<128x512xbf16>
    %c2_i32 = arith.constant 2 : i32
    %6 = arith.muli %c2_i32, %arg1 : i32
    %c0_i32_5 = arith.constant 0 : i32
    %7 = arith.subi %c0_i32_5, %6 : i32
    %8 = arith.muli %arg0, %7 : i32
    %9 = arith.addi %arg1, %8 : i32
    %c8_i32 = arith.constant 8 : i32
    %10 = arith.muli %9, %c8_i32 : i32
    %c0_i32_6 = arith.constant 0 : i32
    %11 = arith.cmpi eq, %arg0, %c0_i32_6 : i32
    %12 = arith.extui %11 : i1 to i32
    %c0_i32_7 = arith.constant 0 : i32
    %13 = arith.cmpi ne, %12, %c0_i32_7 : i32
    scf.if %13 {
      %c0_19 = arith.constant 0 : index
      %c0_20 = arith.constant 0 : index
      %25 = vector.load %arg8[%c0_19, %c0_20] : memref<8x128xf32, #tpu.memory_space<vmem>>, vector<8x128xf32>
      %c0_21 = arith.constant 0 : index
      %c0_22 = arith.constant 0 : index
      %26 = vector.load %arg9[%c0_21, %c0_22] : memref<8x128xf32, #tpu.memory_space<vmem>>, vector<8x128xf32>
      %c0_i32_23 = arith.constant 0 : i32
      %c0_24 = arith.constant 0 : index
      %27 = arith.index_cast %c0_i32_23 : i32 to index
      %c0_25 = arith.constant 0 : index
      %c0_26 = arith.constant 0 : index
      %28 = vector.load %arg3[%c0_24, %27, %c0_25, %c0_26] : memref<1x8x8x512xbf16, #tpu.memory_space<vmem>>, vector<1x1x8x512xbf16>
      %29 = vector.shape_cast %28 : vector<1x1x8x512xbf16> to vector<8x512xbf16>
      %30 = arith.extf %29 : vector<8x512xbf16> to vector<8x512xf32>
      %31 = arith.truncf %25 : vector<8x128xf32> to vector<8x128xbf16>
      %cst = arith.constant dense<0.000000e+00> : vector<8x512xf32>
      %32 = tpu.matmul %31, %5, %cst {dimension_numbers = #tpu.dot_dimension_numbers<[1], [0], [0], [1], [0, 0, 1, 1], [], []>} : vector<8x128xbf16>, vector<128x512xbf16>, vector<8x512xf32> -> vector<8x512xf32>
      %33 = arith.addf %30, %32 : vector<8x512xf32>
      %34 = vector.extract_strided_slice %33 {offsets = [0, 0], sizes = [8, 128], strides = [1, 1]} : vector<8x512xf32> to vector<8x128xf32>
      %cst_27 = arith.constant 5.000000e-01 : f32
      %35 = vector.broadcast %cst_27 : f32 to vector<8x128xf32>
      %36 = arith.mulf %35, %34 : vector<8x128xf32>
      %37 = math.tanh %36 : vector<8x128xf32>
      %cst_28 = arith.constant 1.000000e+00 : f32
      %38 = vector.broadcast %cst_28 : f32 to vector<8x128xf32>
      %39 = arith.addf %37, %38 : vector<8x128xf32>
      %cst_29 = arith.constant 5.000000e-01 : f32
      %40 = vector.broadcast %cst_29 : f32 to vector<8x128xf32>
      %41 = arith.mulf %40, %39 : vector<8x128xf32>
      %42 = vector.extract_strided_slice %33 {offsets = [0, 128], sizes = [8, 128], strides = [1, 1]} : vector<8x512xf32> to vector<8x128xf32>
      %cst_30 = arith.constant 5.000000e-01 : f32
      %43 = vector.broadcast %cst_30 : f32 to vector<8x128xf32>
      %44 = arith.mulf %43, %42 : vector<8x128xf32>
      %45 = math.tanh %44 : vector<8x128xf32>
      %cst_31 = arith.constant 1.000000e+00 : f32
      %46 = vector.broadcast %cst_31 : f32 to vector<8x128xf32>
      %47 = arith.addf %45, %46 : vector<8x128xf32>
      %cst_32 = arith.constant 5.000000e-01 : f32
      %48 = vector.broadcast %cst_32 : f32 to vector<8x128xf32>
      %49 = arith.mulf %48, %47 : vector<8x128xf32>
      %50 = vector.extract_strided_slice %33 {offsets = [0, 256], sizes = [8, 128], strides = [1, 1]} : vector<8x512xf32> to vector<8x128xf32>
      %51 = math.tanh %50 : vector<8x128xf32>
      %52 = vector.extract_strided_slice %33 {offsets = [0, 384], sizes = [8, 128], strides = [1, 1]} : vector<8x512xf32> to vector<8x128xf32>
      %cst_33 = arith.constant 5.000000e-01 : f32
      %53 = vector.broadcast %cst_33 : f32 to vector<8x128xf32>
      %54 = arith.mulf %53, %52 : vector<8x128xf32>
      %55 = math.tanh %54 : vector<8x128xf32>
      %cst_34 = arith.constant 1.000000e+00 : f32
      %56 = vector.broadcast %cst_34 : f32 to vector<8x128xf32>
      %57 = arith.addf %55, %56 : vector<8x128xf32>
      %cst_35 = arith.constant 5.000000e-01 : f32
      %58 = vector.broadcast %cst_35 : f32 to vector<8x128xf32>
      %59 = arith.mulf %58, %57 : vector<8x128xf32>
      %60 = arith.mulf %49, %26 : vector<8x128xf32>
      %61 = arith.mulf %41, %51 : vector<8x128xf32>
      %62 = arith.addf %60, %61 : vector<8x128xf32>
      %63 = math.tanh %62 : vector<8x128xf32>
      %64 = arith.mulf %59, %63 : vector<8x128xf32>
      %65 = arith.addi %10, %c0_i32_23 : i32
      %66 = vector.broadcast %65 : i32 to vector<8x1xi32>
      %67 = arith.cmpi slt, %66, %3 : vector<8x1xi32>
      %cst_36 = arith.constant 0.000000e+00 : f32
      %68 = vector.shape_cast %67 : vector<8x1xi1> to vector<8x1xi1>
      %69 = vector.broadcast %68 : vector<8x1xi1> to vector<8x128xi1>
      %70 = vector.broadcast %cst_36 : f32 to vector<8x128xf32>
      %71 = arith.select %69, %64, %70 : vector<8x128xi1>, vector<8x128xf32>
      %c0_37 = arith.constant 0 : index
      %72 = arith.index_cast %c0_i32_23 : i32 to index
      %c0_38 = arith.constant 0 : index
      %c0_39 = arith.constant 0 : index
      %73 = vector.load %arg5[%c0_37, %72, %c0_38, %c0_39] : memref<1x8x8x128xf32, #tpu.memory_space<vmem>>, vector<1x1x8x128xf32>
      %74 = vector.shape_cast %73 : vector<1x1x8x128xf32> to vector<8x128xf32>
      %75 = vector.shape_cast %71 : vector<8x128xf32> to vector<1x1x8x128xf32>
      tpu.vector_store %arg5[%c0_37, %72, %c0_38, %c0_39], %75 {strides = array<i32>} : memref<1x8x8x128xf32, #tpu.memory_space<vmem>>, vector<1x1x8x128xf32>,
      %76 = vector.shape_cast %67 : vector<8x1xi1> to vector<8x1xi1>
      %77 = vector.broadcast %76 : vector<8x1xi1> to vector<8x128xi1>
      %78 = arith.select %77, %64, %25 : vector<8x128xi1>, vector<8x128xf32>
      %79 = vector.shape_cast %67 : vector<8x1xi1> to vector<8x1xi1>
      %80 = vector.broadcast %79 : vector<8x1xi1> to vector<8x128xi1>
      %81 = arith.select %80, %62, %26 : vector<8x128xi1>, vector<8x128xf32>
      %c1_i32_40 = arith.constant 1 : i32
      %c0_41 = arith.constant 0 : index
      %82 = arith.index_cast %c1_i32_40 : i32 to index
      %c0_42 = arith.constant 0 : index
      %c0_43 = arith.constant 0 : index
      %83 = vector.load %arg3[%c0_41, %82, %c0_42, %c0_43] : memref<1x8x8x512xbf16, #tpu.memory_space<vmem>>, vector<1x1x8x512xbf16>
      %84 = vector.shape_cast %83 : vector<1x1x8x512xbf16> to vector<8x512xbf16>
      %85 = arith.extf %84 : vector<8x512xbf16> to vector<8x512xf32>
      %86 = arith.truncf %78 : vector<8x128xf32> to vector<8x128xbf16>
      %cst_44 = arith.constant dense<0.000000e+00> : vector<8x512xf32>
      %87 = tpu.matmul %86, %5, %cst_44 {dimension_numbers = #tpu.dot_dimension_numbers<[1], [0], [0], [1], [0, 0, 1, 1], [], []>} : vector<8x128xbf16>, vector<128x512xbf16>, vector<8x512xf32> -> vector<8x512xf32>
      %88 = arith.addf %85, %87 : vector<8x512xf32>
      %89 = vector.extract_strided_slice %88 {offsets = [0, 0], sizes = [8, 128], strides = [1, 1]} : vector<8x512xf32> to vector<8x128xf32>
      %cst_45 = arith.constant 5.000000e-01 : f32
      %90 = vector.broadcast %cst_45 : f32 to vector<8x128xf32>
      %91 = arith.mulf %90, %89 : vector<8x128xf32>
      %92 = math.tanh %91 : vector<8x128xf32>
      %cst_46 = arith.constant 1.000000e+00 : f32
      %93 = vector.broadcast %cst_46 : f32 to vector<8x128xf32>
      %94 = arith.addf %92, %93 : vector<8x128xf32>
      %cst_47 = arith.constant 5.000000e-01 : f32
      %95 = vector.broadcast %cst_47 : f32 to vector<8x128xf32>
      %96 = arith.mulf %95, %94 : vector<8x128xf32>
      %97 = vector.extract_strided_slice %88 {offsets = [0, 128], sizes = [8, 128], strides = [1, 1]} : vector<8x512xf32> to vector<8x128xf32>
      %cst_48 = arith.constant 5.000000e-01 : f32
      %98 = vector.broadcast %cst_48 : f32 to vector<8x128xf32>
      %99 = arith.mulf %98, %97 : vector<8x128xf32>
      %100 = math.tanh %99 : vector<8x128xf32>
      %cst_49 = arith.constant 1.000000e+00 : f32
      %101 = vector.broadcast %cst_49 : f32 to vector<8x128xf32>
      %102 = arith.addf %100, %101 : vector<8x128xf32>
      %cst_50 = arith.constant 5.000000e-01 : f32
      %103 = vector.broadcast %cst_50 : f32 to vector<8x128xf32>
      %104 = arith.mulf %103, %102 : vector<8x128xf32>
      %105 = vector.extract_strided_slice %88 {offsets = [0, 256], sizes = [8, 128], strides = [1, 1]} : vector<8x512xf32> to vector<8x128xf32>
      %106 = math.tanh %105 : vector<8x128xf32>
      %107 = vector.extract_strided_slice %88 {offsets = [0, 384], sizes = [8, 128], strides = [1, 1]} : vector<8x512xf32> to vector<8x128xf32>
      %cst_51 = arith.constant 5.000000e-01 : f32
      %108 = vector.broadcast %cst_51 : f32 to vector<8x128xf32>
      %109 = arith.mulf %108, %107 : vector<8x128xf32>
      %110 = math.tanh %109 : vector<8x128xf32>
      %cst_52 = arith.constant 1.000000e+00 : f32
      %111 = vector.broadcast %cst_52 : f32 to vector<8x128xf32>
      %112 = arith.addf %110, %111 : vector<8x128xf32>
      %cst_53 = arith.constant 5.000000e-01 : f32
      %113 = vector.broadcast %cst_53 : f32 to vector<8x128xf32>
      %114 = arith.mulf %113, %112 : vector<8x128xf32>
      %115 = arith.mulf %104, %81 : vector<8x128xf32>
      %116 = arith.mulf %96, %106 : vector<8x128xf32>
      %117 = arith.addf %115, %116 : vector<8x128xf32>
      %118 = math.tanh %117 : vector<8x128xf32>
      %119 = arith.mulf %114, %118 : vector<8x128xf32>
      %120 = arith.addi %10, %c1_i32_40 : i32
      %121 = vector.broadcast %120 : i32 to vector<8x1xi32>
      %122 = arith.cmpi slt, %121, %3 : vector<8x1xi32>
      %cst_54 = arith.constant 0.000000e+00 : f32
      %123 = vector.shape_cast %122 : vector<8x1xi1> to vector<8x1xi1>
      %124 = vector.broadcast %123 : vector<8x1xi1> to vector<8x128xi1>
      %125 = vector.broadcast %cst_54 : f32 to vector<8x128xf32>
      %126 = arith.select %124, %119, %125 : vector<8x128xi1>, vector<8x128xf32>
      %c0_55 = arith.constant 0 : index
      %127 = arith.index_cast %c1_i32_40 : i32 to index
      %c0_56 = arith.constant 0 : index
      %c0_57 = arith.constant 0 : index
      %128 = vector.load %arg5[%c0_55, %127, %c0_56, %c0_57] : memref<1x8x8x128xf32, #tpu.memory_space<vmem>>, vector<1x1x8x128xf32>
      %129 = vector.shape_cast %128 : vector<1x1x8x128xf32> to vector<8x128xf32>
      %130 = vector.shape_cast %126 : vector<8x128xf32> to vector<1x1x8x128xf32>
      tpu.vector_store %arg5[%c0_55, %127, %c0_56, %c0_57], %130 {strides = array<i32>} : memref<1x8x8x128xf32, #tpu.memory_space<vmem>>, vector<1x1x8x128xf32>,
      %131 = vector.shape_cast %122 : vector<8x1xi1> to vector<8x1xi1>
      %132 = vector.broadcast %131 : vector<8x1xi1> to vector<8x128xi1>
      %133 = arith.select %132, %119, %78 : vector<8x128xi1>, vector<8x128xf32>
      %134 = vector.shape_cast %122 : vector<8x1xi1> to vector<8x1xi1>
      %135 = vector.broadcast %134 : vector<8x1xi1> to vector<8x128xi1>
      %136 = arith.select %135, %117, %81 : vector<8x128xi1>, vector<8x128xf32>
      %c2_i32_58 = arith.constant 2 : i32
      %c0_59 = arith.constant 0 : index
      %137 = arith.index_cast %c2_i32_58 : i32 to index
      %c0_60 = arith.constant 0 : index
      %c0_61 = arith.constant 0 : index
      %138 = vector.load %arg3[%c0_59, %137, %c0_60, %c0_61] : memref<1x8x8x512xbf16, #tpu.memory_space<vmem>>, vector<1x1x8x512xbf16>
      %139 = vector.shape_cast %138 : vector<1x1x8x512xbf16> to vector<8x512xbf16>
      %140 = arith.extf %139 : vector<8x512xbf16> to vector<8x512xf32>
      %141 = arith.truncf %133 : vector<8x128xf32> to vector<8x128xbf16>
      %cst_62 = arith.constant dense<0.000000e+00> : vector<8x512xf32>
      %142 = tpu.matmul %141, %5, %cst_62 {dimension_numbers = #tpu.dot_dimension_numbers<[1], [0], [0], [1], [0, 0, 1, 1], [], []>} : vector<8x128xbf16>, vector<128x512xbf16>, vector<8x512xf32> -> vector<8x512xf32>
      %143 = arith.addf %140, %142 : vector<8x512xf32>
      %144 = vector.extract_strided_slice %143 {offsets = [0, 0], sizes = [8, 128], strides = [1, 1]} : vector<8x512xf32> to vector<8x128xf32>
      %cst_63 = arith.constant 5.000000e-01 : f32
      %145 = vector.broadcast %cst_63 : f32 to vector<8x128xf32>
      %146 = arith.mulf %145, %144 : vector<8x128xf32>
      %147 = math.tanh %146 : vector<8x128xf32>
      %cst_64 = arith.constant 1.000000e+00 : f32
      %148 = vector.broadcast %cst_64 : f32 to vector<8x128xf32>
      %149 = arith.addf %147, %148 : vector<8x128xf32>
      %cst_65 = arith.constant 5.000000e-01 : f32
      %150 = vector.broadcast %cst_65 : f32 to vector<8x128xf32>
      %151 = arith.mulf %150, %149 : vector<8x128xf32>
      %152 = vector.extract_strided_slice %143 {offsets = [0, 128], sizes = [8, 128], strides = [1, 1]} : vector<8x512xf32> to vector<8x128xf32>
      %cst_66 = arith.constant 5.000000e-01 : f32
      %153 = vector.broadcast %cst_66 : f32 to vector<8x128xf32>
      %154 = arith.mulf %153, %152 : vector<8x128xf32>
      %155 = math.tanh %154 : vector<8x128xf32>
      %cst_67 = arith.constant 1.000000e+00 : f32
      %156 = vector.broadcast %cst_67 : f32 to vector<8x128xf32>
      %157 = arith.addf %155, %156 : vector<8x128xf32>
      %cst_68 = arith.constant 5.000000e-01 : f32
      %158 = vector.broadcast %cst_68 : f32 to vector<8x128xf32>
      %159 = arith.mulf %158, %157 : vector<8x128xf32>
      %160 = vector.extract_strided_slice %143 {offsets = [0, 256], sizes = [8, 128], strides = [1, 1]} : vector<8x512xf32> to vector<8x128xf32>
      %161 = math.tanh %160 : vector<8x128xf32>
      %162 = vector.extract_strided_slice %143 {offsets = [0, 384], sizes = [8, 128], strides = [1, 1]} : vector<8x512xf32> to vector<8x128xf32>
      %cst_69 = arith.constant 5.000000e-01 : f32
      %163 = vector.broadcast %cst_69 : f32 to vector<8x128xf32>
      %164 = arith.mulf %163, %162 : vector<8x128xf32>
      %165 = math.tanh %164 : vector<8x128xf32>
      %cst_70 = arith.constant 1.000000e+00 : f32
      %166 = vector.broadcast %cst_70 : f32 to vector<8x128xf32>
      %167 = arith.addf %165, %166 : vector<8x128xf32>
      %cst_71 = arith.constant 5.000000e-01 : f32
      %168 = vector.broadcast %cst_71 : f32 to vector<8x128xf32>
      %169 = arith.mulf %168, %167 : vector<8x128xf32>
      %170 = arith.mulf %159, %136 : vector<8x128xf32>
      %171 = arith.mulf %151, %161 : vector<8x128xf32>
      %172 = arith.addf %170, %171 : vector<8x128xf32>
      %173 = math.tanh %172 : vector<8x128xf32>
      %174 = arith.mulf %169, %173 : vector<8x128xf32>
      %175 = arith.addi %10, %c2_i32_58 : i32
      %176 = vector.broadcast %175 : i32 to vector<8x1xi32>
      %177 = arith.cmpi slt, %176, %3 : vector<8x1xi32>
      %cst_72 = arith.constant 0.000000e+00 : f32
      %178 = vector.shape_cast %177 : vector<8x1xi1> to vector<8x1xi1>
      %179 = vector.broadcast %178 : vector<8x1xi1> to vector<8x128xi1>
      %180 = vector.broadcast %cst_72 : f32 to vector<8x128xf32>
      %181 = arith.select %179, %174, %180 : vector<8x128xi1>, vector<8x128xf32>
      %c0_73 = arith.constant 0 : index
      %182 = arith.index_cast %c2_i32_58 : i32 to index
      %c0_74 = arith.constant 0 : index
      %c0_75 = arith.constant 0 : index
      %183 = vector.load %arg5[%c0_73, %182, %c0_74, %c0_75] : memref<1x8x8x128xf32, #tpu.memory_space<vmem>>, vector<1x1x8x128xf32>
      %184 = vector.shape_cast %183 : vector<1x1x8x128xf32> to vector<8x128xf32>
      %185 = vector.shape_cast %181 : vector<8x128xf32> to vector<1x1x8x128xf32>
      tpu.vector_store %arg5[%c0_73, %182, %c0_74, %c0_75], %185 {strides = array<i32>} : memref<1x8x8x128xf32, #tpu.memory_space<vmem>>, vector<1x1x8x128xf32>,
      %186 = vector.shape_cast %177 : vector<8x1xi1> to vector<8x1xi1>
      %187 = vector.broadcast %186 : vector<8x1xi1> to vector<8x128xi1>
      %188 = arith.select %187, %174, %133 : vector<8x128xi1>, vector<8x128xf32>
      %189 = vector.shape_cast %177 : vector<8x1xi1> to vector<8x1xi1>
      %190 = vector.broadcast %189 : vector<8x1xi1> to vector<8x128xi1>
      %191 = arith.select %190, %172, %136 : vector<8x128xi1>, vector<8x128xf32>
      %c3_i32 = arith.constant 3 : i32
      %c0_76 = arith.constant 0 : index
      %192 = arith.index_cast %c3_i32 : i32 to index
      %c0_77 = arith.constant 0 : index
      %c0_78 = arith.constant 0 : index
      %193 = vector.load %arg3[%c0_76, %192, %c0_77, %c0_78] : memref<1x8x8x512xbf16, #tpu.memory_space<vmem>>, vector<1x1x8x512xbf16>
      %194 = vector.shape_cast %193 : vector<1x1x8x512xbf16> to vector<8x512xbf16>
      %195 = arith.extf %194 : vector<8x512xbf16> to vector<8x512xf32>
      %196 = arith.truncf %188 : vector<8x128xf32> to vector<8x128xbf16>
      %cst_79 = arith.constant dense<0.000000e+00> : vector<8x512xf32>
      %197 = tpu.matmul %196, %5, %cst_79 {dimension_numbers = #tpu.dot_dimension_numbers<[1], [0], [0], [1], [0, 0, 1, 1], [], []>} : vector<8x128xbf16>, vector<128x512xbf16>, vector<8x512xf32> -> vector<8x512xf32>
      %198 = arith.addf %195, %197 : vector<8x512xf32>
      %199 = vector.extract_strided_slice %198 {offsets = [0, 0], sizes = [8, 128], strides = [1, 1]} : vector<8x512xf32> to vector<8x128xf32>
      %cst_80 = arith.constant 5.000000e-01 : f32
      %200 = vector.broadcast %cst_80 : f32 to vector<8x128xf32>
      %201 = arith.mulf %200, %199 : vector<8x128xf32>
      %202 = math.tanh %201 : vector<8x128xf32>
      %cst_81 = arith.constant 1.000000e+00 : f32
      %203 = vector.broadcast %cst_81 : f32 to vector<8x128xf32>
      %204 = arith.addf %202, %203 : vector<8x128xf32>
      %cst_82 = arith.constant 5.000000e-01 : f32
      %205 = vector.broadcast %cst_82 : f32 to vector<8x128xf32>
      %206 = arith.mulf %205, %204 : vector<8x128xf32>
      %207 = vector.extract_strided_slice %198 {offsets = [0, 128], sizes = [8, 128], strides = [1, 1]} : vector<8x512xf32> to vector<8x128xf32>
      %cst_83 = arith.constant 5.000000e-01 : f32
      %208 = vector.broadcast %cst_83 : f32 to vector<8x128xf32>
      %209 = arith.mulf %208, %207 : vector<8x128xf32>
      %210 = math.tanh %209 : vector<8x128xf32>
      %cst_84 = arith.constant 1.000000e+00 : f32
      %211 = vector.broadcast %cst_84 : f32 to vector<8x128xf32>
      %212 = arith.addf %210, %211 : vector<8x128xf32>
      %cst_85 = arith.constant 5.000000e-01 : f32
      %213 = vector.broadcast %cst_85 : f32 to vector<8x128xf32>
      %214 = arith.mulf %213, %212 : vector<8x128xf32>
      %215 = vector.extract_strided_slice %198 {offsets = [0, 256], sizes = [8, 128], strides = [1, 1]} : vector<8x512xf32> to vector<8x128xf32>
      %216 = math.tanh %215 : vector<8x128xf32>
      %217 = vector.extract_strided_slice %198 {offsets = [0, 384], sizes = [8, 128], strides = [1, 1]} : vector<8x512xf32> to vector<8x128xf32>
      %cst_86 = arith.constant 5.000000e-01 : f32
      %218 = vector.broadcast %cst_86 : f32 to vector<8x128xf32>
      %219 = arith.mulf %218, %217 : vector<8x128xf32>
      %220 = math.tanh %219 : vector<8x128xf32>
      %cst_87 = arith.constant 1.000000e+00 : f32
      %221 = vector.broadcast %cst_87 : f32 to vector<8x128xf32>
      %222 = arith.addf %220, %221 : vector<8x128xf32>
      %cst_88 = arith.constant 5.000000e-01 : f32
      %223 = vector.broadcast %cst_88 : f32 to vector<8x128xf32>
      %224 = arith.mulf %223, %222 : vector<8x128xf32>
      %225 = arith.mulf %214, %191 : vector<8x128xf32>
      %226 = arith.mulf %206, %216 : vector<8x128xf32>
      %227 = arith.addf %225, %226 : vector<8x128xf32>
      %228 = math.tanh %227 : vector<8x128xf32>
      %229 = arith.mulf %224, %228 : vector<8x128xf32>
      %230 = arith.addi %10, %c3_i32 : i32
      %231 = vector.broadcast %230 : i32 to vector<8x1xi32>
      %232 = arith.cmpi slt, %231, %3 : vector<8x1xi32>
      %cst_89 = arith.constant 0.000000e+00 : f32
      %233 = vector.shape_cast %232 : vector<8x1xi1> to vector<8x1xi1>
      %234 = vector.broadcast %233 : vector<8x1xi1> to vector<8x128xi1>
      %235 = vector.broadcast %cst_89 : f32 to vector<8x128xf32>
      %236 = arith.select %234, %229, %235 : vector<8x128xi1>, vector<8x128xf32>
      %c0_90 = arith.constant 0 : index
      %237 = arith.index_cast %c3_i32 : i32 to index
      %c0_91 = arith.constant 0 : index
      %c0_92 = arith.constant 0 : index
      %238 = vector.load %arg5[%c0_90, %237, %c0_91, %c0_92] : memref<1x8x8x128xf32, #tpu.memory_space<vmem>>, vector<1x1x8x128xf32>
      %239 = vector.shape_cast %238 : vector<1x1x8x128xf32> to vector<8x128xf32>
      %240 = vector.shape_cast %236 : vector<8x128xf32> to vector<1x1x8x128xf32>
      tpu.vector_store %arg5[%c0_90, %237, %c0_91, %c0_92], %240 {strides = array<i32>} : memref<1x8x8x128xf32, #tpu.memory_space<vmem>>, vector<1x1x8x128xf32>,
      %241 = vector.shape_cast %232 : vector<8x1xi1> to vector<8x1xi1>
      %242 = vector.broadcast %241 : vector<8x1xi1> to vector<8x128xi1>
      %243 = arith.select %242, %229, %188 : vector<8x128xi1>, vector<8x128xf32>
      %244 = vector.shape_cast %232 : vector<8x1xi1> to vector<8x1xi1>
      %245 = vector.broadcast %244 : vector<8x1xi1> to vector<8x128xi1>
      %246 = arith.select %245, %227, %191 : vector<8x128xi1>, vector<8x128xf32>
      %c4_i32 = arith.constant 4 : i32
      %c0_93 = arith.constant 0 : index
      %247 = arith.index_cast %c4_i32 : i32 to index
      %c0_94 = arith.constant 0 : index
      %c0_95 = arith.constant 0 : index
      %248 = vector.load %arg3[%c0_93, %247, %c0_94, %c0_95] : memref<1x8x8x512xbf16, #tpu.memory_space<vmem>>, vector<1x1x8x512xbf16>
      %249 = vector.shape_cast %248 : vector<1x1x8x512xbf16> to vector<8x512xbf16>
      %250 = arith.extf %249 : vector<8x512xbf16> to vector<8x512xf32>
      %251 = arith.truncf %243 : vector<8x128xf32> to vector<8x128xbf16>
      %cst_96 = arith.constant dense<0.000000e+00> : vector<8x512xf32>
      %252 = tpu.matmul %251, %5, %cst_96 {dimension_numbers = #tpu.dot_dimension_numbers<[1], [0], [0], [1], [0, 0, 1, 1], [], []>} : vector<8x128xbf16>, vector<128x512xbf16>, vector<8x512xf32> -> vector<8x512xf32>
      %253 = arith.addf %250, %252 : vector<8x512xf32>
      %254 = vector.extract_strided_slice %253 {offsets = [0, 0], sizes = [8, 128], strides = [1, 1]} : vector<8x512xf32> to vector<8x128xf32>
      %cst_97 = arith.constant 5.000000e-01 : f32
      %255 = vector.broadcast %cst_97 : f32 to vector<8x128xf32>
      %256 = arith.mulf %255, %254 : vector<8x128xf32>
      %257 = math.tanh %256 : vector<8x128xf32>
      %cst_98 = arith.constant 1.000000e+00 : f32
      %258 = vector.broadcast %cst_98 : f32 to vector<8x128xf32>
      %259 = arith.addf %257, %258 : vector<8x128xf32>
      %cst_99 = arith.constant 5.000000e-01 : f32
      %260 = vector.broadcast %cst_99 : f32 to vector<8x128xf32>
      %261 = arith.mulf %260, %259 : vector<8x128xf32>
      %262 = vector.extract_strided_slice %253 {offsets = [0, 128], sizes = [8, 128], strides = [1, 1]} : vector<8x512xf32> to vector<8x128xf32>
      %cst_100 = arith.constant 5.000000e-01 : f32
      %263 = vector.broadcast %cst_100 : f32 to vector<8x128xf32>
      %264 = arith.mulf %263, %262 : vector<8x128xf32>
      %265 = math.tanh %264 : vector<8x128xf32>
      %cst_101 = arith.constant 1.000000e+00 : f32
      %266 = vector.broadcast %cst_101 : f32 to vector<8x128xf32>
      %267 = arith.addf %265, %266 : vector<8x128xf32>
      %cst_102 = arith.constant 5.000000e-01 : f32
      %268 = vector.broadcast %cst_102 : f32 to vector<8x128xf32>
      %269 = arith.mulf %268, %267 : vector<8x128xf32>
      %270 = vector.extract_strided_slice %253 {offsets = [0, 256], sizes = [8, 128], strides = [1, 1]} : vector<8x512xf32> to vector<8x128xf32>
      %271 = math.tanh %270 : vector<8x128xf32>
      %272 = vector.extract_strided_slice %253 {offsets = [0, 384], sizes = [8, 128], strides = [1, 1]} : vector<8x512xf32> to vector<8x128xf32>
      %cst_103 = arith.constant 5.000000e-01 : f32
      %273 = vector.broadcast %cst_103 : f32 to vector<8x128xf32>
      %274 = arith.mulf %273, %272 : vector<8x128xf32>
      %275 = math.tanh %274 : vector<8x128xf32>
      %cst_104 = arith.constant 1.000000e+00 : f32
      %276 = vector.broadcast %cst_104 : f32 to vector<8x128xf32>
      %277 = arith.addf %275, %276 : vector<8x128xf32>
      %cst_105 = arith.constant 5.000000e-01 : f32
      %278 = vector.broadcast %cst_105 : f32 to vector<8x128xf32>
      %279 = arith.mulf %278, %277 : vector<8x128xf32>
      %280 = arith.mulf %269, %246 : vector<8x128xf32>
      %281 = arith.mulf %261, %271 : vector<8x128xf32>
      %282 = arith.addf %280, %281 : vector<8x128xf32>
      %283 = math.tanh %282 : vector<8x128xf32>
      %284 = arith.mulf %279, %283 : vector<8x128xf32>
      %285 = arith.addi %10, %c4_i32 : i32
      %286 = vector.broadcast %285 : i32 to vector<8x1xi32>
      %287 = arith.cmpi slt, %286, %3 : vector<8x1xi32>
      %cst_106 = arith.constant 0.000000e+00 : f32
      %288 = vector.shape_cast %287 : vector<8x1xi1> to vector<8x1xi1>
      %289 = vector.broadcast %288 : vector<8x1xi1> to vector<8x128xi1>
      %290 = vector.broadcast %cst_106 : f32 to vector<8x128xf32>
      %291 = arith.select %289, %284, %290 : vector<8x128xi1>, vector<8x128xf32>
      %c0_107 = arith.constant 0 : index
      %292 = arith.index_cast %c4_i32 : i32 to index
      %c0_108 = arith.constant 0 : index
      %c0_109 = arith.constant 0 : index
      %293 = vector.load %arg5[%c0_107, %292, %c0_108, %c0_109] : memref<1x8x8x128xf32, #tpu.memory_space<vmem>>, vector<1x1x8x128xf32>
      %294 = vector.shape_cast %293 : vector<1x1x8x128xf32> to vector<8x128xf32>
      %295 = vector.shape_cast %291 : vector<8x128xf32> to vector<1x1x8x128xf32>
      tpu.vector_store %arg5[%c0_107, %292, %c0_108, %c0_109], %295 {strides = array<i32>} : memref<1x8x8x128xf32, #tpu.memory_space<vmem>>, vector<1x1x8x128xf32>,
      %296 = vector.shape_cast %287 : vector<8x1xi1> to vector<8x1xi1>
      %297 = vector.broadcast %296 : vector<8x1xi1> to vector<8x128xi1>
      %298 = arith.select %297, %284, %243 : vector<8x128xi1>, vector<8x128xf32>
      %299 = vector.shape_cast %287 : vector<8x1xi1> to vector<8x1xi1>
      %300 = vector.broadcast %299 : vector<8x1xi1> to vector<8x128xi1>
      %301 = arith.select %300, %282, %246 : vector<8x128xi1>, vector<8x128xf32>
      %c5_i32 = arith.constant 5 : i32
      %c0_110 = arith.constant 0 : index
      %302 = arith.index_cast %c5_i32 : i32 to index
      %c0_111 = arith.constant 0 : index
      %c0_112 = arith.constant 0 : index
      %303 = vector.load %arg3[%c0_110, %302, %c0_111, %c0_112] : memref<1x8x8x512xbf16, #tpu.memory_space<vmem>>, vector<1x1x8x512xbf16>
      %304 = vector.shape_cast %303 : vector<1x1x8x512xbf16> to vector<8x512xbf16>
      %305 = arith.extf %304 : vector<8x512xbf16> to vector<8x512xf32>
      %306 = arith.truncf %298 : vector<8x128xf32> to vector<8x128xbf16>
      %cst_113 = arith.constant dense<0.000000e+00> : vector<8x512xf32>
      %307 = tpu.matmul %306, %5, %cst_113 {dimension_numbers = #tpu.dot_dimension_numbers<[1], [0], [0], [1], [0, 0, 1, 1], [], []>} : vector<8x128xbf16>, vector<128x512xbf16>, vector<8x512xf32> -> vector<8x512xf32>
      %308 = arith.addf %305, %307 : vector<8x512xf32>
      %309 = vector.extract_strided_slice %308 {offsets = [0, 0], sizes = [8, 128], strides = [1, 1]} : vector<8x512xf32> to vector<8x128xf32>
      %cst_114 = arith.constant 5.000000e-01 : f32
      %310 = vector.broadcast %cst_114 : f32 to vector<8x128xf32>
      %311 = arith.mulf %310, %309 : vector<8x128xf32>
      %312 = math.tanh %311 : vector<8x128xf32>
      %cst_115 = arith.constant 1.000000e+00 : f32
      %313 = vector.broadcast %cst_115 : f32 to vector<8x128xf32>
      %314 = arith.addf %312, %313 : vector<8x128xf32>
      %cst_116 = arith.constant 5.000000e-01 : f32
      %315 = vector.broadcast %cst_116 : f32 to vector<8x128xf32>
      %316 = arith.mulf %315, %314 : vector<8x128xf32>
      %317 = vector.extract_strided_slice %308 {offsets = [0, 128], sizes = [8, 128], strides = [1, 1]} : vector<8x512xf32> to vector<8x128xf32>
      %cst_117 = arith.constant 5.000000e-01 : f32
      %318 = vector.broadcast %cst_117 : f32 to vector<8x128xf32>
      %319 = arith.mulf %318, %317 : vector<8x128xf32>
      %320 = math.tanh %319 : vector<8x128xf32>
      %cst_118 = arith.constant 1.000000e+00 : f32
      %321 = vector.broadcast %cst_118 : f32 to vector<8x128xf32>
      %322 = arith.addf %320, %321 : vector<8x128xf32>
      %cst_119 = arith.constant 5.000000e-01 : f32
      %323 = vector.broadcast %cst_119 : f32 to vector<8x128xf32>
      %324 = arith.mulf %323, %322 : vector<8x128xf32>
      %325 = vector.extract_strided_slice %308 {offsets = [0, 256], sizes = [8, 128], strides = [1, 1]} : vector<8x512xf32> to vector<8x128xf32>
      %326 = math.tanh %325 : vector<8x128xf32>
      %327 = vector.extract_strided_slice %308 {offsets = [0, 384], sizes = [8, 128], strides = [1, 1]} : vector<8x512xf32> to vector<8x128xf32>
      %cst_120 = arith.constant 5.000000e-01 : f32
      %328 = vector.broadcast %cst_120 : f32 to vector<8x128xf32>
      %329 = arith.mulf %328, %327 : vector<8x128xf32>
      %330 = math.tanh %329 : vector<8x128xf32>
      %cst_121 = arith.constant 1.000000e+00 : f32
      %331 = vector.broadcast %cst_121 : f32 to vector<8x128xf32>
      %332 = arith.addf %330, %331 : vector<8x128xf32>
      %cst_122 = arith.constant 5.000000e-01 : f32
      %333 = vector.broadcast %cst_122 : f32 to vector<8x128xf32>
      %334 = arith.mulf %333, %332 : vector<8x128xf32>
      %335 = arith.mulf %324, %301 : vector<8x128xf32>
      %336 = arith.mulf %316, %326 : vector<8x128xf32>
      %337 = arith.addf %335, %336 : vector<8x128xf32>
      %338 = math.tanh %337 : vector<8x128xf32>
      %339 = arith.mulf %334, %338 : vector<8x128xf32>
      %340 = arith.addi %10, %c5_i32 : i32
      %341 = vector.broadcast %340 : i32 to vector<8x1xi32>
      %342 = arith.cmpi slt, %341, %3 : vector<8x1xi32>
      %cst_123 = arith.constant 0.000000e+00 : f32
      %343 = vector.shape_cast %342 : vector<8x1xi1> to vector<8x1xi1>
      %344 = vector.broadcast %343 : vector<8x1xi1> to vector<8x128xi1>
      %345 = vector.broadcast %cst_123 : f32 to vector<8x128xf32>
      %346 = arith.select %344, %339, %345 : vector<8x128xi1>, vector<8x128xf32>
      %c0_124 = arith.constant 0 : index
      %347 = arith.index_cast %c5_i32 : i32 to index
      %c0_125 = arith.constant 0 : index
      %c0_126 = arith.constant 0 : index
      %348 = vector.load %arg5[%c0_124, %347, %c0_125, %c0_126] : memref<1x8x8x128xf32, #tpu.memory_space<vmem>>, vector<1x1x8x128xf32>
      %349 = vector.shape_cast %348 : vector<1x1x8x128xf32> to vector<8x128xf32>
      %350 = vector.shape_cast %346 : vector<8x128xf32> to vector<1x1x8x128xf32>
      tpu.vector_store %arg5[%c0_124, %347, %c0_125, %c0_126], %350 {strides = array<i32>} : memref<1x8x8x128xf32, #tpu.memory_space<vmem>>, vector<1x1x8x128xf32>,
      %351 = vector.shape_cast %342 : vector<8x1xi1> to vector<8x1xi1>
      %352 = vector.broadcast %351 : vector<8x1xi1> to vector<8x128xi1>
      %353 = arith.select %352, %339, %298 : vector<8x128xi1>, vector<8x128xf32>
      %354 = vector.shape_cast %342 : vector<8x1xi1> to vector<8x1xi1>
      %355 = vector.broadcast %354 : vector<8x1xi1> to vector<8x128xi1>
      %356 = arith.select %355, %337, %301 : vector<8x128xi1>, vector<8x128xf32>
      %c6_i32 = arith.constant 6 : i32
      %c0_127 = arith.constant 0 : index
      %357 = arith.index_cast %c6_i32 : i32 to index
      %c0_128 = arith.constant 0 : index
      %c0_129 = arith.constant 0 : index
      %358 = vector.load %arg3[%c0_127, %357, %c0_128, %c0_129] : memref<1x8x8x512xbf16, #tpu.memory_space<vmem>>, vector<1x1x8x512xbf16>
      %359 = vector.shape_cast %358 : vector<1x1x8x512xbf16> to vector<8x512xbf16>
      %360 = arith.extf %359 : vector<8x512xbf16> to vector<8x512xf32>
      %361 = arith.truncf %353 : vector<8x128xf32> to vector<8x128xbf16>
      %cst_130 = arith.constant dense<0.000000e+00> : vector<8x512xf32>
      %362 = tpu.matmul %361, %5, %cst_130 {dimension_numbers = #tpu.dot_dimension_numbers<[1], [0], [0], [1], [0, 0, 1, 1], [], []>} : vector<8x128xbf16>, vector<128x512xbf16>, vector<8x512xf32> -> vector<8x512xf32>
      %363 = arith.addf %360, %362 : vector<8x512xf32>
      %364 = vector.extract_strided_slice %363 {offsets = [0, 0], sizes = [8, 128], strides = [1, 1]} : vector<8x512xf32> to vector<8x128xf32>
      %cst_131 = arith.constant 5.000000e-01 : f32
      %365 = vector.broadcast %cst_131 : f32 to vector<8x128xf32>
      %366 = arith.mulf %365, %364 : vector<8x128xf32>
      %367 = math.tanh %366 : vector<8x128xf32>
      %cst_132 = arith.constant 1.000000e+00 : f32
      %368 = vector.broadcast %cst_132 : f32 to vector<8x128xf32>
      %369 = arith.addf %367, %368 : vector<8x128xf32>
      %cst_133 = arith.constant 5.000000e-01 : f32
      %370 = vector.broadcast %cst_133 : f32 to vector<8x128xf32>
      %371 = arith.mulf %370, %369 : vector<8x128xf32>
      %372 = vector.extract_strided_slice %363 {offsets = [0, 128], sizes = [8, 128], strides = [1, 1]} : vector<8x512xf32> to vector<8x128xf32>
      %cst_134 = arith.constant 5.000000e-01 : f32
      %373 = vector.broadcast %cst_134 : f32 to vector<8x128xf32>
      %374 = arith.mulf %373, %372 : vector<8x128xf32>
      %375 = math.tanh %374 : vector<8x128xf32>
      %cst_135 = arith.constant 1.000000e+00 : f32
      %376 = vector.broadcast %cst_135 : f32 to vector<8x128xf32>
      %377 = arith.addf %375, %376 : vector<8x128xf32>
      %cst_136 = arith.constant 5.000000e-01 : f32
      %378 = vector.broadcast %cst_136 : f32 to vector<8x128xf32>
      %379 = arith.mulf %378, %377 : vector<8x128xf32>
      %380 = vector.extract_strided_slice %363 {offsets = [0, 256], sizes = [8, 128], strides = [1, 1]} : vector<8x512xf32> to vector<8x128xf32>
      %381 = math.tanh %380 : vector<8x128xf32>
      %382 = vector.extract_strided_slice %363 {offsets = [0, 384], sizes = [8, 128], strides = [1, 1]} : vector<8x512xf32> to vector<8x128xf32>
      %cst_137 = arith.constant 5.000000e-01 : f32
      %383 = vector.broadcast %cst_137 : f32 to vector<8x128xf32>
      %384 = arith.mulf %383, %382 : vector<8x128xf32>
      %385 = math.tanh %384 : vector<8x128xf32>
      %cst_138 = arith.constant 1.000000e+00 : f32
      %386 = vector.broadcast %cst_138 : f32 to vector<8x128xf32>
      %387 = arith.addf %385, %386 : vector<8x128xf32>
      %cst_139 = arith.constant 5.000000e-01 : f32
      %388 = vector.broadcast %cst_139 : f32 to vector<8x128xf32>
      %389 = arith.mulf %388, %387 : vector<8x128xf32>
      %390 = arith.mulf %379, %356 : vector<8x128xf32>
      %391 = arith.mulf %371, %381 : vector<8x128xf32>
      %392 = arith.addf %390, %391 : vector<8x128xf32>
      %393 = math.tanh %392 : vector<8x128xf32>
      %394 = arith.mulf %389, %393 : vector<8x128xf32>
      %395 = arith.addi %10, %c6_i32 : i32
      %396 = vector.broadcast %395 : i32 to vector<8x1xi32>
      %397 = arith.cmpi slt, %396, %3 : vector<8x1xi32>
      %cst_140 = arith.constant 0.000000e+00 : f32
      %398 = vector.shape_cast %397 : vector<8x1xi1> to vector<8x1xi1>
      %399 = vector.broadcast %398 : vector<8x1xi1> to vector<8x128xi1>
      %400 = vector.broadcast %cst_140 : f32 to vector<8x128xf32>
      %401 = arith.select %399, %394, %400 : vector<8x128xi1>, vector<8x128xf32>
      %c0_141 = arith.constant 0 : index
      %402 = arith.index_cast %c6_i32 : i32 to index
      %c0_142 = arith.constant 0 : index
      %c0_143 = arith.constant 0 : index
      %403 = vector.load %arg5[%c0_141, %402, %c0_142, %c0_143] : memref<1x8x8x128xf32, #tpu.memory_space<vmem>>, vector<1x1x8x128xf32>
      %404 = vector.shape_cast %403 : vector<1x1x8x128xf32> to vector<8x128xf32>
      %405 = vector.shape_cast %401 : vector<8x128xf32> to vector<1x1x8x128xf32>
      tpu.vector_store %arg5[%c0_141, %402, %c0_142, %c0_143], %405 {strides = array<i32>} : memref<1x8x8x128xf32, #tpu.memory_space<vmem>>, vector<1x1x8x128xf32>,
      %406 = vector.shape_cast %397 : vector<8x1xi1> to vector<8x1xi1>
      %407 = vector.broadcast %406 : vector<8x1xi1> to vector<8x128xi1>
      %408 = arith.select %407, %394, %353 : vector<8x128xi1>, vector<8x128xf32>
      %409 = vector.shape_cast %397 : vector<8x1xi1> to vector<8x1xi1>
      %410 = vector.broadcast %409 : vector<8x1xi1> to vector<8x128xi1>
      %411 = arith.select %410, %392, %356 : vector<8x128xi1>, vector<8x128xf32>
      %c7_i32 = arith.constant 7 : i32
      %c0_144 = arith.constant 0 : index
      %412 = arith.index_cast %c7_i32 : i32 to index
      %c0_145 = arith.constant 0 : index
      %c0_146 = arith.constant 0 : index
      %413 = vector.load %arg3[%c0_144, %412, %c0_145, %c0_146] : memref<1x8x8x512xbf16, #tpu.memory_space<vmem>>, vector<1x1x8x512xbf16>
      %414 = vector.shape_cast %413 : vector<1x1x8x512xbf16> to vector<8x512xbf16>
      %415 = arith.extf %414 : vector<8x512xbf16> to vector<8x512xf32>
      %416 = arith.truncf %408 : vector<8x128xf32> to vector<8x128xbf16>
      %cst_147 = arith.constant dense<0.000000e+00> : vector<8x512xf32>
      %417 = tpu.matmul %416, %5, %cst_147 {dimension_numbers = #tpu.dot_dimension_numbers<[1], [0], [0], [1], [0, 0, 1, 1], [], []>} : vector<8x128xbf16>, vector<128x512xbf16>, vector<8x512xf32> -> vector<8x512xf32>
      %418 = arith.addf %415, %417 : vector<8x512xf32>
      %419 = vector.extract_strided_slice %418 {offsets = [0, 0], sizes = [8, 128], strides = [1, 1]} : vector<8x512xf32> to vector<8x128xf32>
      %cst_148 = arith.constant 5.000000e-01 : f32
      %420 = vector.broadcast %cst_148 : f32 to vector<8x128xf32>
      %421 = arith.mulf %420, %419 : vector<8x128xf32>
      %422 = math.tanh %421 : vector<8x128xf32>
      %cst_149 = arith.constant 1.000000e+00 : f32
      %423 = vector.broadcast %cst_149 : f32 to vector<8x128xf32>
      %424 = arith.addf %422, %423 : vector<8x128xf32>
      %cst_150 = arith.constant 5.000000e-01 : f32
      %425 = vector.broadcast %cst_150 : f32 to vector<8x128xf32>
      %426 = arith.mulf %425, %424 : vector<8x128xf32>
      %427 = vector.extract_strided_slice %418 {offsets = [0, 128], sizes = [8, 128], strides = [1, 1]} : vector<8x512xf32> to vector<8x128xf32>
      %cst_151 = arith.constant 5.000000e-01 : f32
      %428 = vector.broadcast %cst_151 : f32 to vector<8x128xf32>
      %429 = arith.mulf %428, %427 : vector<8x128xf32>
      %430 = math.tanh %429 : vector<8x128xf32>
      %cst_152 = arith.constant 1.000000e+00 : f32
      %431 = vector.broadcast %cst_152 : f32 to vector<8x128xf32>
      %432 = arith.addf %430, %431 : vector<8x128xf32>
      %cst_153 = arith.constant 5.000000e-01 : f32
      %433 = vector.broadcast %cst_153 : f32 to vector<8x128xf32>
      %434 = arith.mulf %433, %432 : vector<8x128xf32>
      %435 = vector.extract_strided_slice %418 {offsets = [0, 256], sizes = [8, 128], strides = [1, 1]} : vector<8x512xf32> to vector<8x128xf32>
      %436 = math.tanh %435 : vector<8x128xf32>
      %437 = vector.extract_strided_slice %418 {offsets = [0, 384], sizes = [8, 128], strides = [1, 1]} : vector<8x512xf32> to vector<8x128xf32>
      %cst_154 = arith.constant 5.000000e-01 : f32
      %438 = vector.broadcast %cst_154 : f32 to vector<8x128xf32>
      %439 = arith.mulf %438, %437 : vector<8x128xf32>
      %440 = math.tanh %439 : vector<8x128xf32>
      %cst_155 = arith.constant 1.000000e+00 : f32
      %441 = vector.broadcast %cst_155 : f32 to vector<8x128xf32>
      %442 = arith.addf %440, %441 : vector<8x128xf32>
      %cst_156 = arith.constant 5.000000e-01 : f32
      %443 = vector.broadcast %cst_156 : f32 to vector<8x128xf32>
      %444 = arith.mulf %443, %442 : vector<8x128xf32>
      %445 = arith.mulf %434, %411 : vector<8x128xf32>
      %446 = arith.mulf %426, %436 : vector<8x128xf32>
      %447 = arith.addf %445, %446 : vector<8x128xf32>
      %448 = math.tanh %447 : vector<8x128xf32>
      %449 = arith.mulf %444, %448 : vector<8x128xf32>
      %450 = arith.addi %10, %c7_i32 : i32
      %451 = vector.broadcast %450 : i32 to vector<8x1xi32>
      %452 = arith.cmpi slt, %451, %3 : vector<8x1xi32>
      %cst_157 = arith.constant 0.000000e+00 : f32
      %453 = vector.shape_cast %452 : vector<8x1xi1> to vector<8x1xi1>
      %454 = vector.broadcast %453 : vector<8x1xi1> to vector<8x128xi1>
      %455 = vector.broadcast %cst_157 : f32 to vector<8x128xf32>
      %456 = arith.select %454, %449, %455 : vector<8x128xi1>, vector<8x128xf32>
      %c0_158 = arith.constant 0 : index
      %457 = arith.index_cast %c7_i32 : i32 to index
      %c0_159 = arith.constant 0 : index
      %c0_160 = arith.constant 0 : index
      %458 = vector.load %arg5[%c0_158, %457, %c0_159, %c0_160] : memref<1x8x8x128xf32, #tpu.memory_space<vmem>>, vector<1x1x8x128xf32>
      %459 = vector.shape_cast %458 : vector<1x1x8x128xf32> to vector<8x128xf32>
      %460 = vector.shape_cast %456 : vector<8x128xf32> to vector<1x1x8x128xf32>
      tpu.vector_store %arg5[%c0_158, %457, %c0_159, %c0_160], %460 {strides = array<i32>} : memref<1x8x8x128xf32, #tpu.memory_space<vmem>>, vector<1x1x8x128xf32>,
      %461 = vector.shape_cast %452 : vector<8x1xi1> to vector<8x1xi1>
      %462 = vector.broadcast %461 : vector<8x1xi1> to vector<8x128xi1>
      %463 = arith.select %462, %449, %408 : vector<8x128xi1>, vector<8x128xf32>
      %464 = vector.shape_cast %452 : vector<8x1xi1> to vector<8x1xi1>
      %465 = vector.broadcast %464 : vector<8x1xi1> to vector<8x128xi1>
      %466 = arith.select %465, %447, %411 : vector<8x128xi1>, vector<8x128xf32>
      %c8_i32_161 = arith.constant 8 : i32
      %c0_162 = arith.constant 0 : index
      %c0_163 = arith.constant 0 : index
      %467 = vector.load %arg8[%c0_162, %c0_163] : memref<8x128xf32, #tpu.memory_space<vmem>>, vector<8x128xf32>
      tpu.vector_store %arg8[%c0_162, %c0_163], %463 {strides = array<i32>} : memref<8x128xf32, #tpu.memory_space<vmem>>, vector<8x128xf32>,
      %c0_164 = arith.constant 0 : index
      %c0_165 = arith.constant 0 : index
      %468 = vector.load %arg9[%c0_164, %c0_165] : memref<8x128xf32, #tpu.memory_space<vmem>>, vector<8x128xf32>
      tpu.vector_store %arg9[%c0_164, %c0_165], %466 {strides = array<i32>} : memref<8x128xf32, #tpu.memory_space<vmem>>, vector<8x128xf32>,
    } else {
    }
    %c1_i32 = arith.constant 1 : i32
    %14 = arith.cmpi eq, %arg0, %c1_i32 : i32
    %15 = arith.extui %14 : i1 to i32
    %c0_i32_8 = arith.constant 0 : i32
    %16 = arith.cmpi ne, %15, %c0_i32_8 : i32
    scf.if %16 {
      %c0_19 = arith.constant 0 : index
      %c0_20 = arith.constant 0 : index
      %25 = vector.load %arg8[%c0_19, %c0_20] : memref<8x128xf32, #tpu.memory_space<vmem>>, vector<8x128xf32>
      %c0_21 = arith.constant 0 : index
      %c0_22 = arith.constant 0 : index
      %26 = vector.load %arg9[%c0_21, %c0_22] : memref<8x128xf32, #tpu.memory_space<vmem>>, vector<8x128xf32>
      %c0_i32_23 = arith.constant 0 : i32
      %c7_i32 = arith.constant 7 : i32
      %27 = arith.subi %c7_i32, %c0_i32_23 : i32
      %c0_24 = arith.constant 0 : index
      %28 = arith.index_cast %27 : i32 to index
      %c0_25 = arith.constant 0 : index
      %c0_26 = arith.constant 0 : index
      %29 = vector.load %arg3[%c0_24, %28, %c0_25, %c0_26] : memref<1x8x8x512xbf16, #tpu.memory_space<vmem>>, vector<1x1x8x512xbf16>
      %30 = vector.shape_cast %29 : vector<1x1x8x512xbf16> to vector<8x512xbf16>
      %31 = arith.extf %30 : vector<8x512xbf16> to vector<8x512xf32>
      %32 = arith.truncf %25 : vector<8x128xf32> to vector<8x128xbf16>
      %cst = arith.constant dense<0.000000e+00> : vector<8x512xf32>
      %33 = tpu.matmul %32, %5, %cst {dimension_numbers = #tpu.dot_dimension_numbers<[1], [0], [0], [1], [0, 0, 1, 1], [], []>} : vector<8x128xbf16>, vector<128x512xbf16>, vector<8x512xf32> -> vector<8x512xf32>
      %34 = arith.addf %31, %33 : vector<8x512xf32>
      %35 = vector.extract_strided_slice %34 {offsets = [0, 0], sizes = [8, 128], strides = [1, 1]} : vector<8x512xf32> to vector<8x128xf32>
      %cst_27 = arith.constant 5.000000e-01 : f32
      %36 = vector.broadcast %cst_27 : f32 to vector<8x128xf32>
      %37 = arith.mulf %36, %35 : vector<8x128xf32>
      %38 = math.tanh %37 : vector<8x128xf32>
      %cst_28 = arith.constant 1.000000e+00 : f32
      %39 = vector.broadcast %cst_28 : f32 to vector<8x128xf32>
      %40 = arith.addf %38, %39 : vector<8x128xf32>
      %cst_29 = arith.constant 5.000000e-01 : f32
      %41 = vector.broadcast %cst_29 : f32 to vector<8x128xf32>
      %42 = arith.mulf %41, %40 : vector<8x128xf32>
      %43 = vector.extract_strided_slice %34 {offsets = [0, 128], sizes = [8, 128], strides = [1, 1]} : vector<8x512xf32> to vector<8x128xf32>
      %cst_30 = arith.constant 5.000000e-01 : f32
      %44 = vector.broadcast %cst_30 : f32 to vector<8x128xf32>
      %45 = arith.mulf %44, %43 : vector<8x128xf32>
      %46 = math.tanh %45 : vector<8x128xf32>
      %cst_31 = arith.constant 1.000000e+00 : f32
      %47 = vector.broadcast %cst_31 : f32 to vector<8x128xf32>
      %48 = arith.addf %46, %47 : vector<8x128xf32>
      %cst_32 = arith.constant 5.000000e-01 : f32
      %49 = vector.broadcast %cst_32 : f32 to vector<8x128xf32>
      %50 = arith.mulf %49, %48 : vector<8x128xf32>
      %51 = vector.extract_strided_slice %34 {offsets = [0, 256], sizes = [8, 128], strides = [1, 1]} : vector<8x512xf32> to vector<8x128xf32>
      %52 = math.tanh %51 : vector<8x128xf32>
      %53 = vector.extract_strided_slice %34 {offsets = [0, 384], sizes = [8, 128], strides = [1, 1]} : vector<8x512xf32> to vector<8x128xf32>
      %cst_33 = arith.constant 5.000000e-01 : f32
      %54 = vector.broadcast %cst_33 : f32 to vector<8x128xf32>
      %55 = arith.mulf %54, %53 : vector<8x128xf32>
      %56 = math.tanh %55 : vector<8x128xf32>
      %cst_34 = arith.constant 1.000000e+00 : f32
      %57 = vector.broadcast %cst_34 : f32 to vector<8x128xf32>
      %58 = arith.addf %56, %57 : vector<8x128xf32>
      %cst_35 = arith.constant 5.000000e-01 : f32
      %59 = vector.broadcast %cst_35 : f32 to vector<8x128xf32>
      %60 = arith.mulf %59, %58 : vector<8x128xf32>
      %61 = arith.mulf %50, %26 : vector<8x128xf32>
      %62 = arith.mulf %42, %52 : vector<8x128xf32>
      %63 = arith.addf %61, %62 : vector<8x128xf32>
      %64 = math.tanh %63 : vector<8x128xf32>
      %65 = arith.mulf %60, %64 : vector<8x128xf32>
      %66 = arith.addi %10, %27 : i32
      %67 = vector.broadcast %66 : i32 to vector<8x1xi32>
      %68 = arith.cmpi slt, %67, %3 : vector<8x1xi32>
      %cst_36 = arith.constant 0.000000e+00 : f32
      %69 = vector.shape_cast %68 : vector<8x1xi1> to vector<8x1xi1>
      %70 = vector.broadcast %69 : vector<8x1xi1> to vector<8x128xi1>
      %71 = vector.broadcast %cst_36 : f32 to vector<8x128xf32>
      %72 = arith.select %70, %65, %71 : vector<8x128xi1>, vector<8x128xf32>
      %c0_37 = arith.constant 0 : index
      %73 = arith.index_cast %27 : i32 to index
      %c0_38 = arith.constant 0 : index
      %c0_39 = arith.constant 0 : index
      %74 = vector.load %arg5[%c0_37, %73, %c0_38, %c0_39] : memref<1x8x8x128xf32, #tpu.memory_space<vmem>>, vector<1x1x8x128xf32>
      %75 = vector.shape_cast %74 : vector<1x1x8x128xf32> to vector<8x128xf32>
      %76 = vector.shape_cast %72 : vector<8x128xf32> to vector<1x1x8x128xf32>
      tpu.vector_store %arg5[%c0_37, %73, %c0_38, %c0_39], %76 {strides = array<i32>} : memref<1x8x8x128xf32, #tpu.memory_space<vmem>>, vector<1x1x8x128xf32>,
      %77 = vector.shape_cast %68 : vector<8x1xi1> to vector<8x1xi1>
      %78 = vector.broadcast %77 : vector<8x1xi1> to vector<8x128xi1>
      %79 = arith.select %78, %65, %25 : vector<8x128xi1>, vector<8x128xf32>
      %80 = vector.shape_cast %68 : vector<8x1xi1> to vector<8x1xi1>
      %81 = vector.broadcast %80 : vector<8x1xi1> to vector<8x128xi1>
      %82 = arith.select %81, %63, %26 : vector<8x128xi1>, vector<8x128xf32>
      %c1_i32_40 = arith.constant 1 : i32
      %c7_i32_41 = arith.constant 7 : i32
      %83 = arith.subi %c7_i32_41, %c1_i32_40 : i32
      %c0_42 = arith.constant 0 : index
      %84 = arith.index_cast %83 : i32 to index
      %c0_43 = arith.constant 0 : index
      %c0_44 = arith.constant 0 : index
      %85 = vector.load %arg3[%c0_42, %84, %c0_43, %c0_44] : memref<1x8x8x512xbf16, #tpu.memory_space<vmem>>, vector<1x1x8x512xbf16>
      %86 = vector.shape_cast %85 : vector<1x1x8x512xbf16> to vector<8x512xbf16>
      %87 = arith.extf %86 : vector<8x512xbf16> to vector<8x512xf32>
      %88 = arith.truncf %79 : vector<8x128xf32> to vector<8x128xbf16>
      %cst_45 = arith.constant dense<0.000000e+00> : vector<8x512xf32>
      %89 = tpu.matmul %88, %5, %cst_45 {dimension_numbers = #tpu.dot_dimension_numbers<[1], [0], [0], [1], [0, 0, 1, 1], [], []>} : vector<8x128xbf16>, vector<128x512xbf16>, vector<8x512xf32> -> vector<8x512xf32>
      %90 = arith.addf %87, %89 : vector<8x512xf32>
      %91 = vector.extract_strided_slice %90 {offsets = [0, 0], sizes = [8, 128], strides = [1, 1]} : vector<8x512xf32> to vector<8x128xf32>
      %cst_46 = arith.constant 5.000000e-01 : f32
      %92 = vector.broadcast %cst_46 : f32 to vector<8x128xf32>
      %93 = arith.mulf %92, %91 : vector<8x128xf32>
      %94 = math.tanh %93 : vector<8x128xf32>
      %cst_47 = arith.constant 1.000000e+00 : f32
      %95 = vector.broadcast %cst_47 : f32 to vector<8x128xf32>
      %96 = arith.addf %94, %95 : vector<8x128xf32>
      %cst_48 = arith.constant 5.000000e-01 : f32
      %97 = vector.broadcast %cst_48 : f32 to vector<8x128xf32>
      %98 = arith.mulf %97, %96 : vector<8x128xf32>
      %99 = vector.extract_strided_slice %90 {offsets = [0, 128], sizes = [8, 128], strides = [1, 1]} : vector<8x512xf32> to vector<8x128xf32>
      %cst_49 = arith.constant 5.000000e-01 : f32
      %100 = vector.broadcast %cst_49 : f32 to vector<8x128xf32>
      %101 = arith.mulf %100, %99 : vector<8x128xf32>
      %102 = math.tanh %101 : vector<8x128xf32>
      %cst_50 = arith.constant 1.000000e+00 : f32
      %103 = vector.broadcast %cst_50 : f32 to vector<8x128xf32>
      %104 = arith.addf %102, %103 : vector<8x128xf32>
      %cst_51 = arith.constant 5.000000e-01 : f32
      %105 = vector.broadcast %cst_51 : f32 to vector<8x128xf32>
      %106 = arith.mulf %105, %104 : vector<8x128xf32>
      %107 = vector.extract_strided_slice %90 {offsets = [0, 256], sizes = [8, 128], strides = [1, 1]} : vector<8x512xf32> to vector<8x128xf32>
      %108 = math.tanh %107 : vector<8x128xf32>
      %109 = vector.extract_strided_slice %90 {offsets = [0, 384], sizes = [8, 128], strides = [1, 1]} : vector<8x512xf32> to vector<8x128xf32>
      %cst_52 = arith.constant 5.000000e-01 : f32
      %110 = vector.broadcast %cst_52 : f32 to vector<8x128xf32>
      %111 = arith.mulf %110, %109 : vector<8x128xf32>
      %112 = math.tanh %111 : vector<8x128xf32>
      %cst_53 = arith.constant 1.000000e+00 : f32
      %113 = vector.broadcast %cst_53 : f32 to vector<8x128xf32>
      %114 = arith.addf %112, %113 : vector<8x128xf32>
      %cst_54 = arith.constant 5.000000e-01 : f32
      %115 = vector.broadcast %cst_54 : f32 to vector<8x128xf32>
      %116 = arith.mulf %115, %114 : vector<8x128xf32>
      %117 = arith.mulf %106, %82 : vector<8x128xf32>
      %118 = arith.mulf %98, %108 : vector<8x128xf32>
      %119 = arith.addf %117, %118 : vector<8x128xf32>
      %120 = math.tanh %119 : vector<8x128xf32>
      %121 = arith.mulf %116, %120 : vector<8x128xf32>
      %122 = arith.addi %10, %83 : i32
      %123 = vector.broadcast %122 : i32 to vector<8x1xi32>
      %124 = arith.cmpi slt, %123, %3 : vector<8x1xi32>
      %cst_55 = arith.constant 0.000000e+00 : f32
      %125 = vector.shape_cast %124 : vector<8x1xi1> to vector<8x1xi1>
      %126 = vector.broadcast %125 : vector<8x1xi1> to vector<8x128xi1>
      %127 = vector.broadcast %cst_55 : f32 to vector<8x128xf32>
      %128 = arith.select %126, %121, %127 : vector<8x128xi1>, vector<8x128xf32>
      %c0_56 = arith.constant 0 : index
      %129 = arith.index_cast %83 : i32 to index
      %c0_57 = arith.constant 0 : index
      %c0_58 = arith.constant 0 : index
      %130 = vector.load %arg5[%c0_56, %129, %c0_57, %c0_58] : memref<1x8x8x128xf32, #tpu.memory_space<vmem>>, vector<1x1x8x128xf32>
      %131 = vector.shape_cast %130 : vector<1x1x8x128xf32> to vector<8x128xf32>
      %132 = vector.shape_cast %128 : vector<8x128xf32> to vector<1x1x8x128xf32>
      tpu.vector_store %arg5[%c0_56, %129, %c0_57, %c0_58], %132 {strides = array<i32>} : memref<1x8x8x128xf32, #tpu.memory_space<vmem>>, vector<1x1x8x128xf32>,
      %133 = vector.shape_cast %124 : vector<8x1xi1> to vector<8x1xi1>
      %134 = vector.broadcast %133 : vector<8x1xi1> to vector<8x128xi1>
      %135 = arith.select %134, %121, %79 : vector<8x128xi1>, vector<8x128xf32>
      %136 = vector.shape_cast %124 : vector<8x1xi1> to vector<8x1xi1>
      %137 = vector.broadcast %136 : vector<8x1xi1> to vector<8x128xi1>
      %138 = arith.select %137, %119, %82 : vector<8x128xi1>, vector<8x128xf32>
      %c2_i32_59 = arith.constant 2 : i32
      %c7_i32_60 = arith.constant 7 : i32
      %139 = arith.subi %c7_i32_60, %c2_i32_59 : i32
      %c0_61 = arith.constant 0 : index
      %140 = arith.index_cast %139 : i32 to index
      %c0_62 = arith.constant 0 : index
      %c0_63 = arith.constant 0 : index
      %141 = vector.load %arg3[%c0_61, %140, %c0_62, %c0_63] : memref<1x8x8x512xbf16, #tpu.memory_space<vmem>>, vector<1x1x8x512xbf16>
      %142 = vector.shape_cast %141 : vector<1x1x8x512xbf16> to vector<8x512xbf16>
      %143 = arith.extf %142 : vector<8x512xbf16> to vector<8x512xf32>
      %144 = arith.truncf %135 : vector<8x128xf32> to vector<8x128xbf16>
      %cst_64 = arith.constant dense<0.000000e+00> : vector<8x512xf32>
      %145 = tpu.matmul %144, %5, %cst_64 {dimension_numbers = #tpu.dot_dimension_numbers<[1], [0], [0], [1], [0, 0, 1, 1], [], []>} : vector<8x128xbf16>, vector<128x512xbf16>, vector<8x512xf32> -> vector<8x512xf32>
      %146 = arith.addf %143, %145 : vector<8x512xf32>
      %147 = vector.extract_strided_slice %146 {offsets = [0, 0], sizes = [8, 128], strides = [1, 1]} : vector<8x512xf32> to vector<8x128xf32>
      %cst_65 = arith.constant 5.000000e-01 : f32
      %148 = vector.broadcast %cst_65 : f32 to vector<8x128xf32>
      %149 = arith.mulf %148, %147 : vector<8x128xf32>
      %150 = math.tanh %149 : vector<8x128xf32>
      %cst_66 = arith.constant 1.000000e+00 : f32
      %151 = vector.broadcast %cst_66 : f32 to vector<8x128xf32>
      %152 = arith.addf %150, %151 : vector<8x128xf32>
      %cst_67 = arith.constant 5.000000e-01 : f32
      %153 = vector.broadcast %cst_67 : f32 to vector<8x128xf32>
      %154 = arith.mulf %153, %152 : vector<8x128xf32>
      %155 = vector.extract_strided_slice %146 {offsets = [0, 128], sizes = [8, 128], strides = [1, 1]} : vector<8x512xf32> to vector<8x128xf32>
      %cst_68 = arith.constant 5.000000e-01 : f32
      %156 = vector.broadcast %cst_68 : f32 to vector<8x128xf32>
      %157 = arith.mulf %156, %155 : vector<8x128xf32>
      %158 = math.tanh %157 : vector<8x128xf32>
      %cst_69 = arith.constant 1.000000e+00 : f32
      %159 = vector.broadcast %cst_69 : f32 to vector<8x128xf32>
      %160 = arith.addf %158, %159 : vector<8x128xf32>
      %cst_70 = arith.constant 5.000000e-01 : f32
      %161 = vector.broadcast %cst_70 : f32 to vector<8x128xf32>
      %162 = arith.mulf %161, %160 : vector<8x128xf32>
      %163 = vector.extract_strided_slice %146 {offsets = [0, 256], sizes = [8, 128], strides = [1, 1]} : vector<8x512xf32> to vector<8x128xf32>
      %164 = math.tanh %163 : vector<8x128xf32>
      %165 = vector.extract_strided_slice %146 {offsets = [0, 384], sizes = [8, 128], strides = [1, 1]} : vector<8x512xf32> to vector<8x128xf32>
      %cst_71 = arith.constant 5.000000e-01 : f32
      %166 = vector.broadcast %cst_71 : f32 to vector<8x128xf32>
      %167 = arith.mulf %166, %165 : vector<8x128xf32>
      %168 = math.tanh %167 : vector<8x128xf32>
      %cst_72 = arith.constant 1.000000e+00 : f32
      %169 = vector.broadcast %cst_72 : f32 to vector<8x128xf32>
      %170 = arith.addf %168, %169 : vector<8x128xf32>
      %cst_73 = arith.constant 5.000000e-01 : f32
      %171 = vector.broadcast %cst_73 : f32 to vector<8x128xf32>
      %172 = arith.mulf %171, %170 : vector<8x128xf32>
      %173 = arith.mulf %162, %138 : vector<8x128xf32>
      %174 = arith.mulf %154, %164 : vector<8x128xf32>
      %175 = arith.addf %173, %174 : vector<8x128xf32>
      %176 = math.tanh %175 : vector<8x128xf32>
      %177 = arith.mulf %172, %176 : vector<8x128xf32>
      %178 = arith.addi %10, %139 : i32
      %179 = vector.broadcast %178 : i32 to vector<8x1xi32>
      %180 = arith.cmpi slt, %179, %3 : vector<8x1xi32>
      %cst_74 = arith.constant 0.000000e+00 : f32
      %181 = vector.shape_cast %180 : vector<8x1xi1> to vector<8x1xi1>
      %182 = vector.broadcast %181 : vector<8x1xi1> to vector<8x128xi1>
      %183 = vector.broadcast %cst_74 : f32 to vector<8x128xf32>
      %184 = arith.select %182, %177, %183 : vector<8x128xi1>, vector<8x128xf32>
      %c0_75 = arith.constant 0 : index
      %185 = arith.index_cast %139 : i32 to index
      %c0_76 = arith.constant 0 : index
      %c0_77 = arith.constant 0 : index
      %186 = vector.load %arg5[%c0_75, %185, %c0_76, %c0_77] : memref<1x8x8x128xf32, #tpu.memory_space<vmem>>, vector<1x1x8x128xf32>
      %187 = vector.shape_cast %186 : vector<1x1x8x128xf32> to vector<8x128xf32>
      %188 = vector.shape_cast %184 : vector<8x128xf32> to vector<1x1x8x128xf32>
      tpu.vector_store %arg5[%c0_75, %185, %c0_76, %c0_77], %188 {strides = array<i32>} : memref<1x8x8x128xf32, #tpu.memory_space<vmem>>, vector<1x1x8x128xf32>,
      %189 = vector.shape_cast %180 : vector<8x1xi1> to vector<8x1xi1>
      %190 = vector.broadcast %189 : vector<8x1xi1> to vector<8x128xi1>
      %191 = arith.select %190, %177, %135 : vector<8x128xi1>, vector<8x128xf32>
      %192 = vector.shape_cast %180 : vector<8x1xi1> to vector<8x1xi1>
      %193 = vector.broadcast %192 : vector<8x1xi1> to vector<8x128xi1>
      %194 = arith.select %193, %175, %138 : vector<8x128xi1>, vector<8x128xf32>
      %c3_i32 = arith.constant 3 : i32
      %c7_i32_78 = arith.constant 7 : i32
      %195 = arith.subi %c7_i32_78, %c3_i32 : i32
      %c0_79 = arith.constant 0 : index
      %196 = arith.index_cast %195 : i32 to index
      %c0_80 = arith.constant 0 : index
      %c0_81 = arith.constant 0 : index
      %197 = vector.load %arg3[%c0_79, %196, %c0_80, %c0_81] : memref<1x8x8x512xbf16, #tpu.memory_space<vmem>>, vector<1x1x8x512xbf16>
      %198 = vector.shape_cast %197 : vector<1x1x8x512xbf16> to vector<8x512xbf16>
      %199 = arith.extf %198 : vector<8x512xbf16> to vector<8x512xf32>
      %200 = arith.truncf %191 : vector<8x128xf32> to vector<8x128xbf16>
      %cst_82 = arith.constant dense<0.000000e+00> : vector<8x512xf32>
      %201 = tpu.matmul %200, %5, %cst_82 {dimension_numbers = #tpu.dot_dimension_numbers<[1], [0], [0], [1], [0, 0, 1, 1], [], []>} : vector<8x128xbf16>, vector<128x512xbf16>, vector<8x512xf32> -> vector<8x512xf32>
      %202 = arith.addf %199, %201 : vector<8x512xf32>
      %203 = vector.extract_strided_slice %202 {offsets = [0, 0], sizes = [8, 128], strides = [1, 1]} : vector<8x512xf32> to vector<8x128xf32>
      %cst_83 = arith.constant 5.000000e-01 : f32
      %204 = vector.broadcast %cst_83 : f32 to vector<8x128xf32>
      %205 = arith.mulf %204, %203 : vector<8x128xf32>
      %206 = math.tanh %205 : vector<8x128xf32>
      %cst_84 = arith.constant 1.000000e+00 : f32
      %207 = vector.broadcast %cst_84 : f32 to vector<8x128xf32>
      %208 = arith.addf %206, %207 : vector<8x128xf32>
      %cst_85 = arith.constant 5.000000e-01 : f32
      %209 = vector.broadcast %cst_85 : f32 to vector<8x128xf32>
      %210 = arith.mulf %209, %208 : vector<8x128xf32>
      %211 = vector.extract_strided_slice %202 {offsets = [0, 128], sizes = [8, 128], strides = [1, 1]} : vector<8x512xf32> to vector<8x128xf32>
      %cst_86 = arith.constant 5.000000e-01 : f32
      %212 = vector.broadcast %cst_86 : f32 to vector<8x128xf32>
      %213 = arith.mulf %212, %211 : vector<8x128xf32>
      %214 = math.tanh %213 : vector<8x128xf32>
      %cst_87 = arith.constant 1.000000e+00 : f32
      %215 = vector.broadcast %cst_87 : f32 to vector<8x128xf32>
      %216 = arith.addf %214, %215 : vector<8x128xf32>
      %cst_88 = arith.constant 5.000000e-01 : f32
      %217 = vector.broadcast %cst_88 : f32 to vector<8x128xf32>
      %218 = arith.mulf %217, %216 : vector<8x128xf32>
      %219 = vector.extract_strided_slice %202 {offsets = [0, 256], sizes = [8, 128], strides = [1, 1]} : vector<8x512xf32> to vector<8x128xf32>
      %220 = math.tanh %219 : vector<8x128xf32>
      %221 = vector.extract_strided_slice %202 {offsets = [0, 384], sizes = [8, 128], strides = [1, 1]} : vector<8x512xf32> to vector<8x128xf32>
      %cst_89 = arith.constant 5.000000e-01 : f32
      %222 = vector.broadcast %cst_89 : f32 to vector<8x128xf32>
      %223 = arith.mulf %222, %221 : vector<8x128xf32>
      %224 = math.tanh %223 : vector<8x128xf32>
      %cst_90 = arith.constant 1.000000e+00 : f32
      %225 = vector.broadcast %cst_90 : f32 to vector<8x128xf32>
      %226 = arith.addf %224, %225 : vector<8x128xf32>
      %cst_91 = arith.constant 5.000000e-01 : f32
      %227 = vector.broadcast %cst_91 : f32 to vector<8x128xf32>
      %228 = arith.mulf %227, %226 : vector<8x128xf32>
      %229 = arith.mulf %218, %194 : vector<8x128xf32>
      %230 = arith.mulf %210, %220 : vector<8x128xf32>
      %231 = arith.addf %229, %230 : vector<8x128xf32>
      %232 = math.tanh %231 : vector<8x128xf32>
      %233 = arith.mulf %228, %232 : vector<8x128xf32>
      %234 = arith.addi %10, %195 : i32
      %235 = vector.broadcast %234 : i32 to vector<8x1xi32>
      %236 = arith.cmpi slt, %235, %3 : vector<8x1xi32>
      %cst_92 = arith.constant 0.000000e+00 : f32
      %237 = vector.shape_cast %236 : vector<8x1xi1> to vector<8x1xi1>
      %238 = vector.broadcast %237 : vector<8x1xi1> to vector<8x128xi1>
      %239 = vector.broadcast %cst_92 : f32 to vector<8x128xf32>
      %240 = arith.select %238, %233, %239 : vector<8x128xi1>, vector<8x128xf32>
      %c0_93 = arith.constant 0 : index
      %241 = arith.index_cast %195 : i32 to index
      %c0_94 = arith.constant 0 : index
      %c0_95 = arith.constant 0 : index
      %242 = vector.load %arg5[%c0_93, %241, %c0_94, %c0_95] : memref<1x8x8x128xf32, #tpu.memory_space<vmem>>, vector<1x1x8x128xf32>
      %243 = vector.shape_cast %242 : vector<1x1x8x128xf32> to vector<8x128xf32>
      %244 = vector.shape_cast %240 : vector<8x128xf32> to vector<1x1x8x128xf32>
      tpu.vector_store %arg5[%c0_93, %241, %c0_94, %c0_95], %244 {strides = array<i32>} : memref<1x8x8x128xf32, #tpu.memory_space<vmem>>, vector<1x1x8x128xf32>,
      %245 = vector.shape_cast %236 : vector<8x1xi1> to vector<8x1xi1>
      %246 = vector.broadcast %245 : vector<8x1xi1> to vector<8x128xi1>
      %247 = arith.select %246, %233, %191 : vector<8x128xi1>, vector<8x128xf32>
      %248 = vector.shape_cast %236 : vector<8x1xi1> to vector<8x1xi1>
      %249 = vector.broadcast %248 : vector<8x1xi1> to vector<8x128xi1>
      %250 = arith.select %249, %231, %194 : vector<8x128xi1>, vector<8x128xf32>
      %c4_i32 = arith.constant 4 : i32
      %c7_i32_96 = arith.constant 7 : i32
      %251 = arith.subi %c7_i32_96, %c4_i32 : i32
      %c0_97 = arith.constant 0 : index
      %252 = arith.index_cast %251 : i32 to index
      %c0_98 = arith.constant 0 : index
      %c0_99 = arith.constant 0 : index
      %253 = vector.load %arg3[%c0_97, %252, %c0_98, %c0_99] : memref<1x8x8x512xbf16, #tpu.memory_space<vmem>>, vector<1x1x8x512xbf16>
      %254 = vector.shape_cast %253 : vector<1x1x8x512xbf16> to vector<8x512xbf16>
      %255 = arith.extf %254 : vector<8x512xbf16> to vector<8x512xf32>
      %256 = arith.truncf %247 : vector<8x128xf32> to vector<8x128xbf16>
      %cst_100 = arith.constant dense<0.000000e+00> : vector<8x512xf32>
      %257 = tpu.matmul %256, %5, %cst_100 {dimension_numbers = #tpu.dot_dimension_numbers<[1], [0], [0], [1], [0, 0, 1, 1], [], []>} : vector<8x128xbf16>, vector<128x512xbf16>, vector<8x512xf32> -> vector<8x512xf32>
      %258 = arith.addf %255, %257 : vector<8x512xf32>
      %259 = vector.extract_strided_slice %258 {offsets = [0, 0], sizes = [8, 128], strides = [1, 1]} : vector<8x512xf32> to vector<8x128xf32>
      %cst_101 = arith.constant 5.000000e-01 : f32
      %260 = vector.broadcast %cst_101 : f32 to vector<8x128xf32>
      %261 = arith.mulf %260, %259 : vector<8x128xf32>
      %262 = math.tanh %261 : vector<8x128xf32>
      %cst_102 = arith.constant 1.000000e+00 : f32
      %263 = vector.broadcast %cst_102 : f32 to vector<8x128xf32>
      %264 = arith.addf %262, %263 : vector<8x128xf32>
      %cst_103 = arith.constant 5.000000e-01 : f32
      %265 = vector.broadcast %cst_103 : f32 to vector<8x128xf32>
      %266 = arith.mulf %265, %264 : vector<8x128xf32>
      %267 = vector.extract_strided_slice %258 {offsets = [0, 128], sizes = [8, 128], strides = [1, 1]} : vector<8x512xf32> to vector<8x128xf32>
      %cst_104 = arith.constant 5.000000e-01 : f32
      %268 = vector.broadcast %cst_104 : f32 to vector<8x128xf32>
      %269 = arith.mulf %268, %267 : vector<8x128xf32>
      %270 = math.tanh %269 : vector<8x128xf32>
      %cst_105 = arith.constant 1.000000e+00 : f32
      %271 = vector.broadcast %cst_105 : f32 to vector<8x128xf32>
      %272 = arith.addf %270, %271 : vector<8x128xf32>
      %cst_106 = arith.constant 5.000000e-01 : f32
      %273 = vector.broadcast %cst_106 : f32 to vector<8x128xf32>
      %274 = arith.mulf %273, %272 : vector<8x128xf32>
      %275 = vector.extract_strided_slice %258 {offsets = [0, 256], sizes = [8, 128], strides = [1, 1]} : vector<8x512xf32> to vector<8x128xf32>
      %276 = math.tanh %275 : vector<8x128xf32>
      %277 = vector.extract_strided_slice %258 {offsets = [0, 384], sizes = [8, 128], strides = [1, 1]} : vector<8x512xf32> to vector<8x128xf32>
      %cst_107 = arith.constant 5.000000e-01 : f32
      %278 = vector.broadcast %cst_107 : f32 to vector<8x128xf32>
      %279 = arith.mulf %278, %277 : vector<8x128xf32>
      %280 = math.tanh %279 : vector<8x128xf32>
      %cst_108 = arith.constant 1.000000e+00 : f32
      %281 = vector.broadcast %cst_108 : f32 to vector<8x128xf32>
      %282 = arith.addf %280, %281 : vector<8x128xf32>
      %cst_109 = arith.constant 5.000000e-01 : f32
      %283 = vector.broadcast %cst_109 : f32 to vector<8x128xf32>
      %284 = arith.mulf %283, %282 : vector<8x128xf32>
      %285 = arith.mulf %274, %250 : vector<8x128xf32>
      %286 = arith.mulf %266, %276 : vector<8x128xf32>
      %287 = arith.addf %285, %286 : vector<8x128xf32>
      %288 = math.tanh %287 : vector<8x128xf32>
      %289 = arith.mulf %284, %288 : vector<8x128xf32>
      %290 = arith.addi %10, %251 : i32
      %291 = vector.broadcast %290 : i32 to vector<8x1xi32>
      %292 = arith.cmpi slt, %291, %3 : vector<8x1xi32>
      %cst_110 = arith.constant 0.000000e+00 : f32
      %293 = vector.shape_cast %292 : vector<8x1xi1> to vector<8x1xi1>
      %294 = vector.broadcast %293 : vector<8x1xi1> to vector<8x128xi1>
      %295 = vector.broadcast %cst_110 : f32 to vector<8x128xf32>
      %296 = arith.select %294, %289, %295 : vector<8x128xi1>, vector<8x128xf32>
      %c0_111 = arith.constant 0 : index
      %297 = arith.index_cast %251 : i32 to index
      %c0_112 = arith.constant 0 : index
      %c0_113 = arith.constant 0 : index
      %298 = vector.load %arg5[%c0_111, %297, %c0_112, %c0_113] : memref<1x8x8x128xf32, #tpu.memory_space<vmem>>, vector<1x1x8x128xf32>
      %299 = vector.shape_cast %298 : vector<1x1x8x128xf32> to vector<8x128xf32>
      %300 = vector.shape_cast %296 : vector<8x128xf32> to vector<1x1x8x128xf32>
      tpu.vector_store %arg5[%c0_111, %297, %c0_112, %c0_113], %300 {strides = array<i32>} : memref<1x8x8x128xf32, #tpu.memory_space<vmem>>, vector<1x1x8x128xf32>,
      %301 = vector.shape_cast %292 : vector<8x1xi1> to vector<8x1xi1>
      %302 = vector.broadcast %301 : vector<8x1xi1> to vector<8x128xi1>
      %303 = arith.select %302, %289, %247 : vector<8x128xi1>, vector<8x128xf32>
      %304 = vector.shape_cast %292 : vector<8x1xi1> to vector<8x1xi1>
      %305 = vector.broadcast %304 : vector<8x1xi1> to vector<8x128xi1>
      %306 = arith.select %305, %287, %250 : vector<8x128xi1>, vector<8x128xf32>
      %c5_i32 = arith.constant 5 : i32
      %c7_i32_114 = arith.constant 7 : i32
      %307 = arith.subi %c7_i32_114, %c5_i32 : i32
      %c0_115 = arith.constant 0 : index
      %308 = arith.index_cast %307 : i32 to index
      %c0_116 = arith.constant 0 : index
      %c0_117 = arith.constant 0 : index
      %309 = vector.load %arg3[%c0_115, %308, %c0_116, %c0_117] : memref<1x8x8x512xbf16, #tpu.memory_space<vmem>>, vector<1x1x8x512xbf16>
      %310 = vector.shape_cast %309 : vector<1x1x8x512xbf16> to vector<8x512xbf16>
      %311 = arith.extf %310 : vector<8x512xbf16> to vector<8x512xf32>
      %312 = arith.truncf %303 : vector<8x128xf32> to vector<8x128xbf16>
      %cst_118 = arith.constant dense<0.000000e+00> : vector<8x512xf32>
      %313 = tpu.matmul %312, %5, %cst_118 {dimension_numbers = #tpu.dot_dimension_numbers<[1], [0], [0], [1], [0, 0, 1, 1], [], []>} : vector<8x128xbf16>, vector<128x512xbf16>, vector<8x512xf32> -> vector<8x512xf32>
      %314 = arith.addf %311, %313 : vector<8x512xf32>
      %315 = vector.extract_strided_slice %314 {offsets = [0, 0], sizes = [8, 128], strides = [1, 1]} : vector<8x512xf32> to vector<8x128xf32>
      %cst_119 = arith.constant 5.000000e-01 : f32
      %316 = vector.broadcast %cst_119 : f32 to vector<8x128xf32>
      %317 = arith.mulf %316, %315 : vector<8x128xf32>
      %318 = math.tanh %317 : vector<8x128xf32>
      %cst_120 = arith.constant 1.000000e+00 : f32
      %319 = vector.broadcast %cst_120 : f32 to vector<8x128xf32>
      %320 = arith.addf %318, %319 : vector<8x128xf32>
      %cst_121 = arith.constant 5.000000e-01 : f32
      %321 = vector.broadcast %cst_121 : f32 to vector<8x128xf32>
      %322 = arith.mulf %321, %320 : vector<8x128xf32>
      %323 = vector.extract_strided_slice %314 {offsets = [0, 128], sizes = [8, 128], strides = [1, 1]} : vector<8x512xf32> to vector<8x128xf32>
      %cst_122 = arith.constant 5.000000e-01 : f32
      %324 = vector.broadcast %cst_122 : f32 to vector<8x128xf32>
      %325 = arith.mulf %324, %323 : vector<8x128xf32>
      %326 = math.tanh %325 : vector<8x128xf32>
      %cst_123 = arith.constant 1.000000e+00 : f32
      %327 = vector.broadcast %cst_123 : f32 to vector<8x128xf32>
      %328 = arith.addf %326, %327 : vector<8x128xf32>
      %cst_124 = arith.constant 5.000000e-01 : f32
      %329 = vector.broadcast %cst_124 : f32 to vector<8x128xf32>
      %330 = arith.mulf %329, %328 : vector<8x128xf32>
      %331 = vector.extract_strided_slice %314 {offsets = [0, 256], sizes = [8, 128], strides = [1, 1]} : vector<8x512xf32> to vector<8x128xf32>
      %332 = math.tanh %331 : vector<8x128xf32>
      %333 = vector.extract_strided_slice %314 {offsets = [0, 384], sizes = [8, 128], strides = [1, 1]} : vector<8x512xf32> to vector<8x128xf32>
      %cst_125 = arith.constant 5.000000e-01 : f32
      %334 = vector.broadcast %cst_125 : f32 to vector<8x128xf32>
      %335 = arith.mulf %334, %333 : vector<8x128xf32>
      %336 = math.tanh %335 : vector<8x128xf32>
      %cst_126 = arith.constant 1.000000e+00 : f32
      %337 = vector.broadcast %cst_126 : f32 to vector<8x128xf32>
      %338 = arith.addf %336, %337 : vector<8x128xf32>
      %cst_127 = arith.constant 5.000000e-01 : f32
      %339 = vector.broadcast %cst_127 : f32 to vector<8x128xf32>
      %340 = arith.mulf %339, %338 : vector<8x128xf32>
      %341 = arith.mulf %330, %306 : vector<8x128xf32>
      %342 = arith.mulf %322, %332 : vector<8x128xf32>
      %343 = arith.addf %341, %342 : vector<8x128xf32>
      %344 = math.tanh %343 : vector<8x128xf32>
      %345 = arith.mulf %340, %344 : vector<8x128xf32>
      %346 = arith.addi %10, %307 : i32
      %347 = vector.broadcast %346 : i32 to vector<8x1xi32>
      %348 = arith.cmpi slt, %347, %3 : vector<8x1xi32>
      %cst_128 = arith.constant 0.000000e+00 : f32
      %349 = vector.shape_cast %348 : vector<8x1xi1> to vector<8x1xi1>
      %350 = vector.broadcast %349 : vector<8x1xi1> to vector<8x128xi1>
      %351 = vector.broadcast %cst_128 : f32 to vector<8x128xf32>
      %352 = arith.select %350, %345, %351 : vector<8x128xi1>, vector<8x128xf32>
      %c0_129 = arith.constant 0 : index
      %353 = arith.index_cast %307 : i32 to index
      %c0_130 = arith.constant 0 : index
      %c0_131 = arith.constant 0 : index
      %354 = vector.load %arg5[%c0_129, %353, %c0_130, %c0_131] : memref<1x8x8x128xf32, #tpu.memory_space<vmem>>, vector<1x1x8x128xf32>
      %355 = vector.shape_cast %354 : vector<1x1x8x128xf32> to vector<8x128xf32>
      %356 = vector.shape_cast %352 : vector<8x128xf32> to vector<1x1x8x128xf32>
      tpu.vector_store %arg5[%c0_129, %353, %c0_130, %c0_131], %356 {strides = array<i32>} : memref<1x8x8x128xf32, #tpu.memory_space<vmem>>, vector<1x1x8x128xf32>,
      %357 = vector.shape_cast %348 : vector<8x1xi1> to vector<8x1xi1>
      %358 = vector.broadcast %357 : vector<8x1xi1> to vector<8x128xi1>
      %359 = arith.select %358, %345, %303 : vector<8x128xi1>, vector<8x128xf32>
      %360 = vector.shape_cast %348 : vector<8x1xi1> to vector<8x1xi1>
      %361 = vector.broadcast %360 : vector<8x1xi1> to vector<8x128xi1>
      %362 = arith.select %361, %343, %306 : vector<8x128xi1>, vector<8x128xf32>
      %c6_i32 = arith.constant 6 : i32
      %c7_i32_132 = arith.constant 7 : i32
      %363 = arith.subi %c7_i32_132, %c6_i32 : i32
      %c0_133 = arith.constant 0 : index
      %364 = arith.index_cast %363 : i32 to index
      %c0_134 = arith.constant 0 : index
      %c0_135 = arith.constant 0 : index
      %365 = vector.load %arg3[%c0_133, %364, %c0_134, %c0_135] : memref<1x8x8x512xbf16, #tpu.memory_space<vmem>>, vector<1x1x8x512xbf16>
      %366 = vector.shape_cast %365 : vector<1x1x8x512xbf16> to vector<8x512xbf16>
      %367 = arith.extf %366 : vector<8x512xbf16> to vector<8x512xf32>
      %368 = arith.truncf %359 : vector<8x128xf32> to vector<8x128xbf16>
      %cst_136 = arith.constant dense<0.000000e+00> : vector<8x512xf32>
      %369 = tpu.matmul %368, %5, %cst_136 {dimension_numbers = #tpu.dot_dimension_numbers<[1], [0], [0], [1], [0, 0, 1, 1], [], []>} : vector<8x128xbf16>, vector<128x512xbf16>, vector<8x512xf32> -> vector<8x512xf32>
      %370 = arith.addf %367, %369 : vector<8x512xf32>
      %371 = vector.extract_strided_slice %370 {offsets = [0, 0], sizes = [8, 128], strides = [1, 1]} : vector<8x512xf32> to vector<8x128xf32>
      %cst_137 = arith.constant 5.000000e-01 : f32
      %372 = vector.broadcast %cst_137 : f32 to vector<8x128xf32>
      %373 = arith.mulf %372, %371 : vector<8x128xf32>
      %374 = math.tanh %373 : vector<8x128xf32>
      %cst_138 = arith.constant 1.000000e+00 : f32
      %375 = vector.broadcast %cst_138 : f32 to vector<8x128xf32>
      %376 = arith.addf %374, %375 : vector<8x128xf32>
      %cst_139 = arith.constant 5.000000e-01 : f32
      %377 = vector.broadcast %cst_139 : f32 to vector<8x128xf32>
      %378 = arith.mulf %377, %376 : vector<8x128xf32>
      %379 = vector.extract_strided_slice %370 {offsets = [0, 128], sizes = [8, 128], strides = [1, 1]} : vector<8x512xf32> to vector<8x128xf32>
      %cst_140 = arith.constant 5.000000e-01 : f32
      %380 = vector.broadcast %cst_140 : f32 to vector<8x128xf32>
      %381 = arith.mulf %380, %379 : vector<8x128xf32>
      %382 = math.tanh %381 : vector<8x128xf32>
      %cst_141 = arith.constant 1.000000e+00 : f32
      %383 = vector.broadcast %cst_141 : f32 to vector<8x128xf32>
      %384 = arith.addf %382, %383 : vector<8x128xf32>
      %cst_142 = arith.constant 5.000000e-01 : f32
      %385 = vector.broadcast %cst_142 : f32 to vector<8x128xf32>
      %386 = arith.mulf %385, %384 : vector<8x128xf32>
      %387 = vector.extract_strided_slice %370 {offsets = [0, 256], sizes = [8, 128], strides = [1, 1]} : vector<8x512xf32> to vector<8x128xf32>
      %388 = math.tanh %387 : vector<8x128xf32>
      %389 = vector.extract_strided_slice %370 {offsets = [0, 384], sizes = [8, 128], strides = [1, 1]} : vector<8x512xf32> to vector<8x128xf32>
      %cst_143 = arith.constant 5.000000e-01 : f32
      %390 = vector.broadcast %cst_143 : f32 to vector<8x128xf32>
      %391 = arith.mulf %390, %389 : vector<8x128xf32>
      %392 = math.tanh %391 : vector<8x128xf32>
      %cst_144 = arith.constant 1.000000e+00 : f32
      %393 = vector.broadcast %cst_144 : f32 to vector<8x128xf32>
      %394 = arith.addf %392, %393 : vector<8x128xf32>
      %cst_145 = arith.constant 5.000000e-01 : f32
      %395 = vector.broadcast %cst_145 : f32 to vector<8x128xf32>
      %396 = arith.mulf %395, %394 : vector<8x128xf32>
      %397 = arith.mulf %386, %362 : vector<8x128xf32>
      %398 = arith.mulf %378, %388 : vector<8x128xf32>
      %399 = arith.addf %397, %398 : vector<8x128xf32>
      %400 = math.tanh %399 : vector<8x128xf32>
      %401 = arith.mulf %396, %400 : vector<8x128xf32>
      %402 = arith.addi %10, %363 : i32
      %403 = vector.broadcast %402 : i32 to vector<8x1xi32>
      %404 = arith.cmpi slt, %403, %3 : vector<8x1xi32>
      %cst_146 = arith.constant 0.000000e+00 : f32
      %405 = vector.shape_cast %404 : vector<8x1xi1> to vector<8x1xi1>
      %406 = vector.broadcast %405 : vector<8x1xi1> to vector<8x128xi1>
      %407 = vector.broadcast %cst_146 : f32 to vector<8x128xf32>
      %408 = arith.select %406, %401, %407 : vector<8x128xi1>, vector<8x128xf32>
      %c0_147 = arith.constant 0 : index
      %409 = arith.index_cast %363 : i32 to index
      %c0_148 = arith.constant 0 : index
      %c0_149 = arith.constant 0 : index
      %410 = vector.load %arg5[%c0_147, %409, %c0_148, %c0_149] : memref<1x8x8x128xf32, #tpu.memory_space<vmem>>, vector<1x1x8x128xf32>
      %411 = vector.shape_cast %410 : vector<1x1x8x128xf32> to vector<8x128xf32>
      %412 = vector.shape_cast %408 : vector<8x128xf32> to vector<1x1x8x128xf32>
      tpu.vector_store %arg5[%c0_147, %409, %c0_148, %c0_149], %412 {strides = array<i32>} : memref<1x8x8x128xf32, #tpu.memory_space<vmem>>, vector<1x1x8x128xf32>,
      %413 = vector.shape_cast %404 : vector<8x1xi1> to vector<8x1xi1>
      %414 = vector.broadcast %413 : vector<8x1xi1> to vector<8x128xi1>
      %415 = arith.select %414, %401, %359 : vector<8x128xi1>, vector<8x128xf32>
      %416 = vector.shape_cast %404 : vector<8x1xi1> to vector<8x1xi1>
      %417 = vector.broadcast %416 : vector<8x1xi1> to vector<8x128xi1>
      %418 = arith.select %417, %399, %362 : vector<8x128xi1>, vector<8x128xf32>
      %c7_i32_150 = arith.constant 7 : i32
      %c7_i32_151 = arith.constant 7 : i32
      %419 = arith.subi %c7_i32_151, %c7_i32_150 : i32
      %c0_152 = arith.constant 0 : index
      %420 = arith.index_cast %419 : i32 to index
      %c0_153 = arith.constant 0 : index
      %c0_154 = arith.constant 0 : index
      %421 = vector.load %arg3[%c0_152, %420, %c0_153, %c0_154] : memref<1x8x8x512xbf16, #tpu.memory_space<vmem>>, vector<1x1x8x512xbf16>
      %422 = vector.shape_cast %421 : vector<1x1x8x512xbf16> to vector<8x512xbf16>
      %423 = arith.extf %422 : vector<8x512xbf16> to vector<8x512xf32>
      %424 = arith.truncf %415 : vector<8x128xf32> to vector<8x128xbf16>
      %cst_155 = arith.constant dense<0.000000e+00> : vector<8x512xf32>
      %425 = tpu.matmul %424, %5, %cst_155 {dimension_numbers = #tpu.dot_dimension_numbers<[1], [0], [0], [1], [0, 0, 1, 1], [], []>} : vector<8x128xbf16>, vector<128x512xbf16>, vector<8x512xf32> -> vector<8x512xf32>
      %426 = arith.addf %423, %425 : vector<8x512xf32>
      %427 = vector.extract_strided_slice %426 {offsets = [0, 0], sizes = [8, 128], strides = [1, 1]} : vector<8x512xf32> to vector<8x128xf32>
      %cst_156 = arith.constant 5.000000e-01 : f32
      %428 = vector.broadcast %cst_156 : f32 to vector<8x128xf32>
      %429 = arith.mulf %428, %427 : vector<8x128xf32>
      %430 = math.tanh %429 : vector<8x128xf32>
      %cst_157 = arith.constant 1.000000e+00 : f32
      %431 = vector.broadcast %cst_157 : f32 to vector<8x128xf32>
      %432 = arith.addf %430, %431 : vector<8x128xf32>
      %cst_158 = arith.constant 5.000000e-01 : f32
      %433 = vector.broadcast %cst_158 : f32 to vector<8x128xf32>
      %434 = arith.mulf %433, %432 : vector<8x128xf32>
      %435 = vector.extract_strided_slice %426 {offsets = [0, 128], sizes = [8, 128], strides = [1, 1]} : vector<8x512xf32> to vector<8x128xf32>
      %cst_159 = arith.constant 5.000000e-01 : f32
      %436 = vector.broadcast %cst_159 : f32 to vector<8x128xf32>
      %437 = arith.mulf %436, %435 : vector<8x128xf32>
      %438 = math.tanh %437 : vector<8x128xf32>
      %cst_160 = arith.constant 1.000000e+00 : f32
      %439 = vector.broadcast %cst_160 : f32 to vector<8x128xf32>
      %440 = arith.addf %438, %439 : vector<8x128xf32>
      %cst_161 = arith.constant 5.000000e-01 : f32
      %441 = vector.broadcast %cst_161 : f32 to vector<8x128xf32>
      %442 = arith.mulf %441, %440 : vector<8x128xf32>
      %443 = vector.extract_strided_slice %426 {offsets = [0, 256], sizes = [8, 128], strides = [1, 1]} : vector<8x512xf32> to vector<8x128xf32>
      %444 = math.tanh %443 : vector<8x128xf32>
      %445 = vector.extract_strided_slice %426 {offsets = [0, 384], sizes = [8, 128], strides = [1, 1]} : vector<8x512xf32> to vector<8x128xf32>
      %cst_162 = arith.constant 5.000000e-01 : f32
      %446 = vector.broadcast %cst_162 : f32 to vector<8x128xf32>
      %447 = arith.mulf %446, %445 : vector<8x128xf32>
      %448 = math.tanh %447 : vector<8x128xf32>
      %cst_163 = arith.constant 1.000000e+00 : f32
      %449 = vector.broadcast %cst_163 : f32 to vector<8x128xf32>
      %450 = arith.addf %448, %449 : vector<8x128xf32>
      %cst_164 = arith.constant 5.000000e-01 : f32
      %451 = vector.broadcast %cst_164 : f32 to vector<8x128xf32>
      %452 = arith.mulf %451, %450 : vector<8x128xf32>
      %453 = arith.mulf %442, %418 : vector<8x128xf32>
      %454 = arith.mulf %434, %444 : vector<8x128xf32>
      %455 = arith.addf %453, %454 : vector<8x128xf32>
      %456 = math.tanh %455 : vector<8x128xf32>
      %457 = arith.mulf %452, %456 : vector<8x128xf32>
      %458 = arith.addi %10, %419 : i32
      %459 = vector.broadcast %458 : i32 to vector<8x1xi32>
      %460 = arith.cmpi slt, %459, %3 : vector<8x1xi32>
      %cst_165 = arith.constant 0.000000e+00 : f32
      %461 = vector.shape_cast %460 : vector<8x1xi1> to vector<8x1xi1>
      %462 = vector.broadcast %461 : vector<8x1xi1> to vector<8x128xi1>
      %463 = vector.broadcast %cst_165 : f32 to vector<8x128xf32>
      %464 = arith.select %462, %457, %463 : vector<8x128xi1>, vector<8x128xf32>
      %c0_166 = arith.constant 0 : index
      %465 = arith.index_cast %419 : i32 to index
      %c0_167 = arith.constant 0 : index
      %c0_168 = arith.constant 0 : index
      %466 = vector.load %arg5[%c0_166, %465, %c0_167, %c0_168] : memref<1x8x8x128xf32, #tpu.memory_space<vmem>>, vector<1x1x8x128xf32>
      %467 = vector.shape_cast %466 : vector<1x1x8x128xf32> to vector<8x128xf32>
      %468 = vector.shape_cast %464 : vector<8x128xf32> to vector<1x1x8x128xf32>
      tpu.vector_store %arg5[%c0_166, %465, %c0_167, %c0_168], %468 {strides = array<i32>} : memref<1x8x8x128xf32, #tpu.memory_space<vmem>>, vector<1x1x8x128xf32>,
      %469 = vector.shape_cast %460 : vector<8x1xi1> to vector<8x1xi1>
      %470 = vector.broadcast %469 : vector<8x1xi1> to vector<8x128xi1>
      %471 = arith.select %470, %457, %415 : vector<8x128xi1>, vector<8x128xf32>
      %472 = vector.shape_cast %460 : vector<8x1xi1> to vector<8x1xi1>
      %473 = vector.broadcast %472 : vector<8x1xi1> to vector<8x128xi1>
      %474 = arith.select %473, %455, %418 : vector<8x128xi1>, vector<8x128xf32>
      %c8_i32_169 = arith.constant 8 : i32
      %c0_170 = arith.constant 0 : index
      %c0_171 = arith.constant 0 : index
      %475 = vector.load %arg8[%c0_170, %c0_171] : memref<8x128xf32, #tpu.memory_space<vmem>>, vector<8x128xf32>
      tpu.vector_store %arg8[%c0_170, %c0_171], %471 {strides = array<i32>} : memref<8x128xf32, #tpu.memory_space<vmem>>, vector<8x128xf32>,
      %c0_172 = arith.constant 0 : index
      %c0_173 = arith.constant 0 : index
      %476 = vector.load %arg9[%c0_172, %c0_173] : memref<8x128xf32, #tpu.memory_space<vmem>>, vector<8x128xf32>
      tpu.vector_store %arg9[%c0_172, %c0_173], %474 {strides = array<i32>} : memref<8x128xf32, #tpu.memory_space<vmem>>, vector<8x128xf32>,
    } else {
    }
    %c0_9 = arith.constant 0 : index
    %c0_10 = arith.constant 0 : index
    %17 = vector.load %arg8[%c0_9, %c0_10] : memref<8x128xf32, #tpu.memory_space<vmem>>, vector<8x128xf32>
    %c0_11 = arith.constant 0 : index
    %c0_12 = arith.constant 0 : index
    %c0_13 = arith.constant 0 : index
    %18 = vector.load %arg6[%c0_11, %c0_12, %c0_13] : memref<1x8x128xf32, #tpu.memory_space<vmem>>, vector<1x8x128xf32>
    %19 = vector.shape_cast %18 : vector<1x8x128xf32> to vector<8x128xf32>
    %20 = vector.shape_cast %17 : vector<8x128xf32> to vector<1x8x128xf32>
    tpu.vector_store %arg6[%c0_11, %c0_12, %c0_13], %20 {strides = array<i32>} : memref<1x8x128xf32, #tpu.memory_space<vmem>>, vector<1x8x128xf32>,
    %c0_14 = arith.constant 0 : index
    %c0_15 = arith.constant 0 : index
    %21 = vector.load %arg9[%c0_14, %c0_15] : memref<8x128xf32, #tpu.memory_space<vmem>>, vector<8x128xf32>
    %c0_16 = arith.constant 0 : index
    %c0_17 = arith.constant 0 : index
    %c0_18 = arith.constant 0 : index
    %22 = vector.load %arg7[%c0_16, %c0_17, %c0_18] : memref<1x8x128xf32, #tpu.memory_space<vmem>>, vector<1x8x128xf32>
    %23 = vector.shape_cast %22 : vector<1x8x128xf32> to vector<8x128xf32>
    %24 = vector.shape_cast %21 : vector<8x128xf32> to vector<1x8x128xf32>
    tpu.vector_store %arg7[%c0_16, %c0_17, %c0_18], %24 {strides = array<i32>} : memref<1x8x128xf32, #tpu.memory_space<vmem>>, vector<1x8x128xf32>,
    return
  }
  func.func @transform_0(%arg0: i32, %arg1: i32) -> (i32, i32) {
    %c0_i32 = arith.constant 0 : i32
    %c0_i32_0 = arith.constant 0 : i32
    %c0_i32_1 = arith.constant 0 : i32
    return %c0_i32, %c0_i32_0 : i32, i32
  }
  func.func @transform_1(%arg0: i32, %arg1: i32) -> (i32, i32, i32, i32) {
    %c2_i32 = arith.constant 2 : i32
    %0 = arith.muli %c2_i32, %arg1 : i32
    %c0_i32 = arith.constant 0 : i32
    %1 = arith.subi %c0_i32, %0 : i32
    %2 = arith.muli %arg0, %1 : i32
    %3 = arith.addi %arg1, %2 : i32
    %c0_i32_0 = arith.constant 0 : i32
    %c0_i32_1 = arith.constant 0 : i32
    %c0_i32_2 = arith.constant 0 : i32
    return %arg0, %3, %c0_i32_0, %c0_i32_1 : i32, i32, i32, i32
  }
  func.func @transform_2(%arg0: i32, %arg1: i32) -> (i32, i32, i32) {
    %c0_i32 = arith.constant 0 : i32
    %c0_i32_0 = arith.constant 0 : i32
    %c0_i32_1 = arith.constant 0 : i32
    return %arg0, %c0_i32, %c0_i32_0 : i32, i32, i32
  }
  func.func @transform_3(%arg0: i32, %arg1: i32) -> (i32, i32, i32, i32) {
    %c2_i32 = arith.constant 2 : i32
    %0 = arith.muli %c2_i32, %arg1 : i32
    %c0_i32 = arith.constant 0 : i32
    %1 = arith.subi %c0_i32, %0 : i32
    %2 = arith.muli %arg0, %1 : i32
    %3 = arith.addi %arg1, %2 : i32
    %c0_i32_0 = arith.constant 0 : i32
    %c0_i32_1 = arith.constant 0 : i32
    %c0_i32_2 = arith.constant 0 : i32
    return %arg0, %3, %c0_i32_0, %c0_i32_1 : i32, i32, i32, i32
  }
  func.func @transform_4(%arg0: i32, %arg1: i32) -> (i32, i32, i32) {
    %c0_i32 = arith.constant 0 : i32
    %c0_i32_0 = arith.constant 0 : i32
    %c0_i32_1 = arith.constant 0 : i32
    return %arg0, %c0_i32, %c0_i32_0 : i32, i32, i32
  }
  func.func @transform_5(%arg0: i32, %arg1: i32) -> (i32, i32, i32) {
    %c0_i32 = arith.constant 0 : i32
    %c0_i32_0 = arith.constant 0 : i32
    %c0_i32_1 = arith.constant 0 : i32
    return %arg0, %c0_i32, %c0_i32_0 : i32, i32, i32
  }
}

</mosaic_0001>

<llo_original>
// kernel: encoder_rnn_forward.2
$region0: #{encoder_rnn_forward.2}
  #allocation0 [shape = 'u32[]', space=smem, size = 0x4, offset = 0x4, fixed_abs, tag = 'smem constant byte address 0x4 - core index']
  #allocation1 [shape = 'u32[144,128]{1,0:T(1,128)}', space=vmem, size = 0x12000, scoped, tag = 'internal scratch']
  #allocation2 [shape = 'f32[8,128]{1,0:T(8,128)}', space=vmem, size = 0x1000, scoped, tag = 'scratch operand']
  #allocation3 [shape = 'f32[8,128]{1,0:T(8,128)}', space=vmem, size = 0x1000, scoped, tag = 'scratch operand']
  %s0 = inlined_call_operand.hbm [shape: s32[8,1], index: 0, kind: input, shape index: {}]
  %s1 = inlined_call_operand.hbm [shape: bf16[2,8,8,512], index: 1, kind: input, shape index: {}]
  %s2 = inlined_call_operand.hbm [shape: bf16[2,128,512], index: 2, kind: input, shape index: {}]
  %s3 = inlined_call_operand.hbm [shape: f32[2,8,8,128], index: 3, kind: output, shape index: {0}]
  %s4 = inlined_call_operand.hbm [shape: f32[2,8,128], index: 4, kind: output, shape index: {1}]
  %s5 = inlined_call_operand.hbm [shape: f32[2,8,128], index: 5, kind: output, shape index: {2}]
  %6 = xla_tuple %s3, %s4, %s5
  %s7 = sld [smem:[#allocation0]]
  $region85: #{encoder_rnn_forward.2} parent=0
    _
  %s9 = ssub.s32 1, %s7
  %s10 = scalar_select 0, %s9, %s7
  $region1: #{encoder_rnn_forward.2} parent=0
    #allocation4 [shape = 'u8[4096]{0}', space=vmem, size = 0x1000, scoped, tag = 'input window, operand 0, single buffered']
    #allocation5 [shape = 's32[2]{0}', space=sflag, size = 0x8, scoped, tag = 'scoped memory for encoder_rnn_forward.2']
    #allocation6 [shape = 's32[2]{0}', space=sflag, size = 0x8, scoped, tag = 'scoped memory for encoder_rnn_forward.2']
    #allocation7 [shape = 'u8[131072]{0}', space=vmem, size = 0x20000, scoped, tag = 'input window, operand 1']
    #allocation8 [shape = 's32[2]{0}', space=sflag, size = 0x8, scoped, tag = 'scoped memory for encoder_rnn_forward.2']
    #allocation9 [shape = 'u8[262144]{0}', space=vmem, size = 0x40000, scoped, tag = 'input window, operand 2']
    #allocation10 [shape = 'u8[65536]{0}', space=vmem, size = 0x10000, scoped, tag = 'output window, operand 0']
    #allocation11 [shape = 'u8[8192]{0}', space=vmem, size = 0x2000, scoped, tag = 'output window, operand 1']
    #allocation12 [shape = 's32[2]{0}', space=sflag, size = 0x8, scoped, tag = 'scoped memory for encoder_rnn_forward.2']
    #allocation13 [shape = 'u8[8192]{0}', space=vmem, size = 0x2000, scoped, tag = 'output window, operand 2']
    %11 = vsyncpa [#allocation5], 0
    %12 = vsyncpa [#allocation8], 0
    %s13 = scalar_lea.sflag [#allocation8], 1
    %14 = vsyncpa %s13, 0
    %15 = vsyncpa [#allocation6], 0
    %s16 = scalar_lea.sflag [#allocation6], 1
    %17 = vsyncpa %s16, 0
    %18 = vsyncpa [#allocation12], 0
    %s19 = scalar_lea.sflag [#allocation12], 1
    %20 = vsyncpa %s19, 0
    loop: start=0, step=1, limit=4
    $region2: #{encoder_rnn_forward.2} parent=1 // loop_pre_header
      _
    $region3: #{encoder_rnn_forward.2} parent=1 // loop_header
      %s22 = sphi 0, %s26
      %p23 = scmp.ge.s32.totalorder %s22, 4
      %s29 = sphi 0, %s41
      %s30 = sphi 0, %s37
      %s31 = sphi 0, %s29
      %s32 = sphi 0, %s30
      %s33 = sphi 0, %s31
      %s34 = sphi 0, %s32
      %s42 = sphi 0, %s42
      %s44 = sphi 0, %s42
      %s45 = sphi 0, %s44
      %s59 = sphi 0, %s45
      %s75 = sphi 0, %s77
      %s78 = sphi 0, %s75
      %s79 = sphi 0, %s78
      %s95 = sphi 0, %s79
      %s101 = sphi 0, %s103
      %s104 = sphi 0, %s101
      %s105 = sphi 0, %s104
      %s121 = sphi 0, %s105
      %s137 = sphi 0, %s139
      %s140 = sphi 0, %s137
      %s141 = sphi 0, %s140
      %s157 = sphi 0, %s141
      %s163 = sphi 0, %s165
      %s166 = sphi 0, %s163
      %s167 = sphi 0, %s166
      %s183 = sphi 0, %s167
      %s189 = sphi 0, %s191
      %s192 = sphi 0, %s189
      %s193 = sphi 0, %s192
      %s209 = sphi 0, %s193
    $region4: #{encoder_rnn_forward.2} parent=1 // loop_header_branch
      %25 = sbr.rel (%p23) target = $region8
    $region5: #{encoder_rnn_forward.2} parent=1 // loop_body
      %s27 = ssub.s32 %s22, 1
      %s28 = ssub.s32 %s22, 2
      %s35 = sadd.s32 1, %s30
      %p36 = scmp.ge.s32.totalorder %s35, 1
      %s37 = scalar_select %p36, 0, %s35
      %s38 = sadd.s32 1, %s29
      %s39 = scalar_select %p36, %s38, %s29
      %p40 = scmp.ge.s32.totalorder %s39, 2
      %s41 = scalar_select %p40, 0, %s39
      %s43 = sadd.s32 %s42, 1
      %p46 = scmp.eq.s32.totalorder %s22, 1
      %p47 = scmp.ne.s32.totalorder %s42, %s44
      %p48 = scmp.eq.s32.totalorder %s22, 0
      %p49 = por %p47, %p48
      %p50 = scmp.ne.s32.totalorder %s42, %s44
      %p51 = scmp.eq.s32.totalorder %s27, 1
      %p52 = por %p50, %p51
      %p53 = scmp.ne.s32.totalorder %s44, %s45
      %p54 = scmp.eq.s32.totalorder %s27, 0
      %p55 = por %p53, %p54
      %p56 = scmp.ne.s32.totalorder %s44, %s45
      %p57 = scmp.eq.s32.totalorder %s28, 1
      %p58 = por %p56, %p57
      %p60 = scmp.ne.s32.totalorder %s45, %s59
      %p61 = scmp.eq.s32.totalorder %s28, 0
      %p62 = por %p60, %p61
      %s63 = smul.u32 %s30, 2
      %s64 = ssub.s32 0, %s63
      %s65 = smul.u32 %s29, %s64
      %s66 = sadd.s32 %s30, %s65
      %s67 = smul.u32 %s37, 2
      %s68 = ssub.s32 0, %s67
      %s69 = smul.u32 %s41, %s68
      %s70 = sadd.s32 %s37, %s69
      %s71 = ssub.s32 %s29, %s41
      %s72 = ssub.s32 %s66, %s70
      %s73 = sor.u32 %s71, %s72
      %p74 = scmp.eq.s32.totalorder %s73, 0
      %s76 = sadd.s32 %s75, 1
      %s77 = scalar_select %p74, %s75, %s76
      %p80 = pneg %p74
      %p81 = scmp.eq.s32.totalorder %s22, 1
      %p82 = por %p80, %p81
      %p83 = scmp.ne.s32.totalorder %s75, %s78
      %p84 = scmp.eq.s32.totalorder %s22, 0
      %p85 = por %p83, %p84
      %p86 = scmp.ne.s32.totalorder %s75, %s78
      %p87 = scmp.eq.s32.totalorder %s27, 1
      %p88 = por %p86, %p87
      %p89 = scmp.ne.s32.totalorder %s78, %s79
      %p90 = scmp.eq.s32.totalorder %s27, 0
      %p91 = por %p89, %p90
      %p92 = scmp.ne.s32.totalorder %s78, %s79
      %p93 = scmp.eq.s32.totalorder %s28, 1
      %p94 = por %p92, %p93
      %p96 = scmp.ne.s32.totalorder %s79, %s95
      %p97 = scmp.eq.s32.totalorder %s28, 0
      %p98 = por %p96, %p97
      %s99 = ssub.s32 %s29, %s41
      %p100 = scmp.eq.s32.totalorder %s99, 0
      %s102 = sadd.s32 %s101, 1
      %s103 = scalar_select %p100, %s101, %s102
      %p106 = pneg %p100
      %p107 = scmp.eq.s32.totalorder %s22, 1
      %p108 = por %p106, %p107
      %p109 = scmp.ne.s32.totalorder %s101, %s104
      %p110 = scmp.eq.s32.totalorder %s22, 0
      %p111 = por %p109, %p110
      %p112 = scmp.ne.s32.totalorder %s101, %s104
      %p113 = scmp.eq.s32.totalorder %s27, 1
      %p114 = por %p112, %p113
      %p115 = scmp.ne.s32.totalorder %s104, %s105
      %p116 = scmp.eq.s32.totalorder %s27, 0
      %p117 = por %p115, %p116
      %p118 = scmp.ne.s32.totalorder %s104, %s105
      %p119 = scmp.eq.s32.totalorder %s28, 1
      %p120 = por %p118, %p119
      %p122 = scmp.ne.s32.totalorder %s105, %s121
      %p123 = scmp.eq.s32.totalorder %s28, 0
      %p124 = por %p122, %p123
      %s125 = smul.u32 %s30, 2
      %s126 = ssub.s32 0, %s125
      %s127 = smul.u32 %s29, %s126
      %s128 = sadd.s32 %s30, %s127
      %s129 = smul.u32 %s37, 2
      %s130 = ssub.s32 0, %s129
      %s131 = smul.u32 %s41, %s130
      %s132 = sadd.s32 %s37, %s131
      %s133 = ssub.s32 %s29, %s41
      %s134 = ssub.s32 %s128, %s132
      %s135 = sor.u32 %s133, %s134
      %p136 = scmp.eq.s32.totalorder %s135, 0
      %s138 = sadd.s32 %s137, 1
      %s139 = scalar_select %p136, %s137, %s138
      %p142 = pneg %p136
      %p143 = scmp.eq.s32.totalorder %s22, 1
      %p144 = por %p142, %p143
      %p145 = scmp.ne.s32.totalorder %s137, %s140
      %p146 = scmp.eq.s32.totalorder %s22, 0
      %p147 = por %p145, %p146
      %p148 = scmp.ne.s32.totalorder %s137, %s140
      %p149 = scmp.eq.s32.totalorder %s27, 1
      %p150 = por %p148, %p149
      %p151 = scmp.ne.s32.totalorder %s140, %s141
      %p152 = scmp.eq.s32.totalorder %s27, 0
      %p153 = por %p151, %p152
      %p154 = scmp.ne.s32.totalorder %s140, %s141
      %p155 = scmp.eq.s32.totalorder %s28, 1
      %p156 = por %p154, %p155
      %p158 = scmp.ne.s32.totalorder %s141, %s157
      %p159 = scmp.eq.s32.totalorder %s28, 0
      %p160 = por %p158, %p159
      %s161 = ssub.s32 %s29, %s41
      %p162 = scmp.eq.s32.totalorder %s161, 0
      %s164 = sadd.s32 %s163, 1
      %s165 = scalar_select %p162, %s163, %s164
      %p168 = pneg %p162
      %p169 = scmp.eq.s32.totalorder %s22, 1
      %p170 = por %p168, %p169
      %p171 = scmp.ne.s32.totalorder %s163, %s166
      %p172 = scmp.eq.s32.totalorder %s22, 0
      %p173 = por %p171, %p172
      %p174 = scmp.ne.s32.totalorder %s163, %s166
      %p175 = scmp.eq.s32.totalorder %s27, 1
      %p176 = por %p174, %p175
      %p177 = scmp.ne.s32.totalorder %s166, %s167
      %p178 = scmp.eq.s32.totalorder %s27, 0
      %p179 = por %p177, %p178
      %p180 = scmp.ne.s32.totalorder %s166, %s167
      %p181 = scmp.eq.s32.totalorder %s28, 1
      %p182 = por %p180, %p181
      %p184 = scmp.ne.s32.totalorder %s167, %s183
      %p185 = scmp.eq.s32.totalorder %s28, 0
      %p186 = por %p184, %p185
      %s187 = ssub.s32 %s29, %s41
      %p188 = scmp.eq.s32.totalorder %s187, 0
      %s190 = sadd.s32 %s189, 1
      %s191 = scalar_select %p188, %s189, %s190
      %p194 = pneg %p188
      %p195 = scmp.eq.s32.totalorder %s22, 1
      %p196 = por %p194, %p195
      %p197 = scmp.ne.s32.totalorder %s189, %s192
      %p198 = scmp.eq.s32.totalorder %s22, 0
      %p199 = por %p197, %p198
      %p200 = scmp.ne.s32.totalorder %s189, %s192
      %p201 = scmp.eq.s32.totalorder %s27, 1
      %p202 = por %p200, %p201
      %p203 = scmp.ne.s32.totalorder %s192, %s193
      %p204 = scmp.eq.s32.totalorder %s27, 0
      %p205 = por %p203, %p204
      %p206 = scmp.ne.s32.totalorder %s192, %s193
      %p207 = scmp.eq.s32.totalorder %s28, 1
      %p208 = por %p206, %p207
      %p210 = scmp.ne.s32.totalorder %s193, %s209
      %p211 = scmp.eq.s32.totalorder %s28, 0
      %p212 = por %p210, %p211
      %p213 = scmp.le.s32.totalorder 1, %s22
      %p214 = scmp.lt.s32.totalorder %s22, 3
      %p215 = pnand %p213, %p214
      %p216 = pneg %p215
      // Predicated region
      $region9: #{encoder_rnn_forward.2} parent=5 // pred_check
        _
      $region10: #{encoder_rnn_forward.2} parent=5 // pred_check_branch
        %218 = sbr.rel (%p215) target = $region12
      $region11: #{encoder_rnn_forward.2} parent=5 // pred_region
        %s219 = ssub.s32 %s22, 1
        // Predicated region
        $region13: #{encoder_rnn_forward.2} parent=11 // pred_check
          %p220 = pneg %p55
        $region14: #{encoder_rnn_forward.2} parent=11 // pred_check_branch
          %222 = sbr.rel (%p220) target = $region16
        $region15: #{encoder_rnn_forward.2} parent=11 // pred_region
          %s224 = ssub.s32 128, 128
          %225 = vsyncadd [#allocation5], %s224
          %s227 = sshll.u32 [#allocation4], 4
          %s228 = int_to_ptr.vmem [resolvable:$true] %s227
          %230 = dma.hbm_to_vmem [thread:$0]  %s0, 128, %s228, [#allocation5]
        $region16: #{encoder_rnn_forward.2} parent=11 // pred_fallthru
          _
      $region12: #{encoder_rnn_forward.2} parent=5 // pred_fallthru
        _
      %p231 = scmp.lt.s32.totalorder %s22, 2
      // Predicated region
      $region17: #{encoder_rnn_forward.2} parent=5 // pred_check
        %p232 = pneg %p231
      $region18: #{encoder_rnn_forward.2} parent=5 // pred_check_branch
        %234 = sbr.rel (%p232) target = $region20
      $region19: #{encoder_rnn_forward.2} parent=5 // pred_region
        // Predicated region
        $region21: #{encoder_rnn_forward.2} parent=19 // pred_check
          %p235 = pneg %p85
        $region22: #{encoder_rnn_forward.2} parent=19 // pred_check_branch
          %237 = sbr.rel (%p235) target = $region24
        $region23: #{encoder_rnn_forward.2} parent=19 // pred_region
          %s238 = sand.u32 %s22, 1
          %s239 = scalar_lea.sflag [#allocation8], %s238
          %s240 = sand.u32 %s75, 1
          %s241 = smul.addr %s240, 128
          %s242 = scalar_lea.vmem [#allocation7], %s241
          %s243 = smul.u32 %s30, 2
          %s244 = ssub.s32 0, %s243
          %s245 = smul.u32 %s29, %s244
          %s246 = sadd.s32 %s30, %s245
          %s247 = smul.u32 8, %s246
          %s249 = ssub.s32 2048, 2048
          %250 = vsyncadd %s239, %s249
          %s251 = smul.addr %s247, 4
          %s252 = smul.addr %s29, 32
          %s253 = sadd.s32 %s251, %s252
          %s254 = smul.addr %s253, 64
          %s255 = scalar_lea.hbm %s1, %s254
          %s256 = sshll.u32 %s242, 4
          %s257 = int_to_ptr.vmem [resolvable:$true] %s256
          %262 = dma.hbm_to_vmem [thread:$0]  %s255, 2048, %s257, %s239, 256, 256, 16
        $region24: #{encoder_rnn_forward.2} parent=19 // pred_fallthru
          _
        // Predicated region
        $region25: #{encoder_rnn_forward.2} parent=19 // pred_check
          %p263 = pneg %p111
        $region26: #{encoder_rnn_forward.2} parent=19 // pred_check_branch
          %265 = sbr.rel (%p263) target = $region28
        $region27: #{encoder_rnn_forward.2} parent=19 // pred_region
          %s266 = sand.u32 %s22, 1
          %s267 = scalar_lea.sflag [#allocation8], %s266
          %s268 = sand.u32 %s101, 1
          %s269 = smul.addr %s268, 256
          %s270 = scalar_lea.vmem [#allocation9], %s269
          %s272 = ssub.s32 4096, 4096
          %273 = vsyncadd %s267, %s272
          %s274 = smul.addr %s29, 64
          %s275 = smul.addr %s274, 64
          %s276 = scalar_lea.hbm %s2, %s275
          %s277 = sshll.u32 %s270, 4
          %s278 = int_to_ptr.vmem [resolvable:$true] %s277
          %283 = dma.hbm_to_vmem [thread:$0]  %s276, 4096, %s278, %s267, 256, 256, 16
        $region28: #{encoder_rnn_forward.2} parent=19 // pred_fallthru
          _
      $region20: #{encoder_rnn_forward.2} parent=5 // pred_fallthru
        _
      %p284 = scmp.le.s32.totalorder 1, %s22
      %p285 = scmp.lt.s32.totalorder %s22, 3
      %p286 = pnand %p284, %p285
      %p287 = pneg %p286
      // Predicated region
      $region29: #{encoder_rnn_forward.2} parent=5 // pred_check
        _
      $region30: #{encoder_rnn_forward.2} parent=5 // pred_check_branch
        %289 = sbr.rel (%p286) target = $region32
      $region31: #{encoder_rnn_forward.2} parent=5 // pred_region
        %s290 = ssub.s32 %s22, 1
        // Predicated region
        $region33: #{encoder_rnn_forward.2} parent=31 // pred_check
          %p291 = pneg %p55
        $region34: #{encoder_rnn_forward.2} parent=31 // pred_check_branch
          %293 = sbr.rel (%p291) target = $region36
        $region35: #{encoder_rnn_forward.2} parent=31 // pred_region
          %294 = dma.done [#allocation5], 128
        $region36: #{encoder_rnn_forward.2} parent=31 // pred_fallthru
          _
        %s295 = sand.u32 %s27, 1
        %s296 = scalar_lea.sflag [#allocation8], %s295
        %s297 = sand.u32 %s78, 1
        %s298 = smul.addr %s297, 128
        %s299 = scalar_lea.vmem [#allocation7], %s298
        // Predicated region
        $region37: #{encoder_rnn_forward.2} parent=31 // pred_check
          %p300 = pneg %p91
        $region38: #{encoder_rnn_forward.2} parent=31 // pred_check_branch
          %302 = sbr.rel (%p300) target = $region40
        $region39: #{encoder_rnn_forward.2} parent=31 // pred_region
          %303 = dma.done %s296, 2048
        $region40: #{encoder_rnn_forward.2} parent=31 // pred_fallthru
          _
        %s304 = sand.u32 %s27, 1
        %s305 = scalar_lea.sflag [#allocation8], %s304
        %s306 = sand.u32 %s104, 1
        %s307 = smul.addr %s306, 256
        %s308 = scalar_lea.vmem [#allocation9], %s307
        // Predicated region
        $region41: #{encoder_rnn_forward.2} parent=31 // pred_check
          %p309 = pneg %p117
        $region42: #{encoder_rnn_forward.2} parent=31 // pred_check_branch
          %311 = sbr.rel (%p309) target = $region44
        $region43: #{encoder_rnn_forward.2} parent=31 // pred_region
          %312 = dma.done %s305, 4096
        $region44: #{encoder_rnn_forward.2} parent=31 // pred_fallthru
          _
        %p313 = pneg %p55
        %p314 = pneg %p52
        %s315 = sand.u32 %s27, 1
        %s316 = scalar_lea.sflag [#allocation8], %s315
        %s317 = sand.u32 %s78, 1
        %s318 = smul.addr %s317, 128
        %s319 = scalar_lea.vmem [#allocation7], %s318
        %p320 = pneg %p91
        %p321 = pneg %p88
        %s322 = sand.u32 %s27, 1
        %s323 = scalar_lea.sflag [#allocation8], %s322
        %s324 = sand.u32 %s104, 1
        %s325 = smul.addr %s324, 256
        %s326 = scalar_lea.vmem [#allocation9], %s325
        %p327 = pneg %p117
        %p328 = pneg %p114
        %p329 = pneg %p153
        %p330 = pneg %p150
        %s331 = sand.u32 %s140, 1
        %s332 = scalar_lea.sflag [#allocation6], %s331
        %s333 = sand.u32 %s140, 1
        %s334 = smul.addr %s333, 64
        %s335 = scalar_lea.vmem [#allocation10], %s334
        %p336 = pneg %p179
        %p337 = pneg %p176
        %s338 = sand.u32 %s27, 1
        %s339 = scalar_lea.sflag [#allocation12], %s338
        %s340 = sand.u32 %s166, 1
        %s341 = smul.addr %s340, 8
        %s342 = scalar_lea.vmem [#allocation11], %s341
        %p343 = pneg %p205
        %p344 = pneg %p202
        %s345 = sand.u32 %s27, 1
        %s346 = scalar_lea.sflag [#allocation12], %s345
        %s347 = sand.u32 %s192, 1
        %s348 = smul.addr %s347, 8
        %s349 = scalar_lea.vmem [#allocation13], %s348
        %s350 = smul.u32 %s32, 2
        %s351 = ssub.s32 0, %s350
        %s352 = smul.u32 %s31, %s351
        %s353 = sadd.s32 %s32, %s352
        %s354 = smul.u32 8, %s353
        %s355 = smul.u32 %s32, 2
        %s356 = ssub.s32 0, %s355
        %s357 = smul.u32 %s31, %s356
        %s358 = sadd.s32 %s32, %s357
        %s359 = smul.u32 8, %s358
        %p361 = scmp.eq.s32.totalorder %s32, 0
        // Predicated region
        $region45: #{encoder_rnn_forward.2} parent=31 // pred_check
          %p362 = pneg %p361
        $region46: #{encoder_rnn_forward.2} parent=31 // pred_check_branch
          %364 = sbr.rel (%p362) target = $region48
        $region47: #{encoder_rnn_forward.2} parent=31 // pred_region
          %365 = vst [vmem:[#allocation2] sm:$0xff] 0.0
          %366 = vst [vmem:[#allocation3] sm:$0xff] 0.0
        $region48: #{encoder_rnn_forward.2} parent=31 // pred_fallthru
          _
        %v367 = vld [vmem:[#allocation4] sm:$0xff]
        %v368 = vld [vmem:[%s308] sm:$0xff]
        %v369 = vld [vmem:[%s308 + $0x8] sm:$0xff]
        %v370 = vld [vmem:[%s308 + $0x10] sm:$0xff]
        %v371 = vld [vmem:[%s308 + $0x18] sm:$0xff]
        %v372 = vld [vmem:[%s308 + $0x20] sm:$0xff]
        %v373 = vld [vmem:[%s308 + $0x28] sm:$0xff]
        %v374 = vld [vmem:[%s308 + $0x30] sm:$0xff]
        %v375 = vld [vmem:[%s308 + $0x38] sm:$0xff]
        %v376 = vld [vmem:[%s308 + $0x40] sm:$0xff]
        %v377 = vld [vmem:[%s308 + $0x48] sm:$0xff]
        %v378 = vld [vmem:[%s308 + $0x50] sm:$0xff]
        %v379 = vld [vmem:[%s308 + $0x58] sm:$0xff]
        %v380 = vld [vmem:[%s308 + $0x60] sm:$0xff]
        %v381 = vld [vmem:[%s308 + $0x68] sm:$0xff]
        %v382 = vld [vmem:[%s308 + $0x70] sm:$0xff]
        %v383 = vld [vmem:[%s308 + $0x78] sm:$0xff]
        %v384 = vld [vmem:[%s308 + $0x80] sm:$0xff]
        %v385 = vld [vmem:[%s308 + $0x88] sm:$0xff]
        %v386 = vld [vmem:[%s308 + $0x90] sm:$0xff]
        %v387 = vld [vmem:[%s308 + $0x98] sm:$0xff]
        %v388 = vld [vmem:[%s308 + $0xa0] sm:$0xff]
        %v389 = vld [vmem:[%s308 + $0xa8] sm:$0xff]
        %v390 = vld [vmem:[%s308 + $0xb0] sm:$0xff]
        %v391 = vld [vmem:[%s308 + $0xb8] sm:$0xff]
        %v392 = vld [vmem:[%s308 + $0xc0] sm:$0xff]
        %v393 = vld [vmem:[%s308 + $0xc8] sm:$0xff]
        %v394 = vld [vmem:[%s308 + $0xd0] sm:$0xff]
        %v395 = vld [vmem:[%s308 + $0xd8] sm:$0xff]
        %v396 = vld [vmem:[%s308 + $0xe0] sm:$0xff]
        %v397 = vld [vmem:[%s308 + $0xe8] sm:$0xff]
        %v398 = vld [vmem:[%s308 + $0xf0] sm:$0xff]
        %v399 = vld [vmem:[%s308 + $0xf8] sm:$0xff]
        %s400 = smul.u32 %s32, 2
        %s401 = ssub.s32 0, %s400
        %s402 = smul.u32 %s31, %s401
        %s403 = sadd.s32 %s32, %s402
        %s404 = smul.u32 %s403, 8
        %p405 = scmp.eq.s32.totalorder %s31, 0
        // Predicated region
        $region49: #{encoder_rnn_forward.2} parent=31 // pred_check
          %p406 = pneg %p405
        $region50: #{encoder_rnn_forward.2} parent=31 // pred_check_branch
          %408 = sbr.rel (%p406) target = $region52
        $region51: #{encoder_rnn_forward.2} parent=31 // pred_region
          %v409 = vld [vmem:[#allocation2] sm:$0xff]
          %v410 = vld [vmem:[#allocation3] sm:$0xff]
          %v411 = vld [vmem:[%s299] sm:$0xff]
          %v412 = vld [vmem:[%s299 + $0x8] sm:$0xff]
          %v413 = vunpack.c.l.bf16 %v411
          %v414 = vunpack.c.h.bf16 %v411
          %v415 = vunpack.c.l.bf16 %v412
          %v416 = vunpack.c.h.bf16 %v412
          %v417 = vpack.c.bf16 %v409, %v409
          %v450 = vunpack.c.l.b16 %v368
          %v451 = vunpack.c.h.b16 %v368
          %v452 = vunpack.c.l.b16 %v369
          %v453 = vunpack.c.h.b16 %v369
          %v454 = vunpack.c.l.b16 %v370
          %v455 = vunpack.c.h.b16 %v370
          %v456 = vunpack.c.l.b16 %v371
          %v457 = vunpack.c.h.b16 %v371
          %v458 = vunpack.c.l.b16 %v372
          %v459 = vunpack.c.h.b16 %v372
          %v460 = vunpack.c.l.b16 %v373
          %v461 = vunpack.c.h.b16 %v373
          %v462 = vunpack.c.l.b16 %v374
          %v463 = vunpack.c.h.b16 %v374
          %v464 = vunpack.c.l.b16 %v375
          %v465 = vunpack.c.h.b16 %v375
          %v466 = vunpack.c.l.b16 %v376
          %v467 = vunpack.c.h.b16 %v376
          %v468 = vunpack.c.l.b16 %v377
          %v469 = vunpack.c.h.b16 %v377
          %v470 = vunpack.c.l.b16 %v378
          %v471 = vunpack.c.h.b16 %v378
          %v472 = vunpack.c.l.b16 %v379
          %v473 = vunpack.c.h.b16 %v379
          %v474 = vunpack.c.l.b16 %v380
          %v475 = vunpack.c.h.b16 %v380
          %v476 = vunpack.c.l.b16 %v381
          %v477 = vunpack.c.h.b16 %v381
          %v478 = vunpack.c.l.b16 %v382
          %v479 = vunpack.c.h.b16 %v382
          %v480 = vunpack.c.l.b16 %v383
          %v481 = vunpack.c.h.b16 %v383
          %v482 = vunpack.c.l.b16 %v384
          %v483 = vunpack.c.h.b16 %v384
          %v484 = vunpack.c.l.b16 %v385
          %v485 = vunpack.c.h.b16 %v385
          %v486 = vunpack.c.l.b16 %v386
          %v487 = vunpack.c.h.b16 %v386
          %v488 = vunpack.c.l.b16 %v387
          %v489 = vunpack.c.h.b16 %v387
          %v490 = vunpack.c.l.b16 %v388
          %v491 = vunpack.c.h.b16 %v388
          %v492 = vunpack.c.l.b16 %v389
          %v493 = vunpack.c.h.b16 %v389
          %v494 = vunpack.c.l.b16 %v390
          %v495 = vunpack.c.h.b16 %v390
          %v496 = vunpack.c.l.b16 %v391
          %v497 = vunpack.c.h.b16 %v391
          %v498 = vunpack.c.l.b16 %v392
          %v499 = vunpack.c.h.b16 %v392
          %v500 = vunpack.c.l.b16 %v393
          %v501 = vunpack.c.h.b16 %v393
          %v502 = vunpack.c.l.b16 %v394
          %v503 = vunpack.c.h.b16 %v394
          %v504 = vunpack.c.l.b16 %v395
          %v505 = vunpack.c.h.b16 %v395
          %v506 = vunpack.c.l.b16 %v396
          %v507 = vunpack.c.h.b16 %v396
          %v508 = vunpack.c.l.b16 %v397
          %v509 = vunpack.c.h.b16 %v397
          %v510 = vunpack.c.l.b16 %v398
          %v511 = vunpack.c.h.b16 %v398
          %v512 = vunpack.c.l.b16 %v399
          %v513 = vunpack.c.h.b16 %v399
          %v514 = vpack.c.b16 %v454, %v450
          %v515 = vpack.c.b16 %v455, %v451
          %v516 = vpack.c.b16 %v456, %v452
          %v517 = vpack.c.b16 %v457, %v453
          %v518 = vpack.c.b16 %v462, %v458
          %v519 = vpack.c.b16 %v463, %v459
          %v520 = vpack.c.b16 %v464, %v460
          %v521 = vpack.c.b16 %v465, %v461
          %v522 = vpack.c.b16 %v470, %v466
          %v523 = vpack.c.b16 %v471, %v467
          %v524 = vpack.c.b16 %v472, %v468
          %v525 = vpack.c.b16 %v473, %v469
          %v526 = vpack.c.b16 %v478, %v474
          %v527 = vpack.c.b16 %v479, %v475
          %v528 = vpack.c.b16 %v480, %v476
          %v529 = vpack.c.b16 %v481, %v477
          %v530 = vpack.c.b16 %v486, %v482
          %v531 = vpack.c.b16 %v487, %v483
          %v532 = vpack.c.b16 %v488, %v484
          %v533 = vpack.c.b16 %v489, %v485
          %v534 = vpack.c.b16 %v494, %v490
          %v535 = vpack.c.b16 %v495, %v491
          %v536 = vpack.c.b16 %v496, %v492
          %v537 = vpack.c.b16 %v497, %v493
          %v538 = vpack.c.b16 %v502, %v498
          %v539 = vpack.c.b16 %v503, %v499
          %v540 = vpack.c.b16 %v504, %v500
          %v541 = vpack.c.b16 %v505, %v501
          %v542 = vpack.c.b16 %v510, %v506
          %v543 = vpack.c.b16 %v511, %v507
          %v544 = vpack.c.b16 %v512, %v508
          %v545 = vpack.c.b16 %v513, %v509
          %578 = vmatprep.subr.bf16.mxu0 %v515
          %579 = vmatpush1.bf16.msra.mxu0 %v514
          %580 = vmatprep.subr.bf16.mxu0 %v519
          %581 = vmatpush1.bf16.msra.mxu0 %v518
          %582 = vmatprep.subr.bf16.mxu0 %v523
          %583 = vmatpush1.bf16.msra.mxu0 %v522
          %584 = vmatprep.subr.bf16.mxu0 %v527
          %585 = vmatpush1.bf16.msra.mxu0 %v526
          %586 = vmatprep.subr.bf16.mxu0 %v531
          %587 = vmatpush1.bf16.msra.mxu0 %v530
          %588 = vmatprep.subr.bf16.mxu0 %v535
          %589 = vmatpush1.bf16.msra.mxu0 %v534
          %590 = vmatprep.subr.bf16.mxu0 %v539
          %591 = vmatpush1.bf16.msra.mxu0 %v538
          %592 = vmatprep.subr.bf16.mxu0 %v543
          %593 = vmatpush1.bf16.msra.mxu0 %v542
          %594 = vmatprep.subr.bf16.mxu0 0
          %595 = vmatpush1.bf16.msra.mxu0 0
          %596 = vmatprep.subr.bf16.mxu0 0
          %597 = vmatpush1.bf16.msra.mxu0 0
          %598 = vmatprep.subr.bf16.mxu0 0
          %599 = vmatpush1.bf16.msra.mxu0 0
          %600 = vmatprep.subr.bf16.mxu0 0
          %601 = vmatpush1.bf16.msra.mxu0 0
          %602 = vmatprep.subr.bf16.mxu0 0
          %603 = vmatpush1.bf16.msra.mxu0 0
          %604 = vmatprep.subr.bf16.mxu0 0
          %605 = vmatpush1.bf16.msra.mxu0 0
          %606 = vmatprep.subr.bf16.mxu0 0
          %607 = vmatpush1.bf16.msra.mxu0 0
          %608 = vmatprep.subr.bf16.mxu0 0
          %609 = vmatpush1.bf16.msra.mxu0 0
          %610 = vmatprep.mubr.bf16.mxu0 0
          %611 = vmatmul.mubr.bf16.gmra.mrb[0].mxu0 %v417
          %v612 = vpop.f32.mrb[0].mxu0
          %v613 = vadd.f32 0.0, %v612
          %v614 = vpop.f32.mrb[0].mxu0
          %v615 = vadd.f32 0.0, %v614
          %v616 = vpop.f32.mrb[0].mxu0
          %v617 = vpop.f32.mrb[0].mxu0
          %618 = vdwg.mxu0
          %619 = vmatprep.subr.bf16.mxu0 %v517
          %620 = vmatpush1.bf16.msra.mxu0 %v516
          %621 = vmatprep.subr.bf16.mxu0 %v521
          %622 = vmatpush1.bf16.msra.mxu0 %v520
          %623 = vmatprep.subr.bf16.mxu0 %v525
          %624 = vmatpush1.bf16.msra.mxu0 %v524
          %625 = vmatprep.subr.bf16.mxu0 %v529
          %626 = vmatpush1.bf16.msra.mxu0 %v528
          %627 = vmatprep.subr.bf16.mxu0 %v533
          %628 = vmatpush1.bf16.msra.mxu0 %v532
          %629 = vmatprep.subr.bf16.mxu0 %v537
          %630 = vmatpush1.bf16.msra.mxu0 %v536
          %631 = vmatprep.subr.bf16.mxu0 %v541
          %632 = vmatpush1.bf16.msra.mxu0 %v540
          %633 = vmatprep.subr.bf16.mxu0 %v545
          %634 = vmatpush1.bf16.msra.mxu0 %v544
          %635 = vmatprep.subr.bf16.mxu0 0
          %636 = vmatpush1.bf16.msra.mxu0 0
          %637 = vmatprep.subr.bf16.mxu0 0
          %638 = vmatpush1.bf16.msra.mxu0 0
          %639 = vmatprep.subr.bf16.mxu0 0
          %640 = vmatpush1.bf16.msra.mxu0 0
          %641 = vmatprep.subr.bf16.mxu0 0
          %642 = vmatpush1.bf16.msra.mxu0 0
          %643 = vmatprep.subr.bf16.mxu0 0
          %644 = vmatpush1.bf16.msra.mxu0 0
          %645 = vmatprep.subr.bf16.mxu0 0
          %646 = vmatpush1.bf16.msra.mxu0 0
          %647 = vmatprep.subr.bf16.mxu0 0
          %648 = vmatpush1.bf16.msra.mxu0 0
          %649 = vmatprep.subr.bf16.mxu0 0
          %650 = vmatpush1.bf16.msra.mxu0 0
          %651 = vmatprep.mubr.bf16.mxu0 0
          %652 = vmatmul.mubr.bf16.gmra.mrb[0].mxu0 %v417
          %v653 = vpop.f32.mrb[0].mxu0
          %v654 = vadd.f32 0.0, %v653
          %v655 = vpop.f32.mrb[0].mxu0
          %v656 = vadd.f32 0.0, %v655
          %v657 = vpop.f32.mrb[0].mxu0
          %v658 = vpop.f32.mrb[0].mxu0
          %659 = vdwg.mxu0
          %v660 = vadd.f32 %v413, %v613
          %v661 = vadd.f32 %v414, %v615
          %v662 = vadd.f32 %v415, %v654
          %v663 = vadd.f32 %v416, %v656
          %v664 = vmul.f32 %v660, 0.5
          %v665 = vtanh.pop %v664
          %v666 = vadd.f32 %v665, 1.0
          %v667 = vmul.f32 %v666, 0.5
          %v668 = vmul.f32 %v661, 0.5
          %v669 = vtanh.pop %v668
          %v670 = vadd.f32 %v669, 1.0
          %v671 = vmul.f32 %v670, 0.5
          %v672 = vtanh.pop %v662
          %v673 = vmul.f32 %v663, 0.5
          %v674 = vtanh.pop %v673
          %v675 = vadd.f32 %v674, 1.0
          %v676 = vmul.f32 %v675, 0.5
          %v677 = vmul.f32 %v671, %v410
          %v678 = vmul.f32 %v667, %v672
          %v679 = vadd.f32 %v677, %v678
          %v680 = vtanh.pop %v679
          %v681 = vmul.f32 %v676, %v680
          %v682 = vstv %s404
          %vm683 = vcmp.lt.s32.totalorder %v682, %v367
          %v684 = vsel %vm683, 1, 0
          %685 = vset.pattern.permute.xlu0 0
          %686 = vperm.xlu0 %685, %v684
          %v687 = vpop.permute.xlu0 %686
          %vm688 = vcmp.eq.s32.totalorder %v687, 1
          %v689 = vsel %vm688, %v681, 0.0
          %690 = vst [vmem:[%s335] sm:$0xff] %v689
          %v691 = vsel %vm688, %v681, %v409
          %v692 = vsel %vm688, %v679, %v410
          %s693 = scalar_lea.vmem %s299, 16 [#allocation7]
          %v694 = vld [vmem:[%s693] sm:$0xff]
          %v695 = vld [vmem:[%s693 + $0x8] sm:$0xff]
          %v696 = vunpack.c.l.bf16 %v694
          %v697 = vunpack.c.h.bf16 %v694
          %v698 = vunpack.c.l.bf16 %v695
          %v699 = vunpack.c.h.bf16 %v695
          %v700 = vpack.c.bf16 %v691, %v691
          %701 = vmatprep.subr.bf16.mxu0 %v515
          %702 = vmatpush1.bf16.msra.mxu0 %v514
          %703 = vmatprep.subr.bf16.mxu0 %v519
          %704 = vmatpush1.bf16.msra.mxu0 %v518
          %705 = vmatprep.subr.bf16.mxu0 %v523
          %706 = vmatpush1.bf16.msra.mxu0 %v522
          %707 = vmatprep.subr.bf16.mxu0 %v527
          %708 = vmatpush1.bf16.msra.mxu0 %v526
          %709 = vmatprep.subr.bf16.mxu0 %v531
          %710 = vmatpush1.bf16.msra.mxu0 %v530
          %711 = vmatprep.subr.bf16.mxu0 %v535
          %712 = vmatpush1.bf16.msra.mxu0 %v534
          %713 = vmatprep.subr.bf16.mxu0 %v539
          %714 = vmatpush1.bf16.msra.mxu0 %v538
          %715 = vmatprep.subr.bf16.mxu0 %v543
          %716 = vmatpush1.bf16.msra.mxu0 %v542
          %717 = vmatprep.subr.bf16.mxu0 0
          %718 = vmatpush1.bf16.msra.mxu0 0
          %719 = vmatprep.subr.bf16.mxu0 0
          %720 = vmatpush1.bf16.msra.mxu0 0
          %721 = vmatprep.subr.bf16.mxu0 0
          %722 = vmatpush1.bf16.msra.mxu0 0
          %723 = vmatprep.subr.bf16.mxu0 0
          %724 = vmatpush1.bf16.msra.mxu0 0
          %725 = vmatprep.subr.bf16.mxu0 0
          %726 = vmatpush1.bf16.msra.mxu0 0
          %727 = vmatprep.subr.bf16.mxu0 0
          %728 = vmatpush1.bf16.msra.mxu0 0
          %729 = vmatprep.subr.bf16.mxu0 0
          %730 = vmatpush1.bf16.msra.mxu0 0
          %731 = vmatprep.subr.bf16.mxu0 0
          %732 = vmatpush1.bf16.msra.mxu0 0
          %733 = vmatprep.mubr.bf16.mxu0 0
          %734 = vmatmul.mubr.bf16.gmra.mrb[0].mxu0 %v700
          %v735 = vpop.f32.mrb[0].mxu0
          %v736 = vadd.f32 0.0, %v735
          %v737 = vpop.f32.mrb[0].mxu0
          %v738 = vadd.f32 0.0, %v737
          %v739 = vpop.f32.mrb[0].mxu0
          %v740 = vpop.f32.mrb[0].mxu0
          %741 = vdwg.mxu0
          %742 = vmatprep.subr.bf16.mxu0 %v517
          %743 = vmatpush1.bf16.msra.mxu0 %v516
          %744 = vmatprep.subr.bf16.mxu0 %v521
          %745 = vmatpush1.bf16.msra.mxu0 %v520
          %746 = vmatprep.subr.bf16.mxu0 %v525
          %747 = vmatpush1.bf16.msra.mxu0 %v524
          %748 = vmatprep.subr.bf16.mxu0 %v529
          %749 = vmatpush1.bf16.msra.mxu0 %v528
          %750 = vmatprep.subr.bf16.mxu0 %v533
          %751 = vmatpush1.bf16.msra.mxu0 %v532
          %752 = vmatprep.subr.bf16.mxu0 %v537
          %753 = vmatpush1.bf16.msra.mxu0 %v536
          %754 = vmatprep.subr.bf16.mxu0 %v541
          %755 = vmatpush1.bf16.msra.mxu0 %v540
          %756 = vmatprep.subr.bf16.mxu0 %v545
          %757 = vmatpush1.bf16.msra.mxu0 %v544
          %758 = vmatprep.subr.bf16.mxu0 0
          %759 = vmatpush1.bf16.msra.mxu0 0
          %760 = vmatprep.subr.bf16.mxu0 0
          %761 = vmatpush1.bf16.msra.mxu0 0
          %762 = vmatprep.subr.bf16.mxu0 0
          %763 = vmatpush1.bf16.msra.mxu0 0
          %764 = vmatprep.subr.bf16.mxu0 0
          %765 = vmatpush1.bf16.msra.mxu0 0
          %766 = vmatprep.subr.bf16.mxu0 0
          %767 = vmatpush1.bf16.msra.mxu0 0
          %768 = vmatprep.subr.bf16.mxu0 0
          %769 = vmatpush1.bf16.msra.mxu0 0
          %770 = vmatprep.subr.bf16.mxu0 0
          %771 = vmatpush1.bf16.msra.mxu0 0
          %772 = vmatprep.subr.bf16.mxu0 0
          %773 = vmatpush1.bf16.msra.mxu0 0
          %774 = vmatprep.mubr.bf16.mxu0 0
          %775 = vmatmul.mubr.bf16.gmra.mrb[0].mxu0 %v700
          %v776 = vpop.f32.mrb[0].mxu0
          %v777 = vadd.f32 0.0, %v776
          %v778 = vpop.f32.mrb[0].mxu0
          %v779 = vadd.f32 0.0, %v778
          %v780 = vpop.f32.mrb[0].mxu0
          %v781 = vpop.f32.mrb[0].mxu0
          %782 = vdwg.mxu0
          %v783 = vadd.f32 %v696, %v736
          %v784 = vadd.f32 %v697, %v738
          %v785 = vadd.f32 %v698, %v777
          %v786 = vadd.f32 %v699, %v779
          %v787 = vmul.f32 %v783, 0.5
          %v788 = vtanh.pop %v787
          %v789 = vadd.f32 %v788, 1.0
          %v790 = vmul.f32 %v789, 0.5
          %v791 = vmul.f32 %v784, 0.5
          %v792 = vtanh.pop %v791
          %v793 = vadd.f32 %v792, 1.0
          %v794 = vmul.f32 %v793, 0.5
          %v795 = vtanh.pop %v785
          %v796 = vmul.f32 %v786, 0.5
          %v797 = vtanh.pop %v796
          %v798 = vadd.f32 %v797, 1.0
          %v799 = vmul.f32 %v798, 0.5
          %v800 = vmul.f32 %v794, %v692
          %v801 = vmul.f32 %v790, %v795
          %v802 = vadd.f32 %v800, %v801
          %v803 = vtanh.pop %v802
          %v804 = vmul.f32 %v799, %v803
          %s805 = sadd.s32 %s404, 1
          %v806 = vstv %s805
          %vm807 = vcmp.lt.s32.totalorder %v806, %v367
          %v808 = vsel %vm807, 1, 0
          %809 = vset.pattern.permute.xlu0 0
          %810 = vperm.xlu0 %809, %v808
          %v811 = vpop.permute.xlu0 %810
          %vm812 = vcmp.eq.s32.totalorder %v811, 1
          %v813 = vsel %vm812, %v804, 0.0
          %s814 = scalar_lea.vmem %s335, 8 [#allocation10]
          %815 = vst [vmem:[%s814] sm:$0xff] %v813
          %v816 = vsel %vm812, %v804, %v691
          %v817 = vsel %vm812, %v802, %v692
          %s818 = scalar_lea.vmem %s299, 32 [#allocation7]
          %v819 = vld [vmem:[%s818] sm:$0xff]
          %v820 = vld [vmem:[%s818 + $0x8] sm:$0xff]
          %v821 = vunpack.c.l.bf16 %v819
          %v822 = vunpack.c.h.bf16 %v819
          %v823 = vunpack.c.l.bf16 %v820
          %v824 = vunpack.c.h.bf16 %v820
          %v825 = vpack.c.bf16 %v816, %v816
          %826 = vmatprep.subr.bf16.mxu0 %v515
          %827 = vmatpush1.bf16.msra.mxu0 %v514
          %828 = vmatprep.subr.bf16.mxu0 %v519
          %829 = vmatpush1.bf16.msra.mxu0 %v518
          %830 = vmatprep.subr.bf16.mxu0 %v523
          %831 = vmatpush1.bf16.msra.mxu0 %v522
          %832 = vmatprep.subr.bf16.mxu0 %v527
          %833 = vmatpush1.bf16.msra.mxu0 %v526
          %834 = vmatprep.subr.bf16.mxu0 %v531
          %835 = vmatpush1.bf16.msra.mxu0 %v530
          %836 = vmatprep.subr.bf16.mxu0 %v535
          %837 = vmatpush1.bf16.msra.mxu0 %v534
          %838 = vmatprep.subr.bf16.mxu0 %v539
          %839 = vmatpush1.bf16.msra.mxu0 %v538
          %840 = vmatprep.subr.bf16.mxu0 %v543
          %841 = vmatpush1.bf16.msra.mxu0 %v542
          %842 = vmatprep.subr.bf16.mxu0 0
          %843 = vmatpush1.bf16.msra.mxu0 0
          %844 = vmatprep.subr.bf16.mxu0 0
          %845 = vmatpush1.bf16.msra.mxu0 0
          %846 = vmatprep.subr.bf16.mxu0 0
          %847 = vmatpush1.bf16.msra.mxu0 0
          %848 = vmatprep.subr.bf16.mxu0 0
          %849 = vmatpush1.bf16.msra.mxu0 0
          %850 = vmatprep.subr.bf16.mxu0 0
          %851 = vmatpush1.bf16.msra.mxu0 0
          %852 = vmatprep.subr.bf16.mxu0 0
          %853 = vmatpush1.bf16.msra.mxu0 0
          %854 = vmatprep.subr.bf16.mxu0 0
          %855 = vmatpush1.bf16.msra.mxu0 0
          %856 = vmatprep.subr.bf16.mxu0 0
          %857 = vmatpush1.bf16.msra.mxu0 0
          %858 = vmatprep.mubr.bf16.mxu0 0
          %859 = vmatmul.mubr.bf16.gmra.mrb[0].mxu0 %v825
          %v860 = vpop.f32.mrb[0].mxu0
          %v861 = vadd.f32 0.0, %v860
          %v862 = vpop.f32.mrb[0].mxu0
          %v863 = vadd.f32 0.0, %v862
          %v864 = vpop.f32.mrb[0].mxu0
          %v865 = vpop.f32.mrb[0].mxu0
          %866 = vdwg.mxu0
          %867 = vmatprep.subr.bf16.mxu0 %v517
          %868 = vmatpush1.bf16.msra.mxu0 %v516
          %869 = vmatprep.subr.bf16.mxu0 %v521
          %870 = vmatpush1.bf16.msra.mxu0 %v520
          %871 = vmatprep.subr.bf16.mxu0 %v525
          %872 = vmatpush1.bf16.msra.mxu0 %v524
          %873 = vmatprep.subr.bf16.mxu0 %v529
          %874 = vmatpush1.bf16.msra.mxu0 %v528
          %875 = vmatprep.subr.bf16.mxu0 %v533
          %876 = vmatpush1.bf16.msra.mxu0 %v532
          %877 = vmatprep.subr.bf16.mxu0 %v537
          %878 = vmatpush1.bf16.msra.mxu0 %v536
          %879 = vmatprep.subr.bf16.mxu0 %v541
          %880 = vmatpush1.bf16.msra.mxu0 %v540
          %881 = vmatprep.subr.bf16.mxu0 %v545
          %882 = vmatpush1.bf16.msra.mxu0 %v544
          %883 = vmatprep.subr.bf16.mxu0 0
          %884 = vmatpush1.bf16.msra.mxu0 0
          %885 = vmatprep.subr.bf16.mxu0 0
          %886 = vmatpush1.bf16.msra.mxu0 0
          %887 = vmatprep.subr.bf16.mxu0 0
          %888 = vmatpush1.bf16.msra.mxu0 0
          %889 = vmatprep.subr.bf16.mxu0 0
          %890 = vmatpush1.bf16.msra.mxu0 0
          %891 = vmatprep.subr.bf16.mxu0 0
          %892 = vmatpush1.bf16.msra.mxu0 0
          %893 = vmatprep.subr.bf16.mxu0 0
          %894 = vmatpush1.bf16.msra.mxu0 0
          %895 = vmatprep.subr.bf16.mxu0 0
          %896 = vmatpush1.bf16.msra.mxu0 0
          %897 = vmatprep.subr.bf16.mxu0 0
          %898 = vmatpush1.bf16.msra.mxu0 0
          %899 = vmatprep.mubr.bf16.mxu0 0
          %900 = vmatmul.mubr.bf16.gmra.mrb[0].mxu0 %v825
          %v901 = vpop.f32.mrb[0].mxu0
          %v902 = vadd.f32 0.0, %v901
          %v903 = vpop.f32.mrb[0].mxu0
          %v904 = vadd.f32 0.0, %v903
          %v905 = vpop.f32.mrb[0].mxu0
          %v906 = vpop.f32.mrb[0].mxu0
          %907 = vdwg.mxu0
          %v908 = vadd.f32 %v821, %v861
          %v909 = vadd.f32 %v822, %v863
          %v910 = vadd.f32 %v823, %v902
          %v911 = vadd.f32 %v824, %v904
          %v912 = vmul.f32 %v908, 0.5
          %v913 = vtanh.pop %v912
          %v914 = vadd.f32 %v913, 1.0
          %v915 = vmul.f32 %v914, 0.5
          %v916 = vmul.f32 %v909, 0.5
          %v917 = vtanh.pop %v916
          %v918 = vadd.f32 %v917, 1.0
          %v919 = vmul.f32 %v918, 0.5
          %v920 = vtanh.pop %v910
          %v921 = vmul.f32 %v911, 0.5
          %v922 = vtanh.pop %v921
          %v923 = vadd.f32 %v922, 1.0
          %v924 = vmul.f32 %v923, 0.5
          %v925 = vmul.f32 %v919, %v817
          %v926 = vmul.f32 %v915, %v920
          %v927 = vadd.f32 %v925, %v926
          %v928 = vtanh.pop %v927
          %v929 = vmul.f32 %v924, %v928
          %s930 = sadd.s32 %s404, 2
          %v931 = vstv %s930
          %vm932 = vcmp.lt.s32.totalorder %v931, %v367
          %v933 = vsel %vm932, 1, 0
          %934 = vset.pattern.permute.xlu0 0
          %935 = vperm.xlu0 %934, %v933
          %v936 = vpop.permute.xlu0 %935
          %vm937 = vcmp.eq.s32.totalorder %v936, 1
          %v938 = vsel %vm937, %v929, 0.0
          %s939 = scalar_lea.vmem %s335, 16 [#allocation10]
          %940 = vst [vmem:[%s939] sm:$0xff] %v938
          %v941 = vsel %vm937, %v929, %v816
          %v942 = vsel %vm937, %v927, %v817
          %s943 = scalar_lea.vmem %s299, 48 [#allocation7]
          %v944 = vld [vmem:[%s943] sm:$0xff]
          %v945 = vld [vmem:[%s943 + $0x8] sm:$0xff]
          %v946 = vunpack.c.l.bf16 %v944
          %v947 = vunpack.c.h.bf16 %v944
          %v948 = vunpack.c.l.bf16 %v945
          %v949 = vunpack.c.h.bf16 %v945
          %v950 = vpack.c.bf16 %v941, %v941
          %951 = vmatprep.subr.bf16.mxu0 %v515
          %952 = vmatpush1.bf16.msra.mxu0 %v514
          %953 = vmatprep.subr.bf16.mxu0 %v519
          %954 = vmatpush1.bf16.msra.mxu0 %v518
          %955 = vmatprep.subr.bf16.mxu0 %v523
          %956 = vmatpush1.bf16.msra.mxu0 %v522
          %957 = vmatprep.subr.bf16.mxu0 %v527
          %958 = vmatpush1.bf16.msra.mxu0 %v526
          %959 = vmatprep.subr.bf16.mxu0 %v531
          %960 = vmatpush1.bf16.msra.mxu0 %v530
          %961 = vmatprep.subr.bf16.mxu0 %v535
          %962 = vmatpush1.bf16.msra.mxu0 %v534
          %963 = vmatprep.subr.bf16.mxu0 %v539
          %964 = vmatpush1.bf16.msra.mxu0 %v538
          %965 = vmatprep.subr.bf16.mxu0 %v543
          %966 = vmatpush1.bf16.msra.mxu0 %v542
          %967 = vmatprep.subr.bf16.mxu0 0
          %968 = vmatpush1.bf16.msra.mxu0 0
          %969 = vmatprep.subr.bf16.mxu0 0
          %970 = vmatpush1.bf16.msra.mxu0 0
          %971 = vmatprep.subr.bf16.mxu0 0
          %972 = vmatpush1.bf16.msra.mxu0 0
          %973 = vmatprep.subr.bf16.mxu0 0
          %974 = vmatpush1.bf16.msra.mxu0 0
          %975 = vmatprep.subr.bf16.mxu0 0
          %976 = vmatpush1.bf16.msra.mxu0 0
          %977 = vmatprep.subr.bf16.mxu0 0
          %978 = vmatpush1.bf16.msra.mxu0 0
          %979 = vmatprep.subr.bf16.mxu0 0
          %980 = vmatpush1.bf16.msra.mxu0 0
          %981 = vmatprep.subr.bf16.mxu0 0
          %982 = vmatpush1.bf16.msra.mxu0 0
          %983 = vmatprep.mubr.bf16.mxu0 0
          %984 = vmatmul.mubr.bf16.gmra.mrb[0].mxu0 %v950
          %v985 = vpop.f32.mrb[0].mxu0
          %v986 = vadd.f32 0.0, %v985
          %v987 = vpop.f32.mrb[0].mxu0
          %v988 = vadd.f32 0.0, %v987
          %v989 = vpop.f32.mrb[0].mxu0
          %v990 = vpop.f32.mrb[0].mxu0
          %991 = vdwg.mxu0
          %992 = vmatprep.subr.bf16.mxu0 %v517
          %993 = vmatpush1.bf16.msra.mxu0 %v516
          %994 = vmatprep.subr.bf16.mxu0 %v521
          %995 = vmatpush1.bf16.msra.mxu0 %v520
          %996 = vmatprep.subr.bf16.mxu0 %v525
          %997 = vmatpush1.bf16.msra.mxu0 %v524
          %998 = vmatprep.subr.bf16.mxu0 %v529
          %999 = vmatpush1.bf16.msra.mxu0 %v528
          %1000 = vmatprep.subr.bf16.mxu0 %v533
          %1001 = vmatpush1.bf16.msra.mxu0 %v532
          %1002 = vmatprep.subr.bf16.mxu0 %v537
          %1003 = vmatpush1.bf16.msra.mxu0 %v536
          %1004 = vmatprep.subr.bf16.mxu0 %v541
          %1005 = vmatpush1.bf16.msra.mxu0 %v540
          %1006 = vmatprep.subr.bf16.mxu0 %v545
          %1007 = vmatpush1.bf16.msra.mxu0 %v544
          %1008 = vmatprep.subr.bf16.mxu0 0
          %1009 = vmatpush1.bf16.msra.mxu0 0
          %1010 = vmatprep.subr.bf16.mxu0 0
          %1011 = vmatpush1.bf16.msra.mxu0 0
          %1012 = vmatprep.subr.bf16.mxu0 0
          %1013 = vmatpush1.bf16.msra.mxu0 0
          %1014 = vmatprep.subr.bf16.mxu0 0
          %1015 = vmatpush1.bf16.msra.mxu0 0
          %1016 = vmatprep.subr.bf16.mxu0 0
          %1017 = vmatpush1.bf16.msra.mxu0 0
          %1018 = vmatprep.subr.bf16.mxu0 0
          %1019 = vmatpush1.bf16.msra.mxu0 0
          %1020 = vmatprep.subr.bf16.mxu0 0
          %1021 = vmatpush1.bf16.msra.mxu0 0
          %1022 = vmatprep.subr.bf16.mxu0 0
          %1023 = vmatpush1.bf16.msra.mxu0 0
          %1024 = vmatprep.mubr.bf16.mxu0 0
          %1025 = vmatmul.mubr.bf16.gmra.mrb[0].mxu0 %v950
          %v1026 = vpop.f32.mrb[0].mxu0
          %v1027 = vadd.f32 0.0, %v1026
          %v1028 = vpop.f32.mrb[0].mxu0
          %v1029 = vadd.f32 0.0, %v1028
          %v1030 = vpop.f32.mrb[0].mxu0
          %v1031 = vpop.f32.mrb[0].mxu0
          %1032 = vdwg.mxu0
          %v1033 = vadd.f32 %v946, %v986
          %v1034 = vadd.f32 %v947, %v988
          %v1035 = vadd.f32 %v948, %v1027
          %v1036 = vadd.f32 %v949, %v1029
          %v1037 = vmul.f32 %v1033, 0.5
          %v1038 = vtanh.pop %v1037
          %v1039 = vadd.f32 %v1038, 1.0
          %v1040 = vmul.f32 %v1039, 0.5
          %v1041 = vmul.f32 %v1034, 0.5
          %v1042 = vtanh.pop %v1041
          %v1043 = vadd.f32 %v1042, 1.0
          %v1044 = vmul.f32 %v1043, 0.5
          %v1045 = vtanh.pop %v1035
          %v1046 = vmul.f32 %v1036, 0.5
          %v1047 = vtanh.pop %v1046
          %v1048 = vadd.f32 %v1047, 1.0
          %v1049 = vmul.f32 %v1048, 0.5
          %v1050 = vmul.f32 %v1044, %v942
          %v1051 = vmul.f32 %v1040, %v1045
          %v1052 = vadd.f32 %v1050, %v1051
          %v1053 = vtanh.pop %v1052
          %v1054 = vmul.f32 %v1049, %v1053
          %s1055 = sadd.s32 %s404, 3
          %v1056 = vstv %s1055
          %vm1057 = vcmp.lt.s32.totalorder %v1056, %v367
          %v1058 = vsel %vm1057, 1, 0
          %1059 = vset.pattern.permute.xlu0 0
          %1060 = vperm.xlu0 %1059, %v1058
          %v1061 = vpop.permute.xlu0 %1060
          %vm1062 = vcmp.eq.s32.totalorder %v1061, 1
          %v1063 = vsel %vm1062, %v1054, 0.0
          %s1064 = scalar_lea.vmem %s335, 24 [#allocation10]
          %1065 = vst [vmem:[%s1064] sm:$0xff] %v1063
          %v1066 = vsel %vm1062, %v1054, %v941
          %v1067 = vsel %vm1062, %v1052, %v942
          %s1068 = scalar_lea.vmem %s299, 64 [#allocation7]
          %v1069 = vld [vmem:[%s1068] sm:$0xff]
          %v1070 = vld [vmem:[%s1068 + $0x8] sm:$0xff]
          %v1071 = vunpack.c.l.bf16 %v1069
          %v1072 = vunpack.c.h.bf16 %v1069
          %v1073 = vunpack.c.l.bf16 %v1070
          %v1074 = vunpack.c.h.bf16 %v1070
          %v1075 = vpack.c.bf16 %v1066, %v1066
          %1076 = vmatprep.subr.bf16.mxu0 %v515
          %1077 = vmatpush1.bf16.msra.mxu0 %v514
          %1078 = vmatprep.subr.bf16.mxu0 %v519
          %1079 = vmatpush1.bf16.msra.mxu0 %v518
          %1080 = vmatprep.subr.bf16.mxu0 %v523
          %1081 = vmatpush1.bf16.msra.mxu0 %v522
          %1082 = vmatprep.subr.bf16.mxu0 %v527
          %1083 = vmatpush1.bf16.msra.mxu0 %v526
          %1084 = vmatprep.subr.bf16.mxu0 %v531
          %1085 = vmatpush1.bf16.msra.mxu0 %v530
          %1086 = vmatprep.subr.bf16.mxu0 %v535
          %1087 = vmatpush1.bf16.msra.mxu0 %v534
          %1088 = vmatprep.subr.bf16.mxu0 %v539
          %1089 = vmatpush1.bf16.msra.mxu0 %v538
          %1090 = vmatprep.subr.bf16.mxu0 %v543
          %1091 = vmatpush1.bf16.msra.mxu0 %v542
          %1092 = vmatprep.subr.bf16.mxu0 0
          %1093 = vmatpush1.bf16.msra.mxu0 0
          %1094 = vmatprep.subr.bf16.mxu0 0
          %1095 = vmatpush1.bf16.msra.mxu0 0
          %1096 = vmatprep.subr.bf16.mxu0 0
          %1097 = vmatpush1.bf16.msra.mxu0 0
          %1098 = vmatprep.subr.bf16.mxu0 0
          %1099 = vmatpush1.bf16.msra.mxu0 0
          %1100 = vmatprep.subr.bf16.mxu0 0
          %1101 = vmatpush1.bf16.msra.mxu0 0
          %1102 = vmatprep.subr.bf16.mxu0 0
          %1103 = vmatpush1.bf16.msra.mxu0 0
          %1104 = vmatprep.subr.bf16.mxu0 0
          %1105 = vmatpush1.bf16.msra.mxu0 0
          %1106 = vmatprep.subr.bf16.mxu0 0
          %1107 = vmatpush1.bf16.msra.mxu0 0
          %1108 = vmatprep.mubr.bf16.mxu0 0
          %1109 = vmatmul.mubr.bf16.gmra.mrb[0].mxu0 %v1075
          %v1110 = vpop.f32.mrb[0].mxu0
          %v1111 = vadd.f32 0.0, %v1110
          %v1112 = vpop.f32.mrb[0].mxu0
          %v1113 = vadd.f32 0.0, %v1112
          %v1114 = vpop.f32.mrb[0].mxu0
          %v1115 = vpop.f32.mrb[0].mxu0
          %1116 = vdwg.mxu0
          %1117 = vmatprep.subr.bf16.mxu0 %v517
          %1118 = vmatpush1.bf16.msra.mxu0 %v516
          %1119 = vmatprep.subr.bf16.mxu0 %v521
          %1120 = vmatpush1.bf16.msra.mxu0 %v520
          %1121 = vmatprep.subr.bf16.mxu0 %v525
          %1122 = vmatpush1.bf16.msra.mxu0 %v524
          %1123 = vmatprep.subr.bf16.mxu0 %v529
          %1124 = vmatpush1.bf16.msra.mxu0 %v528
          %1125 = vmatprep.subr.bf16.mxu0 %v533
          %1126 = vmatpush1.bf16.msra.mxu0 %v532
          %1127 = vmatprep.subr.bf16.mxu0 %v537
          %1128 = vmatpush1.bf16.msra.mxu0 %v536
          %1129 = vmatprep.subr.bf16.mxu0 %v541
          %1130 = vmatpush1.bf16.msra.mxu0 %v540
          %1131 = vmatprep.subr.bf16.mxu0 %v545
          %1132 = vmatpush1.bf16.msra.mxu0 %v544
          %1133 = vmatprep.subr.bf16.mxu0 0
          %1134 = vmatpush1.bf16.msra.mxu0 0
          %1135 = vmatprep.subr.bf16.mxu0 0
          %1136 = vmatpush1.bf16.msra.mxu0 0
          %1137 = vmatprep.subr.bf16.mxu0 0
          %1138 = vmatpush1.bf16.msra.mxu0 0
          %1139 = vmatprep.subr.bf16.mxu0 0
          %1140 = vmatpush1.bf16.msra.mxu0 0
          %1141 = vmatprep.subr.bf16.mxu0 0
          %1142 = vmatpush1.bf16.msra.mxu0 0
          %1143 = vmatprep.subr.bf16.mxu0 0
          %1144 = vmatpush1.bf16.msra.mxu0 0
          %1145 = vmatprep.subr.bf16.mxu0 0
          %1146 = vmatpush1.bf16.msra.mxu0 0
          %1147 = vmatprep.subr.bf16.mxu0 0
          %1148 = vmatpush1.bf16.msra.mxu0 0
          %1149 = vmatprep.mubr.bf16.mxu0 0
          %1150 = vmatmul.mubr.bf16.gmra.mrb[0].mxu0 %v1075
          %v1151 = vpop.f32.mrb[0].mxu0
          %v1152 = vadd.f32 0.0, %v1151
          %v1153 = vpop.f32.mrb[0].mxu0
          %v1154 = vadd.f32 0.0, %v1153
          %v1155 = vpop.f32.mrb[0].mxu0
          %v1156 = vpop.f32.mrb[0].mxu0
          %1157 = vdwg.mxu0
          %v1158 = vadd.f32 %v1071, %v1111
          %v1159 = vadd.f32 %v1072, %v1113
          %v1160 = vadd.f32 %v1073, %v1152
          %v1161 = vadd.f32 %v1074, %v1154
          %v1162 = vmul.f32 %v1158, 0.5
          %v1163 = vtanh.pop %v1162
          %v1164 = vadd.f32 %v1163, 1.0
          %v1165 = vmul.f32 %v1164, 0.5
          %v1166 = vmul.f32 %v1159, 0.5
          %v1167 = vtanh.pop %v1166
          %v1168 = vadd.f32 %v1167, 1.0
          %v1169 = vmul.f32 %v1168, 0.5
          %v1170 = vtanh.pop %v1160
          %v1171 = vmul.f32 %v1161, 0.5
          %v1172 = vtanh.pop %v1171
          %v1173 = vadd.f32 %v1172, 1.0
          %v1174 = vmul.f32 %v1173, 0.5
          %v1175 = vmul.f32 %v1169, %v1067
          %v1176 = vmul.f32 %v1165, %v1170
          %v1177 = vadd.f32 %v1175, %v1176
          %v1178 = vtanh.pop %v1177
          %v1179 = vmul.f32 %v1174, %v1178
          %s1180 = sadd.s32 %s404, 4
          %v1181 = vstv %s1180
          %vm1182 = vcmp.lt.s32.totalorder %v1181, %v367
          %v1183 = vsel %vm1182, 1, 0
          %1184 = vset.pattern.permute.xlu0 0
          %1185 = vperm.xlu0 %1184, %v1183
          %v1186 = vpop.permute.xlu0 %1185
          %vm1187 = vcmp.eq.s32.totalorder %v1186, 1
          %v1188 = vsel %vm1187, %v1179, 0.0
          %s1189 = scalar_lea.vmem %s335, 32 [#allocation10]
          %1190 = vst [vmem:[%s1189] sm:$0xff] %v1188
          %v1191 = vsel %vm1187, %v1179, %v1066
          %v1192 = vsel %vm1187, %v1177, %v1067
          %s1193 = scalar_lea.vmem %s299, 80 [#allocation7]
          %v1194 = vld [vmem:[%s1193] sm:$0xff]
          %v1195 = vld [vmem:[%s1193 + $0x8] sm:$0xff]
          %v1196 = vunpack.c.l.bf16 %v1194
          %v1197 = vunpack.c.h.bf16 %v1194
          %v1198 = vunpack.c.l.bf16 %v1195
          %v1199 = vunpack.c.h.bf16 %v1195
          %v1200 = vpack.c.bf16 %v1191, %v1191
          %1201 = vmatprep.subr.bf16.mxu0 %v515
          %1202 = vmatpush1.bf16.msra.mxu0 %v514
          %1203 = vmatprep.subr.bf16.mxu0 %v519
          %1204 = vmatpush1.bf16.msra.mxu0 %v518
          %1205 = vmatprep.subr.bf16.mxu0 %v523
          %1206 = vmatpush1.bf16.msra.mxu0 %v522
          %1207 = vmatprep.subr.bf16.mxu0 %v527
          %1208 = vmatpush1.bf16.msra.mxu0 %v526
          %1209 = vmatprep.subr.bf16.mxu0 %v531
          %1210 = vmatpush1.bf16.msra.mxu0 %v530
          %1211 = vmatprep.subr.bf16.mxu0 %v535
          %1212 = vmatpush1.bf16.msra.mxu0 %v534
          %1213 = vmatprep.subr.bf16.mxu0 %v539
          %1214 = vmatpush1.bf16.msra.mxu0 %v538
          %1215 = vmatprep.subr.bf16.mxu0 %v543
          %1216 = vmatpush1.bf16.msra.mxu0 %v542
          %1217 = vmatprep.subr.bf16.mxu0 0
          %1218 = vmatpush1.bf16.msra.mxu0 0
          %1219 = vmatprep.subr.bf16.mxu0 0
          %1220 = vmatpush1.bf16.msra.mxu0 0
          %1221 = vmatprep.subr.bf16.mxu0 0
          %1222 = vmatpush1.bf16.msra.mxu0 0
          %1223 = vmatprep.subr.bf16.mxu0 0
          %1224 = vmatpush1.bf16.msra.mxu0 0
          %1225 = vmatprep.subr.bf16.mxu0 0
          %1226 = vmatpush1.bf16.msra.mxu0 0
          %1227 = vmatprep.subr.bf16.mxu0 0
          %1228 = vmatpush1.bf16.msra.mxu0 0
          %1229 = vmatprep.subr.bf16.mxu0 0
          %1230 = vmatpush1.bf16.msra.mxu0 0
          %1231 = vmatprep.subr.bf16.mxu0 0
          %1232 = vmatpush1.bf16.msra.mxu0 0
          %1233 = vmatprep.mubr.bf16.mxu0 0
          %1234 = vmatmul.mubr.bf16.gmra.mrb[0].mxu0 %v1200
          %v1235 = vpop.f32.mrb[0].mxu0
          %v1236 = vadd.f32 0.0, %v1235
          %v1237 = vpop.f32.mrb[0].mxu0
          %v1238 = vadd.f32 0.0, %v1237
          %v1239 = vpop.f32.mrb[0].mxu0
          %v1240 = vpop.f32.mrb[0].mxu0
          %1241 = vdwg.mxu0
          %1242 = vmatprep.subr.bf16.mxu0 %v517
          %1243 = vmatpush1.bf16.msra.mxu0 %v516
          %1244 = vmatprep.subr.bf16.mxu0 %v521
          %1245 = vmatpush1.bf16.msra.mxu0 %v520
          %1246 = vmatprep.subr.bf16.mxu0 %v525
          %1247 = vmatpush1.bf16.msra.mxu0 %v524
          %1248 = vmatprep.subr.bf16.mxu0 %v529
          %1249 = vmatpush1.bf16.msra.mxu0 %v528
          %1250 = vmatprep.subr.bf16.mxu0 %v533
          %1251 = vmatpush1.bf16.msra.mxu0 %v532
          %1252 = vmatprep.subr.bf16.mxu0 %v537
          %1253 = vmatpush1.bf16.msra.mxu0 %v536
          %1254 = vmatprep.subr.bf16.mxu0 %v541
          %1255 = vmatpush1.bf16.msra.mxu0 %v540
          %1256 = vmatprep.subr.bf16.mxu0 %v545
          %1257 = vmatpush1.bf16.msra.mxu0 %v544
          %1258 = vmatprep.subr.bf16.mxu0 0
          %1259 = vmatpush1.bf16.msra.mxu0 0
          %1260 = vmatprep.subr.bf16.mxu0 0
          %1261 = vmatpush1.bf16.msra.mxu0 0
          %1262 = vmatprep.subr.bf16.mxu0 0
          %1263 = vmatpush1.bf16.msra.mxu0 0
          %1264 = vmatprep.subr.bf16.mxu0 0
          %1265 = vmatpush1.bf16.msra.mxu0 0
          %1266 = vmatprep.subr.bf16.mxu0 0
          %1267 = vmatpush1.bf16.msra.mxu0 0
          %1268 = vmatprep.subr.bf16.mxu0 0
          %1269 = vmatpush1.bf16.msra.mxu0 0
          %1270 = vmatprep.subr.bf16.mxu0 0
          %1271 = vmatpush1.bf16.msra.mxu0 0
          %1272 = vmatprep.subr.bf16.mxu0 0
          %1273 = vmatpush1.bf16.msra.mxu0 0
          %1274 = vmatprep.mubr.bf16.mxu0 0
          %1275 = vmatmul.mubr.bf16.gmra.mrb[0].mxu0 %v1200
          %v1276 = vpop.f32.mrb[0].mxu0
          %v1277 = vadd.f32 0.0, %v1276
          %v1278 = vpop.f32.mrb[0].mxu0
          %v1279 = vadd.f32 0.0, %v1278
          %v1280 = vpop.f32.mrb[0].mxu0
          %v1281 = vpop.f32.mrb[0].mxu0
          %1282 = vdwg.mxu0
          %v1283 = vadd.f32 %v1196, %v1236
          %v1284 = vadd.f32 %v1197, %v1238
          %v1285 = vadd.f32 %v1198, %v1277
          %v1286 = vadd.f32 %v1199, %v1279
          %v1287 = vmul.f32 %v1283, 0.5
          %v1288 = vtanh.pop %v1287
          %v1289 = vadd.f32 %v1288, 1.0
          %v1290 = vmul.f32 %v1289, 0.5
          %v1291 = vmul.f32 %v1284, 0.5
          %v1292 = vtanh.pop %v1291
          %v1293 = vadd.f32 %v1292, 1.0
          %v1294 = vmul.f32 %v1293, 0.5
          %v1295 = vtanh.pop %v1285
          %v1296 = vmul.f32 %v1286, 0.5
          %v1297 = vtanh.pop %v1296
          %v1298 = vadd.f32 %v1297, 1.0
          %v1299 = vmul.f32 %v1298, 0.5
          %v1300 = vmul.f32 %v1294, %v1192
          %v1301 = vmul.f32 %v1290, %v1295
          %v1302 = vadd.f32 %v1300, %v1301
          %v1303 = vtanh.pop %v1302
          %v1304 = vmul.f32 %v1299, %v1303
          %s1305 = sadd.s32 %s404, 5
          %v1306 = vstv %s1305
          %vm1307 = vcmp.lt.s32.totalorder %v1306, %v367
          %v1308 = vsel %vm1307, 1, 0
          %1309 = vset.pattern.permute.xlu0 0
          %1310 = vperm.xlu0 %1309, %v1308
          %v1311 = vpop.permute.xlu0 %1310
          %vm1312 = vcmp.eq.s32.totalorder %v1311, 1
          %v1313 = vsel %vm1312, %v1304, 0.0
          %s1314 = scalar_lea.vmem %s335, 40 [#allocation10]
          %1315 = vst [vmem:[%s1314] sm:$0xff] %v1313
          %v1316 = vsel %vm1312, %v1304, %v1191
          %v1317 = vsel %vm1312, %v1302, %v1192
          %s1318 = scalar_lea.vmem %s299, 96 [#allocation7]
          %v1319 = vld [vmem:[%s1318] sm:$0xff]
          %v1320 = vld [vmem:[%s1318 + $0x8] sm:$0xff]
          %v1321 = vunpack.c.l.bf16 %v1319
          %v1322 = vunpack.c.h.bf16 %v1319
          %v1323 = vunpack.c.l.bf16 %v1320
          %v1324 = vunpack.c.h.bf16 %v1320
          %v1325 = vpack.c.bf16 %v1316, %v1316
          %1326 = vmatprep.subr.bf16.mxu0 %v515
          %1327 = vmatpush1.bf16.msra.mxu0 %v514
          %1328 = vmatprep.subr.bf16.mxu0 %v519
          %1329 = vmatpush1.bf16.msra.mxu0 %v518
          %1330 = vmatprep.subr.bf16.mxu0 %v523
          %1331 = vmatpush1.bf16.msra.mxu0 %v522
          %1332 = vmatprep.subr.bf16.mxu0 %v527
          %1333 = vmatpush1.bf16.msra.mxu0 %v526
          %1334 = vmatprep.subr.bf16.mxu0 %v531
          %1335 = vmatpush1.bf16.msra.mxu0 %v530
          %1336 = vmatprep.subr.bf16.mxu0 %v535
          %1337 = vmatpush1.bf16.msra.mxu0 %v534
          %1338 = vmatprep.subr.bf16.mxu0 %v539
          %1339 = vmatpush1.bf16.msra.mxu0 %v538
          %1340 = vmatprep.subr.bf16.mxu0 %v543
          %1341 = vmatpush1.bf16.msra.mxu0 %v542
          %1342 = vmatprep.subr.bf16.mxu0 0
          %1343 = vmatpush1.bf16.msra.mxu0 0
          %1344 = vmatprep.subr.bf16.mxu0 0
          %1345 = vmatpush1.bf16.msra.mxu0 0
          %1346 = vmatprep.subr.bf16.mxu0 0
          %1347 = vmatpush1.bf16.msra.mxu0 0
          %1348 = vmatprep.subr.bf16.mxu0 0
          %1349 = vmatpush1.bf16.msra.mxu0 0
          %1350 = vmatprep.subr.bf16.mxu0 0
          %1351 = vmatpush1.bf16.msra.mxu0 0
          %1352 = vmatprep.subr.bf16.mxu0 0
          %1353 = vmatpush1.bf16.msra.mxu0 0
          %1354 = vmatprep.subr.bf16.mxu0 0
          %1355 = vmatpush1.bf16.msra.mxu0 0
          %1356 = vmatprep.subr.bf16.mxu0 0
          %1357 = vmatpush1.bf16.msra.mxu0 0
          %1358 = vmatprep.mubr.bf16.mxu0 0
          %1359 = vmatmul.mubr.bf16.gmra.mrb[0].mxu0 %v1325
          %v1360 = vpop.f32.mrb[0].mxu0
          %v1361 = vadd.f32 0.0, %v1360
          %v1362 = vpop.f32.mrb[0].mxu0
          %v1363 = vadd.f32 0.0, %v1362
          %v1364 = vpop.f32.mrb[0].mxu0
          %v1365 = vpop.f32.mrb[0].mxu0
          %1366 = vdwg.mxu0
          %1367 = vmatprep.subr.bf16.mxu0 %v517
          %1368 = vmatpush1.bf16.msra.mxu0 %v516
          %1369 = vmatprep.subr.bf16.mxu0 %v521
          %1370 = vmatpush1.bf16.msra.mxu0 %v520
          %1371 = vmatprep.subr.bf16.mxu0 %v525
          %1372 = vmatpush1.bf16.msra.mxu0 %v524
          %1373 = vmatprep.subr.bf16.mxu0 %v529
          %1374 = vmatpush1.bf16.msra.mxu0 %v528
          %1375 = vmatprep.subr.bf16.mxu0 %v533
          %1376 = vmatpush1.bf16.msra.mxu0 %v532
          %1377 = vmatprep.subr.bf16.mxu0 %v537
          %1378 = vmatpush1.bf16.msra.mxu0 %v536
          %1379 = vmatprep.subr.bf16.mxu0 %v541
          %1380 = vmatpush1.bf16.msra.mxu0 %v540
          %1381 = vmatprep.subr.bf16.mxu0 %v545
          %1382 = vmatpush1.bf16.msra.mxu0 %v544
          %1383 = vmatprep.subr.bf16.mxu0 0
          %1384 = vmatpush1.bf16.msra.mxu0 0
          %1385 = vmatprep.subr.bf16.mxu0 0
          %1386 = vmatpush1.bf16.msra.mxu0 0
          %1387 = vmatprep.subr.bf16.mxu0 0
          %1388 = vmatpush1.bf16.msra.mxu0 0
          %1389 = vmatprep.subr.bf16.mxu0 0
          %1390 = vmatpush1.bf16.msra.mxu0 0
          %1391 = vmatprep.subr.bf16.mxu0 0
          %1392 = vmatpush1.bf16.msra.mxu0 0
          %1393 = vmatprep.subr.bf16.mxu0 0
          %1394 = vmatpush1.bf16.msra.mxu0 0
          %1395 = vmatprep.subr.bf16.mxu0 0
          %1396 = vmatpush1.bf16.msra.mxu0 0
          %1397 = vmatprep.subr.bf16.mxu0 0
          %1398 = vmatpush1.bf16.msra.mxu0 0
          %1399 = vmatprep.mubr.bf16.mxu0 0
          %1400 = vmatmul.mubr.bf16.gmra.mrb[0].mxu0 %v1325
          %v1401 = vpop.f32.mrb[0].mxu0
          %v1402 = vadd.f32 0.0, %v1401
          %v1403 = vpop.f32.mrb[0].mxu0
          %v1404 = vadd.f32 0.0, %v1403
          %v1405 = vpop.f32.mrb[0].mxu0
          %v1406 = vpop.f32.mrb[0].mxu0
          %1407 = vdwg.mxu0
          %v1408 = vadd.f32 %v1321, %v1361
          %v1409 = vadd.f32 %v1322, %v1363
          %v1410 = vadd.f32 %v1323, %v1402
          %v1411 = vadd.f32 %v1324, %v1404
          %v1412 = vmul.f32 %v1408, 0.5
          %v1413 = vtanh.pop %v1412
          %v1414 = vadd.f32 %v1413, 1.0
          %v1415 = vmul.f32 %v1414, 0.5
          %v1416 = vmul.f32 %v1409, 0.5
          %v1417 = vtanh.pop %v1416
          %v1418 = vadd.f32 %v1417, 1.0
          %v1419 = vmul.f32 %v1418, 0.5
          %v1420 = vtanh.pop %v1410
          %v1421 = vmul.f32 %v1411, 0.5
          %v1422 = vtanh.pop %v1421
          %v1423 = vadd.f32 %v1422, 1.0
          %v1424 = vmul.f32 %v1423, 0.5
          %v1425 = vmul.f32 %v1419, %v1317
          %v1426 = vmul.f32 %v1415, %v1420
          %v1427 = vadd.f32 %v1425, %v1426
          %v1428 = vtanh.pop %v1427
          %v1429 = vmul.f32 %v1424, %v1428
          %s1430 = sadd.s32 %s404, 6
          %v1431 = vstv %s1430
          %vm1432 = vcmp.lt.s32.totalorder %v1431, %v367
          %v1433 = vsel %vm1432, 1, 0
          %1434 = vset.pattern.permute.xlu0 0
          %1435 = vperm.xlu0 %1434, %v1433
          %v1436 = vpop.permute.xlu0 %1435
          %vm1437 = vcmp.eq.s32.totalorder %v1436, 1
          %v1438 = vsel %vm1437, %v1429, 0.0
          %s1439 = scalar_lea.vmem %s335, 48 [#allocation10]
          %1440 = vst [vmem:[%s1439] sm:$0xff] %v1438
          %v1441 = vsel %vm1437, %v1429, %v1316
          %v1442 = vsel %vm1437, %v1427, %v1317
          %s1443 = scalar_lea.vmem %s299, 112 [#allocation7]
          %v1444 = vld [vmem:[%s1443] sm:$0xff]
          %v1445 = vld [vmem:[%s1443 + $0x8] sm:$0xff]
          %v1446 = vunpack.c.l.bf16 %v1444
          %v1447 = vunpack.c.h.bf16 %v1444
          %v1448 = vunpack.c.l.bf16 %v1445
          %v1449 = vunpack.c.h.bf16 %v1445
          %v1450 = vpack.c.bf16 %v1441, %v1441
          %1451 = vmatprep.subr.bf16.mxu0 %v515
          %1452 = vmatpush1.bf16.msra.mxu0 %v514
          %1453 = vmatprep.subr.bf16.mxu0 %v519
          %1454 = vmatpush1.bf16.msra.mxu0 %v518
          %1455 = vmatprep.subr.bf16.mxu0 %v523
          %1456 = vmatpush1.bf16.msra.mxu0 %v522
          %1457 = vmatprep.subr.bf16.mxu0 %v527
          %1458 = vmatpush1.bf16.msra.mxu0 %v526
          %1459 = vmatprep.subr.bf16.mxu0 %v531
          %1460 = vmatpush1.bf16.msra.mxu0 %v530
          %1461 = vmatprep.subr.bf16.mxu0 %v535
          %1462 = vmatpush1.bf16.msra.mxu0 %v534
          %1463 = vmatprep.subr.bf16.mxu0 %v539
          %1464 = vmatpush1.bf16.msra.mxu0 %v538
          %1465 = vmatprep.subr.bf16.mxu0 %v543
          %1466 = vmatpush1.bf16.msra.mxu0 %v542
          %1467 = vmatprep.subr.bf16.mxu0 0
          %1468 = vmatpush1.bf16.msra.mxu0 0
          %1469 = vmatprep.subr.bf16.mxu0 0
          %1470 = vmatpush1.bf16.msra.mxu0 0
          %1471 = vmatprep.subr.bf16.mxu0 0
          %1472 = vmatpush1.bf16.msra.mxu0 0
          %1473 = vmatprep.subr.bf16.mxu0 0
          %1474 = vmatpush1.bf16.msra.mxu0 0
          %1475 = vmatprep.subr.bf16.mxu0 0
          %1476 = vmatpush1.bf16.msra.mxu0 0
          %1477 = vmatprep.subr.bf16.mxu0 0
          %1478 = vmatpush1.bf16.msra.mxu0 0
          %1479 = vmatprep.subr.bf16.mxu0 0
          %1480 = vmatpush1.bf16.msra.mxu0 0
          %1481 = vmatprep.subr.bf16.mxu0 0
          %1482 = vmatpush1.bf16.msra.mxu0 0
          %1483 = vmatprep.mubr.bf16.mxu0 0
          %1484 = vmatmul.mubr.bf16.gmra.mrb[0].mxu0 %v1450
          %v1485 = vpop.f32.mrb[0].mxu0
          %v1486 = vadd.f32 0.0, %v1485
          %v1487 = vpop.f32.mrb[0].mxu0
          %v1488 = vadd.f32 0.0, %v1487
          %v1489 = vpop.f32.mrb[0].mxu0
          %v1490 = vpop.f32.mrb[0].mxu0
          %1491 = vdwg.mxu0
          %1492 = vmatprep.subr.bf16.mxu0 %v517
          %1493 = vmatpush1.bf16.msra.mxu0 %v516
          %1494 = vmatprep.subr.bf16.mxu0 %v521
          %1495 = vmatpush1.bf16.msra.mxu0 %v520
          %1496 = vmatprep.subr.bf16.mxu0 %v525
          %1497 = vmatpush1.bf16.msra.mxu0 %v524
          %1498 = vmatprep.subr.bf16.mxu0 %v529
          %1499 = vmatpush1.bf16.msra.mxu0 %v528
          %1500 = vmatprep.subr.bf16.mxu0 %v533
          %1501 = vmatpush1.bf16.msra.mxu0 %v532
          %1502 = vmatprep.subr.bf16.mxu0 %v537
          %1503 = vmatpush1.bf16.msra.mxu0 %v536
          %1504 = vmatprep.subr.bf16.mxu0 %v541
          %1505 = vmatpush1.bf16.msra.mxu0 %v540
          %1506 = vmatprep.subr.bf16.mxu0 %v545
          %1507 = vmatpush1.bf16.msra.mxu0 %v544
          %1508 = vmatprep.subr.bf16.mxu0 0
          %1509 = vmatpush1.bf16.msra.mxu0 0
          %1510 = vmatprep.subr.bf16.mxu0 0
          %1511 = vmatpush1.bf16.msra.mxu0 0
          %1512 = vmatprep.subr.bf16.mxu0 0
          %1513 = vmatpush1.bf16.msra.mxu0 0
          %1514 = vmatprep.subr.bf16.mxu0 0
          %1515 = vmatpush1.bf16.msra.mxu0 0
          %1516 = vmatprep.subr.bf16.mxu0 0
          %1517 = vmatpush1.bf16.msra.mxu0 0
          %1518 = vmatprep.subr.bf16.mxu0 0
          %1519 = vmatpush1.bf16.msra.mxu0 0
          %1520 = vmatprep.subr.bf16.mxu0 0
          %1521 = vmatpush1.bf16.msra.mxu0 0
          %1522 = vmatprep.subr.bf16.mxu0 0
          %1523 = vmatpush1.bf16.msra.mxu0 0
          %1524 = vmatprep.mubr.bf16.mxu0 0
          %1525 = vmatmul.mubr.bf16.gmra.mrb[0].mxu0 %v1450
          %v1526 = vpop.f32.mrb[0].mxu0
          %v1527 = vadd.f32 0.0, %v1526
          %v1528 = vpop.f32.mrb[0].mxu0
          %v1529 = vadd.f32 0.0, %v1528
          %v1530 = vpop.f32.mrb[0].mxu0
          %v1531 = vpop.f32.mrb[0].mxu0
          %1532 = vdwg.mxu0
          %v1533 = vadd.f32 %v1446, %v1486
          %v1534 = vadd.f32 %v1447, %v1488
          %v1535 = vadd.f32 %v1448, %v1527
          %v1536 = vadd.f32 %v1449, %v1529
          %v1537 = vmul.f32 %v1533, 0.5
          %v1538 = vtanh.pop %v1537
          %v1539 = vadd.f32 %v1538, 1.0
          %v1540 = vmul.f32 %v1539, 0.5
          %v1541 = vmul.f32 %v1534, 0.5
          %v1542 = vtanh.pop %v1541
          %v1543 = vadd.f32 %v1542, 1.0
          %v1544 = vmul.f32 %v1543, 0.5
          %v1545 = vtanh.pop %v1535
          %v1546 = vmul.f32 %v1536, 0.5
          %v1547 = vtanh.pop %v1546
          %v1548 = vadd.f32 %v1547, 1.0
          %v1549 = vmul.f32 %v1548, 0.5
          %v1550 = vmul.f32 %v1544, %v1442
          %v1551 = vmul.f32 %v1540, %v1545
          %v1552 = vadd.f32 %v1550, %v1551
          %v1553 = vtanh.pop %v1552
          %v1554 = vmul.f32 %v1549, %v1553
          %s1555 = sadd.s32 %s404, 7
          %v1556 = vstv %s1555
          %vm1557 = vcmp.lt.s32.totalorder %v1556, %v367
          %v1558 = vsel %vm1557, 1, 0
          %1559 = vset.pattern.permute.xlu0 0
          %1560 = vperm.xlu0 %1559, %v1558
          %v1561 = vpop.permute.xlu0 %1560
          %vm1562 = vcmp.eq.s32.totalorder %v1561, 1
          %v1563 = vsel %vm1562, %v1554, 0.0
          %s1564 = scalar_lea.vmem %s335, 56 [#allocation10]
          %1565 = vst [vmem:[%s1564] sm:$0xff] %v1563
          %v1566 = vsel %vm1562, %v1554, %v1441
          %v1567 = vsel %vm1562, %v1552, %v1442
          %1568 = vst [vmem:[#allocation2] sm:$0xff] %v1566
          %1569 = vst [vmem:[#allocation3] sm:$0xff] %v1567
        $region52: #{encoder_rnn_forward.2} parent=31 // pred_fallthru
          _
        %p1570 = scmp.eq.s32.totalorder %s31, 1
        // Predicated region
        $region53: #{encoder_rnn_forward.2} parent=31 // pred_check
          %p1571 = pneg %p1570
        $region54: #{encoder_rnn_forward.2} parent=31 // pred_check_branch
          %1573 = sbr.rel (%p1571) target = $region56
        $region55: #{encoder_rnn_forward.2} parent=31 // pred_region
          %v1574 = vld [vmem:[#allocation2] sm:$0xff]
          %v1575 = vld [vmem:[#allocation3] sm:$0xff]
          %s1576 = scalar_lea.vmem %s299, 112 [#allocation7]
          %v1577 = vld [vmem:[%s1576] sm:$0xff]
          %v1578 = vld [vmem:[%s1576 + $0x8] sm:$0xff]
          %v1579 = vunpack.c.l.bf16 %v1577
          %v1580 = vunpack.c.h.bf16 %v1577
          %v1581 = vunpack.c.l.bf16 %v1578
          %v1582 = vunpack.c.h.bf16 %v1578
          %v1583 = vpack.c.bf16 %v1574, %v1574
          %v1616 = vunpack.c.l.b16 %v368
          %v1617 = vunpack.c.h.b16 %v368
          %v1618 = vunpack.c.l.b16 %v369
          %v1619 = vunpack.c.h.b16 %v369
          %v1620 = vunpack.c.l.b16 %v370
          %v1621 = vunpack.c.h.b16 %v370
          %v1622 = vunpack.c.l.b16 %v371
          %v1623 = vunpack.c.h.b16 %v371
          %v1624 = vunpack.c.l.b16 %v372
          %v1625 = vunpack.c.h.b16 %v372
          %v1626 = vunpack.c.l.b16 %v373
          %v1627 = vunpack.c.h.b16 %v373
          %v1628 = vunpack.c.l.b16 %v374
          %v1629 = vunpack.c.h.b16 %v374
          %v1630 = vunpack.c.l.b16 %v375
          %v1631 = vunpack.c.h.b16 %v375
          %v1632 = vunpack.c.l.b16 %v376
          %v1633 = vunpack.c.h.b16 %v376
          %v1634 = vunpack.c.l.b16 %v377
          %v1635 = vunpack.c.h.b16 %v377
          %v1636 = vunpack.c.l.b16 %v378
          %v1637 = vunpack.c.h.b16 %v378
          %v1638 = vunpack.c.l.b16 %v379
          %v1639 = vunpack.c.h.b16 %v379
          %v1640 = vunpack.c.l.b16 %v380
          %v1641 = vunpack.c.h.b16 %v380
          %v1642 = vunpack.c.l.b16 %v381
          %v1643 = vunpack.c.h.b16 %v381
          %v1644 = vunpack.c.l.b16 %v382
          %v1645 = vunpack.c.h.b16 %v382
          %v1646 = vunpack.c.l.b16 %v383
          %v1647 = vunpack.c.h.b16 %v383
          %v1648 = vunpack.c.l.b16 %v384
          %v1649 = vunpack.c.h.b16 %v384
          %v1650 = vunpack.c.l.b16 %v385
          %v1651 = vunpack.c.h.b16 %v385
          %v1652 = vunpack.c.l.b16 %v386
          %v1653 = vunpack.c.h.b16 %v386
          %v1654 = vunpack.c.l.b16 %v387
          %v1655 = vunpack.c.h.b16 %v387
          %v1656 = vunpack.c.l.b16 %v388
          %v1657 = vunpack.c.h.b16 %v388
          %v1658 = vunpack.c.l.b16 %v389
          %v1659 = vunpack.c.h.b16 %v389
          %v1660 = vunpack.c.l.b16 %v390
          %v1661 = vunpack.c.h.b16 %v390
          %v1662 = vunpack.c.l.b16 %v391
          %v1663 = vunpack.c.h.b16 %v391
          %v1664 = vunpack.c.l.b16 %v392
          %v1665 = vunpack.c.h.b16 %v392
          %v1666 = vunpack.c.l.b16 %v393
          %v1667 = vunpack.c.h.b16 %v393
          %v1668 = vunpack.c.l.b16 %v394
          %v1669 = vunpack.c.h.b16 %v394
          %v1670 = vunpack.c.l.b16 %v395
          %v1671 = vunpack.c.h.b16 %v395
          %v1672 = vunpack.c.l.b16 %v396
          %v1673 = vunpack.c.h.b16 %v396
          %v1674 = vunpack.c.l.b16 %v397
          %v1675 = vunpack.c.h.b16 %v397
          %v1676 = vunpack.c.l.b16 %v398
          %v1677 = vunpack.c.h.b16 %v398
          %v1678 = vunpack.c.l.b16 %v399
          %v1679 = vunpack.c.h.b16 %v399
          %v1680 = vpack.c.b16 %v1620, %v1616
          %v1681 = vpack.c.b16 %v1621, %v1617
          %v1682 = vpack.c.b16 %v1622, %v1618
          %v1683 = vpack.c.b16 %v1623, %v1619
          %v1684 = vpack.c.b16 %v1628, %v1624
          %v1685 = vpack.c.b16 %v1629, %v1625
          %v1686 = vpack.c.b16 %v1630, %v1626
          %v1687 = vpack.c.b16 %v1631, %v1627
          %v1688 = vpack.c.b16 %v1636, %v1632
          %v1689 = vpack.c.b16 %v1637, %v1633
          %v1690 = vpack.c.b16 %v1638, %v1634
          %v1691 = vpack.c.b16 %v1639, %v1635
          %v1692 = vpack.c.b16 %v1644, %v1640
          %v1693 = vpack.c.b16 %v1645, %v1641
          %v1694 = vpack.c.b16 %v1646, %v1642
          %v1695 = vpack.c.b16 %v1647, %v1643
          %v1696 = vpack.c.b16 %v1652, %v1648
          %v1697 = vpack.c.b16 %v1653, %v1649
          %v1698 = vpack.c.b16 %v1654, %v1650
          %v1699 = vpack.c.b16 %v1655, %v1651
          %v1700 = vpack.c.b16 %v1660, %v1656
          %v1701 = vpack.c.b16 %v1661, %v1657
          %v1702 = vpack.c.b16 %v1662, %v1658
          %v1703 = vpack.c.b16 %v1663, %v1659
          %v1704 = vpack.c.b16 %v1668, %v1664
          %v1705 = vpack.c.b16 %v1669, %v1665
          %v1706 = vpack.c.b16 %v1670, %v1666
          %v1707 = vpack.c.b16 %v1671, %v1667
          %v1708 = vpack.c.b16 %v1676, %v1672
          %v1709 = vpack.c.b16 %v1677, %v1673
          %v1710 = vpack.c.b16 %v1678, %v1674
          %v1711 = vpack.c.b16 %v1679, %v1675
          %1744 = vmatprep.subr.bf16.mxu0 %v1681
          %1745 = vmatpush1.bf16.msra.mxu0 %v1680
          %1746 = vmatprep.subr.bf16.mxu0 %v1685
          %1747 = vmatpush1.bf16.msra.mxu0 %v1684
          %1748 = vmatprep.subr.bf16.mxu0 %v1689
          %1749 = vmatpush1.bf16.msra.mxu0 %v1688
          %1750 = vmatprep.subr.bf16.mxu0 %v1693
          %1751 = vmatpush1.bf16.msra.mxu0 %v1692
          %1752 = vmatprep.subr.bf16.mxu0 %v1697
          %1753 = vmatpush1.bf16.msra.mxu0 %v1696
          %1754 = vmatprep.subr.bf16.mxu0 %v1701
          %1755 = vmatpush1.bf16.msra.mxu0 %v1700
          %1756 = vmatprep.subr.bf16.mxu0 %v1705
          %1757 = vmatpush1.bf16.msra.mxu0 %v1704
          %1758 = vmatprep.subr.bf16.mxu0 %v1709
          %1759 = vmatpush1.bf16.msra.mxu0 %v1708
          %1760 = vmatprep.subr.bf16.mxu0 0
          %1761 = vmatpush1.bf16.msra.mxu0 0
          %1762 = vmatprep.subr.bf16.mxu0 0
          %1763 = vmatpush1.bf16.msra.mxu0 0
          %1764 = vmatprep.subr.bf16.mxu0 0
          %1765 = vmatpush1.bf16.msra.mxu0 0
          %1766 = vmatprep.subr.bf16.mxu0 0
          %1767 = vmatpush1.bf16.msra.mxu0 0
          %1768 = vmatprep.subr.bf16.mxu0 0
          %1769 = vmatpush1.bf16.msra.mxu0 0
          %1770 = vmatprep.subr.bf16.mxu0 0
          %1771 = vmatpush1.bf16.msra.mxu0 0
          %1772 = vmatprep.subr.bf16.mxu0 0
          %1773 = vmatpush1.bf16.msra.mxu0 0
          %1774 = vmatprep.subr.bf16.mxu0 0
          %1775 = vmatpush1.bf16.msra.mxu0 0
          %1776 = vmatprep.mubr.bf16.mxu0 0
          %1777 = vmatmul.mubr.bf16.gmra.mrb[0].mxu0 %v1583
          %v1778 = vpop.f32.mrb[0].mxu0
          %v1779 = vadd.f32 0.0, %v1778
          %v1780 = vpop.f32.mrb[0].mxu0
          %v1781 = vadd.f32 0.0, %v1780
          %v1782 = vpop.f32.mrb[0].mxu0
          %v1783 = vpop.f32.mrb[0].mxu0
          %1784 = vdwg.mxu0
          %1785 = vmatprep.subr.bf16.mxu0 %v1683
          %1786 = vmatpush1.bf16.msra.mxu0 %v1682
          %1787 = vmatprep.subr.bf16.mxu0 %v1687
          %1788 = vmatpush1.bf16.msra.mxu0 %v1686
          %1789 = vmatprep.subr.bf16.mxu0 %v1691
          %1790 = vmatpush1.bf16.msra.mxu0 %v1690
          %1791 = vmatprep.subr.bf16.mxu0 %v1695
          %1792 = vmatpush1.bf16.msra.mxu0 %v1694
          %1793 = vmatprep.subr.bf16.mxu0 %v1699
          %1794 = vmatpush1.bf16.msra.mxu0 %v1698
          %1795 = vmatprep.subr.bf16.mxu0 %v1703
          %1796 = vmatpush1.bf16.msra.mxu0 %v1702
          %1797 = vmatprep.subr.bf16.mxu0 %v1707
          %1798 = vmatpush1.bf16.msra.mxu0 %v1706
          %1799 = vmatprep.subr.bf16.mxu0 %v1711
          %1800 = vmatpush1.bf16.msra.mxu0 %v1710
          %1801 = vmatprep.subr.bf16.mxu0 0
          %1802 = vmatpush1.bf16.msra.mxu0 0
          %1803 = vmatprep.subr.bf16.mxu0 0
          %1804 = vmatpush1.bf16.msra.mxu0 0
          %1805 = vmatprep.subr.bf16.mxu0 0
          %1806 = vmatpush1.bf16.msra.mxu0 0
          %1807 = vmatprep.subr.bf16.mxu0 0
          %1808 = vmatpush1.bf16.msra.mxu0 0
          %1809 = vmatprep.subr.bf16.mxu0 0
          %1810 = vmatpush1.bf16.msra.mxu0 0
          %1811 = vmatprep.subr.bf16.mxu0 0
          %1812 = vmatpush1.bf16.msra.mxu0 0
          %1813 = vmatprep.subr.bf16.mxu0 0
          %1814 = vmatpush1.bf16.msra.mxu0 0
          %1815 = vmatprep.subr.bf16.mxu0 0
          %1816 = vmatpush1.bf16.msra.mxu0 0
          %1817 = vmatprep.mubr.bf16.mxu0 0
          %1818 = vmatmul.mubr.bf16.gmra.mrb[0].mxu0 %v1583
          %v1819 = vpop.f32.mrb[0].mxu0
          %v1820 = vadd.f32 0.0, %v1819
          %v1821 = vpop.f32.mrb[0].mxu0
          %v1822 = vadd.f32 0.0, %v1821
          %v1823 = vpop.f32.mrb[0].mxu0
          %v1824 = vpop.f32.mrb[0].mxu0
          %1825 = vdwg.mxu0
          %v1826 = vadd.f32 %v1579, %v1779
          %v1827 = vadd.f32 %v1580, %v1781
          %v1828 = vadd.f32 %v1581, %v1820
          %v1829 = vadd.f32 %v1582, %v1822
          %v1830 = vmul.f32 %v1826, 0.5
          %v1831 = vtanh.pop %v1830
          %v1832 = vadd.f32 %v1831, 1.0
          %v1833 = vmul.f32 %v1832, 0.5
          %v1834 = vmul.f32 %v1827, 0.5
          %v1835 = vtanh.pop %v1834
          %v1836 = vadd.f32 %v1835, 1.0
          %v1837 = vmul.f32 %v1836, 0.5
          %v1838 = vtanh.pop %v1828
          %v1839 = vmul.f32 %v1829, 0.5
          %v1840 = vtanh.pop %v1839
          %v1841 = vadd.f32 %v1840, 1.0
          %v1842 = vmul.f32 %v1841, 0.5
          %v1843 = vmul.f32 %v1837, %v1575
          %v1844 = vmul.f32 %v1833, %v1838
          %v1845 = vadd.f32 %v1843, %v1844
          %v1846 = vtanh.pop %v1845
          %v1847 = vmul.f32 %v1842, %v1846
          %s1848 = sadd.s32 %s404, 7
          %v1849 = vstv %s1848
          %vm1850 = vcmp.lt.s32.totalorder %v1849, %v367
          %v1851 = vsel %vm1850, 1, 0
          %1852 = vset.pattern.permute.xlu0 0
          %1853 = vperm.xlu0 %1852, %v1851
          %v1854 = vpop.permute.xlu0 %1853
          %vm1855 = vcmp.eq.s32.totalorder %v1854, 1
          %v1856 = vsel %vm1855, %v1847, 0.0
          %s1857 = scalar_lea.vmem %s335, 56 [#allocation10]
          %1858 = vst [vmem:[%s1857] sm:$0xff] %v1856
          %v1859 = vsel %vm1855, %v1847, %v1574
          %v1860 = vsel %vm1855, %v1845, %v1575
          %s1861 = scalar_lea.vmem %s299, 96 [#allocation7]
          %v1862 = vld [vmem:[%s1861] sm:$0xff]
          %v1863 = vld [vmem:[%s1861 + $0x8] sm:$0xff]
          %v1864 = vunpack.c.l.bf16 %v1862
          %v1865 = vunpack.c.h.bf16 %v1862
          %v1866 = vunpack.c.l.bf16 %v1863
          %v1867 = vunpack.c.h.bf16 %v1863
          %v1868 = vpack.c.bf16 %v1859, %v1859
          %1869 = vmatprep.subr.bf16.mxu0 %v1681
          %1870 = vmatpush1.bf16.msra.mxu0 %v1680
          %1871 = vmatprep.subr.bf16.mxu0 %v1685
          %1872 = vmatpush1.bf16.msra.mxu0 %v1684
          %1873 = vmatprep.subr.bf16.mxu0 %v1689
          %1874 = vmatpush1.bf16.msra.mxu0 %v1688
          %1875 = vmatprep.subr.bf16.mxu0 %v1693
          %1876 = vmatpush1.bf16.msra.mxu0 %v1692
          %1877 = vmatprep.subr.bf16.mxu0 %v1697
          %1878 = vmatpush1.bf16.msra.mxu0 %v1696
          %1879 = vmatprep.subr.bf16.mxu0 %v1701
          %1880 = vmatpush1.bf16.msra.mxu0 %v1700
          %1881 = vmatprep.subr.bf16.mxu0 %v1705
          %1882 = vmatpush1.bf16.msra.mxu0 %v1704
          %1883 = vmatprep.subr.bf16.mxu0 %v1709
          %1884 = vmatpush1.bf16.msra.mxu0 %v1708
          %1885 = vmatprep.subr.bf16.mxu0 0
          %1886 = vmatpush1.bf16.msra.mxu0 0
          %1887 = vmatprep.subr.bf16.mxu0 0
          %1888 = vmatpush1.bf16.msra.mxu0 0
          %1889 = vmatprep.subr.bf16.mxu0 0
          %1890 = vmatpush1.bf16.msra.mxu0 0
          %1891 = vmatprep.subr.bf16.mxu0 0
          %1892 = vmatpush1.bf16.msra.mxu0 0
          %1893 = vmatprep.subr.bf16.mxu0 0
          %1894 = vmatpush1.bf16.msra.mxu0 0
          %1895 = vmatprep.subr.bf16.mxu0 0
          %1896 = vmatpush1.bf16.msra.mxu0 0
          %1897 = vmatprep.subr.bf16.mxu0 0
          %1898 = vmatpush1.bf16.msra.mxu0 0
          %1899 = vmatprep.subr.bf16.mxu0 0
          %1900 = vmatpush1.bf16.msra.mxu0 0
          %1901 = vmatprep.mubr.bf16.mxu0 0
          %1902 = vmatmul.mubr.bf16.gmra.mrb[0].mxu0 %v1868
          %v1903 = vpop.f32.mrb[0].mxu0
          %v1904 = vadd.f32 0.0, %v1903
          %v1905 = vpop.f32.mrb[0].mxu0
          %v1906 = vadd.f32 0.0, %v1905
          %v1907 = vpop.f32.mrb[0].mxu0
          %v1908 = vpop.f32.mrb[0].mxu0
          %1909 = vdwg.mxu0
          %1910 = vmatprep.subr.bf16.mxu0 %v1683
          %1911 = vmatpush1.bf16.msra.mxu0 %v1682
          %1912 = vmatprep.subr.bf16.mxu0 %v1687
          %1913 = vmatpush1.bf16.msra.mxu0 %v1686
          %1914 = vmatprep.subr.bf16.mxu0 %v1691
          %1915 = vmatpush1.bf16.msra.mxu0 %v1690
          %1916 = vmatprep.subr.bf16.mxu0 %v1695
          %1917 = vmatpush1.bf16.msra.mxu0 %v1694
          %1918 = vmatprep.subr.bf16.mxu0 %v1699
          %1919 = vmatpush1.bf16.msra.mxu0 %v1698
          %1920 = vmatprep.subr.bf16.mxu0 %v1703
          %1921 = vmatpush1.bf16.msra.mxu0 %v1702
          %1922 = vmatprep.subr.bf16.mxu0 %v1707
          %1923 = vmatpush1.bf16.msra.mxu0 %v1706
          %1924 = vmatprep.subr.bf16.mxu0 %v1711
          %1925 = vmatpush1.bf16.msra.mxu0 %v1710
          %1926 = vmatprep.subr.bf16.mxu0 0
          %1927 = vmatpush1.bf16.msra.mxu0 0
          %1928 = vmatprep.subr.bf16.mxu0 0
          %1929 = vmatpush1.bf16.msra.mxu0 0
          %1930 = vmatprep.subr.bf16.mxu0 0
          %1931 = vmatpush1.bf16.msra.mxu0 0
          %1932 = vmatprep.subr.bf16.mxu0 0
          %1933 = vmatpush1.bf16.msra.mxu0 0
          %1934 = vmatprep.subr.bf16.mxu0 0
          %1935 = vmatpush1.bf16.msra.mxu0 0
          %1936 = vmatprep.subr.bf16.mxu0 0
          %1937 = vmatpush1.bf16.msra.mxu0 0
          %1938 = vmatprep.subr.bf16.mxu0 0
          %1939 = vmatpush1.bf16.msra.mxu0 0
          %1940 = vmatprep.subr.bf16.mxu0 0
          %1941 = vmatpush1.bf16.msra.mxu0 0
          %1942 = vmatprep.mubr.bf16.mxu0 0
          %1943 = vmatmul.mubr.bf16.gmra.mrb[0].mxu0 %v1868
          %v1944 = vpop.f32.mrb[0].mxu0
          %v1945 = vadd.f32 0.0, %v1944
          %v1946 = vpop.f32.mrb[0].mxu0
          %v1947 = vadd.f32 0.0, %v1946
          %v1948 = vpop.f32.mrb[0].mxu0
          %v1949 = vpop.f32.mrb[0].mxu0
          %1950 = vdwg.mxu0
          %v1951 = vadd.f32 %v1864, %v1904
          %v1952 = vadd.f32 %v1865, %v1906
          %v1953 = vadd.f32 %v1866, %v1945
          %v1954 = vadd.f32 %v1867, %v1947
          %v1955 = vmul.f32 %v1951, 0.5
          %v1956 = vtanh.pop %v1955
          %v1957 = vadd.f32 %v1956, 1.0
          %v1958 = vmul.f32 %v1957, 0.5
          %v1959 = vmul.f32 %v1952, 0.5
          %v1960 = vtanh.pop %v1959
          %v1961 = vadd.f32 %v1960, 1.0
          %v1962 = vmul.f32 %v1961, 0.5
          %v1963 = vtanh.pop %v1953
          %v1964 = vmul.f32 %v1954, 0.5
          %v1965 = vtanh.pop %v1964
          %v1966 = vadd.f32 %v1965, 1.0
          %v1967 = vmul.f32 %v1966, 0.5
          %v1968 = vmul.f32 %v1962, %v1860
          %v1969 = vmul.f32 %v1958, %v1963
          %v1970 = vadd.f32 %v1968, %v1969
          %v1971 = vtanh.pop %v1970
          %v1972 = vmul.f32 %v1967, %v1971
          %s1973 = sadd.s32 %s404, 6
          %v1974 = vstv %s1973
          %vm1975 = vcmp.lt.s32.totalorder %v1974, %v367
          %v1976 = vsel %vm1975, 1, 0
          %1977 = vset.pattern.permute.xlu0 0
          %1978 = vperm.xlu0 %1977, %v1976
          %v1979 = vpop.permute.xlu0 %1978
          %vm1980 = vcmp.eq.s32.totalorder %v1979, 1
          %v1981 = vsel %vm1980, %v1972, 0.0
          %s1982 = scalar_lea.vmem %s335, 48 [#allocation10]
          %1983 = vst [vmem:[%s1982] sm:$0xff] %v1981
          %v1984 = vsel %vm1980, %v1972, %v1859
          %v1985 = vsel %vm1980, %v1970, %v1860
          %s1986 = scalar_lea.vmem %s299, 80 [#allocation7]
          %v1987 = vld [vmem:[%s1986] sm:$0xff]
          %v1988 = vld [vmem:[%s1986 + $0x8] sm:$0xff]
          %v1989 = vunpack.c.l.bf16 %v1987
          %v1990 = vunpack.c.h.bf16 %v1987
          %v1991 = vunpack.c.l.bf16 %v1988
          %v1992 = vunpack.c.h.bf16 %v1988
          %v1993 = vpack.c.bf16 %v1984, %v1984
          %1994 = vmatprep.subr.bf16.mxu0 %v1681
          %1995 = vmatpush1.bf16.msra.mxu0 %v1680
          %1996 = vmatprep.subr.bf16.mxu0 %v1685
          %1997 = vmatpush1.bf16.msra.mxu0 %v1684
          %1998 = vmatprep.subr.bf16.mxu0 %v1689
          %1999 = vmatpush1.bf16.msra.mxu0 %v1688
          %2000 = vmatprep.subr.bf16.mxu0 %v1693
          %2001 = vmatpush1.bf16.msra.mxu0 %v1692
          %2002 = vmatprep.subr.bf16.mxu0 %v1697
          %2003 = vmatpush1.bf16.msra.mxu0 %v1696
          %2004 = vmatprep.subr.bf16.mxu0 %v1701
          %2005 = vmatpush1.bf16.msra.mxu0 %v1700
          %2006 = vmatprep.subr.bf16.mxu0 %v1705
          %2007 = vmatpush1.bf16.msra.mxu0 %v1704
          %2008 = vmatprep.subr.bf16.mxu0 %v1709
          %2009 = vmatpush1.bf16.msra.mxu0 %v1708
          %2010 = vmatprep.subr.bf16.mxu0 0
          %2011 = vmatpush1.bf16.msra.mxu0 0
          %2012 = vmatprep.subr.bf16.mxu0 0
          %2013 = vmatpush1.bf16.msra.mxu0 0
          %2014 = vmatprep.subr.bf16.mxu0 0
          %2015 = vmatpush1.bf16.msra.mxu0 0
          %2016 = vmatprep.subr.bf16.mxu0 0
          %2017 = vmatpush1.bf16.msra.mxu0 0
          %2018 = vmatprep.subr.bf16.mxu0 0
          %2019 = vmatpush1.bf16.msra.mxu0 0
          %2020 = vmatprep.subr.bf16.mxu0 0
          %2021 = vmatpush1.bf16.msra.mxu0 0
          %2022 = vmatprep.subr.bf16.mxu0 0
          %2023 = vmatpush1.bf16.msra.mxu0 0
          %2024 = vmatprep.subr.bf16.mxu0 0
          %2025 = vmatpush1.bf16.msra.mxu0 0
          %2026 = vmatprep.mubr.bf16.mxu0 0
          %2027 = vmatmul.mubr.bf16.gmra.mrb[0].mxu0 %v1993
          %v2028 = vpop.f32.mrb[0].mxu0
          %v2029 = vadd.f32 0.0, %v2028
          %v2030 = vpop.f32.mrb[0].mxu0
          %v2031 = vadd.f32 0.0, %v2030
          %v2032 = vpop.f32.mrb[0].mxu0
          %v2033 = vpop.f32.mrb[0].mxu0
          %2034 = vdwg.mxu0
          %2035 = vmatprep.subr.bf16.mxu0 %v1683
          %2036 = vmatpush1.bf16.msra.mxu0 %v1682
          %2037 = vmatprep.subr.bf16.mxu0 %v1687
          %2038 = vmatpush1.bf16.msra.mxu0 %v1686
          %2039 = vmatprep.subr.bf16.mxu0 %v1691
          %2040 = vmatpush1.bf16.msra.mxu0 %v1690
          %2041 = vmatprep.subr.bf16.mxu0 %v1695
          %2042 = vmatpush1.bf16.msra.mxu0 %v1694
          %2043 = vmatprep.subr.bf16.mxu0 %v1699
          %2044 = vmatpush1.bf16.msra.mxu0 %v1698
          %2045 = vmatprep.subr.bf16.mxu0 %v1703
          %2046 = vmatpush1.bf16.msra.mxu0 %v1702
          %2047 = vmatprep.subr.bf16.mxu0 %v1707
          %2048 = vmatpush1.bf16.msra.mxu0 %v1706
          %2049 = vmatprep.subr.bf16.mxu0 %v1711
          %2050 = vmatpush1.bf16.msra.mxu0 %v1710
          %2051 = vmatprep.subr.bf16.mxu0 0
          %2052 = vmatpush1.bf16.msra.mxu0 0
          %2053 = vmatprep.subr.bf16.mxu0 0
          %2054 = vmatpush1.bf16.msra.mxu0 0
          %2055 = vmatprep.subr.bf16.mxu0 0
          %2056 = vmatpush1.bf16.msra.mxu0 0
          %2057 = vmatprep.subr.bf16.mxu0 0
          %2058 = vmatpush1.bf16.msra.mxu0 0
          %2059 = vmatprep.subr.bf16.mxu0 0
          %2060 = vmatpush1.bf16.msra.mxu0 0
          %2061 = vmatprep.subr.bf16.mxu0 0
          %2062 = vmatpush1.bf16.msra.mxu0 0
          %2063 = vmatprep.subr.bf16.mxu0 0
          %2064 = vmatpush1.bf16.msra.mxu0 0
          %2065 = vmatprep.subr.bf16.mxu0 0
          %2066 = vmatpush1.bf16.msra.mxu0 0
          %2067 = vmatprep.mubr.bf16.mxu0 0
          %2068 = vmatmul.mubr.bf16.gmra.mrb[0].mxu0 %v1993
          %v2069 = vpop.f32.mrb[0].mxu0
          %v2070 = vadd.f32 0.0, %v2069
          %v2071 = vpop.f32.mrb[0].mxu0
          %v2072 = vadd.f32 0.0, %v2071
          %v2073 = vpop.f32.mrb[0].mxu0
          %v2074 = vpop.f32.mrb[0].mxu0
          %2075 = vdwg.mxu0
          %v2076 = vadd.f32 %v1989, %v2029
          %v2077 = vadd.f32 %v1990, %v2031
          %v2078 = vadd.f32 %v1991, %v2070
          %v2079 = vadd.f32 %v1992, %v2072
          %v2080 = vmul.f32 %v2076, 0.5
          %v2081 = vtanh.pop %v2080
          %v2082 = vadd.f32 %v2081, 1.0
          %v2083 = vmul.f32 %v2082, 0.5
          %v2084 = vmul.f32 %v2077, 0.5
          %v2085 = vtanh.pop %v2084
          %v2086 = vadd.f32 %v2085, 1.0
          %v2087 = vmul.f32 %v2086, 0.5
          %v2088 = vtanh.pop %v2078
          %v2089 = vmul.f32 %v2079, 0.5
          %v2090 = vtanh.pop %v2089
          %v2091 = vadd.f32 %v2090, 1.0
          %v2092 = vmul.f32 %v2091, 0.5
          %v2093 = vmul.f32 %v2087, %v1985
          %v2094 = vmul.f32 %v2083, %v2088
          %v2095 = vadd.f32 %v2093, %v2094
          %v2096 = vtanh.pop %v2095
          %v2097 = vmul.f32 %v2092, %v2096
          %s2098 = sadd.s32 %s404, 5
          %v2099 = vstv %s2098
          %vm2100 = vcmp.lt.s32.totalorder %v2099, %v367
          %v2101 = vsel %vm2100, 1, 0
          %2102 = vset.pattern.permute.xlu0 0
          %2103 = vperm.xlu0 %2102, %v2101
          %v2104 = vpop.permute.xlu0 %2103
          %vm2105 = vcmp.eq.s32.totalorder %v2104, 1
          %v2106 = vsel %vm2105, %v2097, 0.0
          %s2107 = scalar_lea.vmem %s335, 40 [#allocation10]
          %2108 = vst [vmem:[%s2107] sm:$0xff] %v2106
          %v2109 = vsel %vm2105, %v2097, %v1984
          %v2110 = vsel %vm2105, %v2095, %v1985
          %s2111 = scalar_lea.vmem %s299, 64 [#allocation7]
          %v2112 = vld [vmem:[%s2111] sm:$0xff]
          %v2113 = vld [vmem:[%s2111 + $0x8] sm:$0xff]
          %v2114 = vunpack.c.l.bf16 %v2112
          %v2115 = vunpack.c.h.bf16 %v2112
          %v2116 = vunpack.c.l.bf16 %v2113
          %v2117 = vunpack.c.h.bf16 %v2113
          %v2118 = vpack.c.bf16 %v2109, %v2109
          %2119 = vmatprep.subr.bf16.mxu0 %v1681
          %2120 = vmatpush1.bf16.msra.mxu0 %v1680
          %2121 = vmatprep.subr.bf16.mxu0 %v1685
          %2122 = vmatpush1.bf16.msra.mxu0 %v1684
          %2123 = vmatprep.subr.bf16.mxu0 %v1689
          %2124 = vmatpush1.bf16.msra.mxu0 %v1688
          %2125 = vmatprep.subr.bf16.mxu0 %v1693
          %2126 = vmatpush1.bf16.msra.mxu0 %v1692
          %2127 = vmatprep.subr.bf16.mxu0 %v1697
          %2128 = vmatpush1.bf16.msra.mxu0 %v1696
          %2129 = vmatprep.subr.bf16.mxu0 %v1701
          %2130 = vmatpush1.bf16.msra.mxu0 %v1700
          %2131 = vmatprep.subr.bf16.mxu0 %v1705
          %2132 = vmatpush1.bf16.msra.mxu0 %v1704
          %2133 = vmatprep.subr.bf16.mxu0 %v1709
          %2134 = vmatpush1.bf16.msra.mxu0 %v1708
          %2135 = vmatprep.subr.bf16.mxu0 0
          %2136 = vmatpush1.bf16.msra.mxu0 0
          %2137 = vmatprep.subr.bf16.mxu0 0
          %2138 = vmatpush1.bf16.msra.mxu0 0
          %2139 = vmatprep.subr.bf16.mxu0 0
          %2140 = vmatpush1.bf16.msra.mxu0 0
          %2141 = vmatprep.subr.bf16.mxu0 0
          %2142 = vmatpush1.bf16.msra.mxu0 0
          %2143 = vmatprep.subr.bf16.mxu0 0
          %2144 = vmatpush1.bf16.msra.mxu0 0
          %2145 = vmatprep.subr.bf16.mxu0 0
          %2146 = vmatpush1.bf16.msra.mxu0 0
          %2147 = vmatprep.subr.bf16.mxu0 0
          %2148 = vmatpush1.bf16.msra.mxu0 0
          %2149 = vmatprep.subr.bf16.mxu0 0
          %2150 = vmatpush1.bf16.msra.mxu0 0
          %2151 = vmatprep.mubr.bf16.mxu0 0
          %2152 = vmatmul.mubr.bf16.gmra.mrb[0].mxu0 %v2118
          %v2153 = vpop.f32.mrb[0].mxu0
          %v2154 = vadd.f32 0.0, %v2153
          %v2155 = vpop.f32.mrb[0].mxu0
          %v2156 = vadd.f32 0.0, %v2155
          %v2157 = vpop.f32.mrb[0].mxu0
          %v2158 = vpop.f32.mrb[0].mxu0
          %2159 = vdwg.mxu0
          %2160 = vmatprep.subr.bf16.mxu0 %v1683
          %2161 = vmatpush1.bf16.msra.mxu0 %v1682
          %2162 = vmatprep.subr.bf16.mxu0 %v1687
          %2163 = vmatpush1.bf16.msra.mxu0 %v1686
          %2164 = vmatprep.subr.bf16.mxu0 %v1691
          %2165 = vmatpush1.bf16.msra.mxu0 %v1690
          %2166 = vmatprep.subr.bf16.mxu0 %v1695
          %2167 = vmatpush1.bf16.msra.mxu0 %v1694
          %2168 = vmatprep.subr.bf16.mxu0 %v1699
          %2169 = vmatpush1.bf16.msra.mxu0 %v1698
          %2170 = vmatprep.subr.bf16.mxu0 %v1703
          %2171 = vmatpush1.bf16.msra.mxu0 %v1702
          %2172 = vmatprep.subr.bf16.mxu0 %v1707
          %2173 = vmatpush1.bf16.msra.mxu0 %v1706
          %2174 = vmatprep.subr.bf16.mxu0 %v1711
          %2175 = vmatpush1.bf16.msra.mxu0 %v1710
          %2176 = vmatprep.subr.bf16.mxu0 0
          %2177 = vmatpush1.bf16.msra.mxu0 0
          %2178 = vmatprep.subr.bf16.mxu0 0
          %2179 = vmatpush1.bf16.msra.mxu0 0
          %2180 = vmatprep.subr.bf16.mxu0 0
          %2181 = vmatpush1.bf16.msra.mxu0 0
          %2182 = vmatprep.subr.bf16.mxu0 0
          %2183 = vmatpush1.bf16.msra.mxu0 0
          %2184 = vmatprep.subr.bf16.mxu0 0
          %2185 = vmatpush1.bf16.msra.mxu0 0
          %2186 = vmatprep.subr.bf16.mxu0 0
          %2187 = vmatpush1.bf16.msra.mxu0 0
          %2188 = vmatprep.subr.bf16.mxu0 0
          %2189 = vmatpush1.bf16.msra.mxu0 0
          %2190 = vmatprep.subr.bf16.mxu0 0
          %2191 = vmatpush1.bf16.msra.mxu0 0
          %2192 = vmatprep.mubr.bf16.mxu0 0
          %2193 = vmatmul.mubr.bf16.gmra.mrb[0].mxu0 %v2118
          %v2194 = vpop.f32.mrb[0].mxu0
          %v2195 = vadd.f32 0.0, %v2194
          %v2196 = vpop.f32.mrb[0].mxu0
          %v2197 = vadd.f32 0.0, %v2196
          %v2198 = vpop.f32.mrb[0].mxu0
          %v2199 = vpop.f32.mrb[0].mxu0
          %2200 = vdwg.mxu0
          %v2201 = vadd.f32 %v2114, %v2154
          %v2202 = vadd.f32 %v2115, %v2156
          %v2203 = vadd.f32 %v2116, %v2195
          %v2204 = vadd.f32 %v2117, %v2197
          %v2205 = vmul.f32 %v2201, 0.5
          %v2206 = vtanh.pop %v2205
          %v2207 = vadd.f32 %v2206, 1.0
          %v2208 = vmul.f32 %v2207, 0.5
          %v2209 = vmul.f32 %v2202, 0.5
          %v2210 = vtanh.pop %v2209
          %v2211 = vadd.f32 %v2210, 1.0
          %v2212 = vmul.f32 %v2211, 0.5
          %v2213 = vtanh.pop %v2203
          %v2214 = vmul.f32 %v2204, 0.5
          %v2215 = vtanh.pop %v2214
          %v2216 = vadd.f32 %v2215, 1.0
          %v2217 = vmul.f32 %v2216, 0.5
          %v2218 = vmul.f32 %v2212, %v2110
          %v2219 = vmul.f32 %v2208, %v2213
          %v2220 = vadd.f32 %v2218, %v2219
          %v2221 = vtanh.pop %v2220
          %v2222 = vmul.f32 %v2217, %v2221
          %s2223 = sadd.s32 %s404, 4
          %v2224 = vstv %s2223
          %vm2225 = vcmp.lt.s32.totalorder %v2224, %v367
          %v2226 = vsel %vm2225, 1, 0
          %2227 = vset.pattern.permute.xlu0 0
          %2228 = vperm.xlu0 %2227, %v2226
          %v2229 = vpop.permute.xlu0 %2228
          %vm2230 = vcmp.eq.s32.totalorder %v2229, 1
          %v2231 = vsel %vm2230, %v2222, 0.0
          %s2232 = scalar_lea.vmem %s335, 32 [#allocation10]
          %2233 = vst [vmem:[%s2232] sm:$0xff] %v2231
          %v2234 = vsel %vm2230, %v2222, %v2109
          %v2235 = vsel %vm2230, %v2220, %v2110
          %s2236 = scalar_lea.vmem %s299, 48 [#allocation7]
          %v2237 = vld [vmem:[%s2236] sm:$0xff]
          %v2238 = vld [vmem:[%s2236 + $0x8] sm:$0xff]
          %v2239 = vunpack.c.l.bf16 %v2237
          %v2240 = vunpack.c.h.bf16 %v2237
          %v2241 = vunpack.c.l.bf16 %v2238
          %v2242 = vunpack.c.h.bf16 %v2238
          %v2243 = vpack.c.bf16 %v2234, %v2234
          %2244 = vmatprep.subr.bf16.mxu0 %v1681
          %2245 = vmatpush1.bf16.msra.mxu0 %v1680
          %2246 = vmatprep.subr.bf16.mxu0 %v1685
          %2247 = vmatpush1.bf16.msra.mxu0 %v1684
          %2248 = vmatprep.subr.bf16.mxu0 %v1689
          %2249 = vmatpush1.bf16.msra.mxu0 %v1688
          %2250 = vmatprep.subr.bf16.mxu0 %v1693
          %2251 = vmatpush1.bf16.msra.mxu0 %v1692
          %2252 = vmatprep.subr.bf16.mxu0 %v1697
          %2253 = vmatpush1.bf16.msra.mxu0 %v1696
          %2254 = vmatprep.subr.bf16.mxu0 %v1701
          %2255 = vmatpush1.bf16.msra.mxu0 %v1700
          %2256 = vmatprep.subr.bf16.mxu0 %v1705
          %2257 = vmatpush1.bf16.msra.mxu0 %v1704
          %2258 = vmatprep.subr.bf16.mxu0 %v1709
          %2259 = vmatpush1.bf16.msra.mxu0 %v1708
          %2260 = vmatprep.subr.bf16.mxu0 0
          %2261 = vmatpush1.bf16.msra.mxu0 0
          %2262 = vmatprep.subr.bf16.mxu0 0
          %2263 = vmatpush1.bf16.msra.mxu0 0
          %2264 = vmatprep.subr.bf16.mxu0 0
          %2265 = vmatpush1.bf16.msra.mxu0 0
          %2266 = vmatprep.subr.bf16.mxu0 0
          %2267 = vmatpush1.bf16.msra.mxu0 0
          %2268 = vmatprep.subr.bf16.mxu0 0
          %2269 = vmatpush1.bf16.msra.mxu0 0
          %2270 = vmatprep.subr.bf16.mxu0 0
          %2271 = vmatpush1.bf16.msra.mxu0 0
          %2272 = vmatprep.subr.bf16.mxu0 0
          %2273 = vmatpush1.bf16.msra.mxu0 0
          %2274 = vmatprep.subr.bf16.mxu0 0
          %2275 = vmatpush1.bf16.msra.mxu0 0
          %2276 = vmatprep.mubr.bf16.mxu0 0
          %2277 = vmatmul.mubr.bf16.gmra.mrb[0].mxu0 %v2243
          %v2278 = vpop.f32.mrb[0].mxu0
          %v2279 = vadd.f32 0.0, %v2278
          %v2280 = vpop.f32.mrb[0].mxu0
          %v2281 = vadd.f32 0.0, %v2280
          %v2282 = vpop.f32.mrb[0].mxu0
          %v2283 = vpop.f32.mrb[0].mxu0
          %2284 = vdwg.mxu0
          %2285 = vmatprep.subr.bf16.mxu0 %v1683
          %2286 = vmatpush1.bf16.msra.mxu0 %v1682
          %2287 = vmatprep.subr.bf16.mxu0 %v1687
          %2288 = vmatpush1.bf16.msra.mxu0 %v1686
          %2289 = vmatprep.subr.bf16.mxu0 %v1691
          %2290 = vmatpush1.bf16.msra.mxu0 %v1690
          %2291 = vmatprep.subr.bf16.mxu0 %v1695
          %2292 = vmatpush1.bf16.msra.mxu0 %v1694
          %2293 = vmatprep.subr.bf16.mxu0 %v1699
          %2294 = vmatpush1.bf16.msra.mxu0 %v1698
          %2295 = vmatprep.subr.bf16.mxu0 %v1703
          %2296 = vmatpush1.bf16.msra.mxu0 %v1702
          %2297 = vmatprep.subr.bf16.mxu0 %v1707
          %2298 = vmatpush1.bf16.msra.mxu0 %v1706
          %2299 = vmatprep.subr.bf16.mxu0 %v1711
          %2300 = vmatpush1.bf16.msra.mxu0 %v1710
          %2301 = vmatprep.subr.bf16.mxu0 0
          %2302 = vmatpush1.bf16.msra.mxu0 0
          %2303 = vmatprep.subr.bf16.mxu0 0
          %2304 = vmatpush1.bf16.msra.mxu0 0
          %2305 = vmatprep.subr.bf16.mxu0 0
          %2306 = vmatpush1.bf16.msra.mxu0 0
          %2307 = vmatprep.subr.bf16.mxu0 0
          %2308 = vmatpush1.bf16.msra.mxu0 0
          %2309 = vmatprep.subr.bf16.mxu0 0
          %2310 = vmatpush1.bf16.msra.mxu0 0
          %2311 = vmatprep.subr.bf16.mxu0 0
          %2312 = vmatpush1.bf16.msra.mxu0 0
          %2313 = vmatprep.subr.bf16.mxu0 0
          %2314 = vmatpush1.bf16.msra.mxu0 0
          %2315 = vmatprep.subr.bf16.mxu0 0
          %2316 = vmatpush1.bf16.msra.mxu0 0
          %2317 = vmatprep.mubr.bf16.mxu0 0
          %2318 = vmatmul.mubr.bf16.gmra.mrb[0].mxu0 %v2243
          %v2319 = vpop.f32.mrb[0].mxu0
          %v2320 = vadd.f32 0.0, %v2319
          %v2321 = vpop.f32.mrb[0].mxu0
          %v2322 = vadd.f32 0.0, %v2321
          %v2323 = vpop.f32.mrb[0].mxu0
          %v2324 = vpop.f32.mrb[0].mxu0
          %2325 = vdwg.mxu0
          %v2326 = vadd.f32 %v2239, %v2279
          %v2327 = vadd.f32 %v2240, %v2281
          %v2328 = vadd.f32 %v2241, %v2320
          %v2329 = vadd.f32 %v2242, %v2322
          %v2330 = vmul.f32 %v2326, 0.5
          %v2331 = vtanh.pop %v2330
          %v2332 = vadd.f32 %v2331, 1.0
          %v2333 = vmul.f32 %v2332, 0.5
          %v2334 = vmul.f32 %v2327, 0.5
          %v2335 = vtanh.pop %v2334
          %v2336 = vadd.f32 %v2335, 1.0
          %v2337 = vmul.f32 %v2336, 0.5
          %v2338 = vtanh.pop %v2328
          %v2339 = vmul.f32 %v2329, 0.5
          %v2340 = vtanh.pop %v2339
          %v2341 = vadd.f32 %v2340, 1.0
          %v2342 = vmul.f32 %v2341, 0.5
          %v2343 = vmul.f32 %v2337, %v2235
          %v2344 = vmul.f32 %v2333, %v2338
          %v2345 = vadd.f32 %v2343, %v2344
          %v2346 = vtanh.pop %v2345
          %v2347 = vmul.f32 %v2342, %v2346
          %s2348 = sadd.s32 %s404, 3
          %v2349 = vstv %s2348
          %vm2350 = vcmp.lt.s32.totalorder %v2349, %v367
          %v2351 = vsel %vm2350, 1, 0
          %2352 = vset.pattern.permute.xlu0 0
          %2353 = vperm.xlu0 %2352, %v2351
          %v2354 = vpop.permute.xlu0 %2353
          %vm2355 = vcmp.eq.s32.totalorder %v2354, 1
          %v2356 = vsel %vm2355, %v2347, 0.0
          %s2357 = scalar_lea.vmem %s335, 24 [#allocation10]
          %2358 = vst [vmem:[%s2357] sm:$0xff] %v2356
          %v2359 = vsel %vm2355, %v2347, %v2234
          %v2360 = vsel %vm2355, %v2345, %v2235
          %s2361 = scalar_lea.vmem %s299, 32 [#allocation7]
          %v2362 = vld [vmem:[%s2361] sm:$0xff]
          %v2363 = vld [vmem:[%s2361 + $0x8] sm:$0xff]
          %v2364 = vunpack.c.l.bf16 %v2362
          %v2365 = vunpack.c.h.bf16 %v2362
          %v2366 = vunpack.c.l.bf16 %v2363
          %v2367 = vunpack.c.h.bf16 %v2363
          %v2368 = vpack.c.bf16 %v2359, %v2359
          %2369 = vmatprep.subr.bf16.mxu0 %v1681
          %2370 = vmatpush1.bf16.msra.mxu0 %v1680
          %2371 = vmatprep.subr.bf16.mxu0 %v1685
          %2372 = vmatpush1.bf16.msra.mxu0 %v1684
          %2373 = vmatprep.subr.bf16.mxu0 %v1689
          %2374 = vmatpush1.bf16.msra.mxu0 %v1688
          %2375 = vmatprep.subr.bf16.mxu0 %v1693
          %2376 = vmatpush1.bf16.msra.mxu0 %v1692
          %2377 = vmatprep.subr.bf16.mxu0 %v1697
          %2378 = vmatpush1.bf16.msra.mxu0 %v1696
          %2379 = vmatprep.subr.bf16.mxu0 %v1701
          %2380 = vmatpush1.bf16.msra.mxu0 %v1700
          %2381 = vmatprep.subr.bf16.mxu0 %v1705
          %2382 = vmatpush1.bf16.msra.mxu0 %v1704
          %2383 = vmatprep.subr.bf16.mxu0 %v1709
          %2384 = vmatpush1.bf16.msra.mxu0 %v1708
          %2385 = vmatprep.subr.bf16.mxu0 0
          %2386 = vmatpush1.bf16.msra.mxu0 0
          %2387 = vmatprep.subr.bf16.mxu0 0
          %2388 = vmatpush1.bf16.msra.mxu0 0
          %2389 = vmatprep.subr.bf16.mxu0 0
          %2390 = vmatpush1.bf16.msra.mxu0 0
          %2391 = vmatprep.subr.bf16.mxu0 0
          %2392 = vmatpush1.bf16.msra.mxu0 0
          %2393 = vmatprep.subr.bf16.mxu0 0
          %2394 = vmatpush1.bf16.msra.mxu0 0
          %2395 = vmatprep.subr.bf16.mxu0 0
          %2396 = vmatpush1.bf16.msra.mxu0 0
          %2397 = vmatprep.subr.bf16.mxu0 0
          %2398 = vmatpush1.bf16.msra.mxu0 0
          %2399 = vmatprep.subr.bf16.mxu0 0
          %2400 = vmatpush1.bf16.msra.mxu0 0
          %2401 = vmatprep.mubr.bf16.mxu0 0
          %2402 = vmatmul.mubr.bf16.gmra.mrb[0].mxu0 %v2368
          %v2403 = vpop.f32.mrb[0].mxu0
          %v2404 = vadd.f32 0.0, %v2403
          %v2405 = vpop.f32.mrb[0].mxu0
          %v2406 = vadd.f32 0.0, %v2405
          %v2407 = vpop.f32.mrb[0].mxu0
          %v2408 = vpop.f32.mrb[0].mxu0
          %2409 = vdwg.mxu0
          %2410 = vmatprep.subr.bf16.mxu0 %v1683
          %2411 = vmatpush1.bf16.msra.mxu0 %v1682
          %2412 = vmatprep.subr.bf16.mxu0 %v1687
          %2413 = vmatpush1.bf16.msra.mxu0 %v1686
          %2414 = vmatprep.subr.bf16.mxu0 %v1691
          %2415 = vmatpush1.bf16.msra.mxu0 %v1690
          %2416 = vmatprep.subr.bf16.mxu0 %v1695
          %2417 = vmatpush1.bf16.msra.mxu0 %v1694
          %2418 = vmatprep.subr.bf16.mxu0 %v1699
          %2419 = vmatpush1.bf16.msra.mxu0 %v1698
          %2420 = vmatprep.subr.bf16.mxu0 %v1703
          %2421 = vmatpush1.bf16.msra.mxu0 %v1702
          %2422 = vmatprep.subr.bf16.mxu0 %v1707
          %2423 = vmatpush1.bf16.msra.mxu0 %v1706
          %2424 = vmatprep.subr.bf16.mxu0 %v1711
          %2425 = vmatpush1.bf16.msra.mxu0 %v1710
          %2426 = vmatprep.subr.bf16.mxu0 0
          %2427 = vmatpush1.bf16.msra.mxu0 0
          %2428 = vmatprep.subr.bf16.mxu0 0
          %2429 = vmatpush1.bf16.msra.mxu0 0
          %2430 = vmatprep.subr.bf16.mxu0 0
          %2431 = vmatpush1.bf16.msra.mxu0 0
          %2432 = vmatprep.subr.bf16.mxu0 0
          %2433 = vmatpush1.bf16.msra.mxu0 0
          %2434 = vmatprep.subr.bf16.mxu0 0
          %2435 = vmatpush1.bf16.msra.mxu0 0
          %2436 = vmatprep.subr.bf16.mxu0 0
          %2437 = vmatpush1.bf16.msra.mxu0 0
          %2438 = vmatprep.subr.bf16.mxu0 0
          %2439 = vmatpush1.bf16.msra.mxu0 0
          %2440 = vmatprep.subr.bf16.mxu0 0
          %2441 = vmatpush1.bf16.msra.mxu0 0
          %2442 = vmatprep.mubr.bf16.mxu0 0
          %2443 = vmatmul.mubr.bf16.gmra.mrb[0].mxu0 %v2368
          %v2444 = vpop.f32.mrb[0].mxu0
          %v2445 = vadd.f32 0.0, %v2444
          %v2446 = vpop.f32.mrb[0].mxu0
          %v2447 = vadd.f32 0.0, %v2446
          %v2448 = vpop.f32.mrb[0].mxu0
          %v2449 = vpop.f32.mrb[0].mxu0
          %2450 = vdwg.mxu0
          %v2451 = vadd.f32 %v2364, %v2404
          %v2452 = vadd.f32 %v2365, %v2406
          %v2453 = vadd.f32 %v2366, %v2445
          %v2454 = vadd.f32 %v2367, %v2447
          %v2455 = vmul.f32 %v2451, 0.5
          %v2456 = vtanh.pop %v2455
          %v2457 = vadd.f32 %v2456, 1.0
          %v2458 = vmul.f32 %v2457, 0.5
          %v2459 = vmul.f32 %v2452, 0.5
          %v2460 = vtanh.pop %v2459
          %v2461 = vadd.f32 %v2460, 1.0
          %v2462 = vmul.f32 %v2461, 0.5
          %v2463 = vtanh.pop %v2453
          %v2464 = vmul.f32 %v2454, 0.5
          %v2465 = vtanh.pop %v2464
          %v2466 = vadd.f32 %v2465, 1.0
          %v2467 = vmul.f32 %v2466, 0.5
          %v2468 = vmul.f32 %v2462, %v2360
          %v2469 = vmul.f32 %v2458, %v2463
          %v2470 = vadd.f32 %v2468, %v2469
          %v2471 = vtanh.pop %v2470
          %v2472 = vmul.f32 %v2467, %v2471
          %s2473 = sadd.s32 %s404, 2
          %v2474 = vstv %s2473
          %vm2475 = vcmp.lt.s32.totalorder %v2474, %v367
          %v2476 = vsel %vm2475, 1, 0
          %2477 = vset.pattern.permute.xlu0 0
          %2478 = vperm.xlu0 %2477, %v2476
          %v2479 = vpop.permute.xlu0 %2478
          %vm2480 = vcmp.eq.s32.totalorder %v2479, 1
          %v2481 = vsel %vm2480, %v2472, 0.0
          %s2482 = scalar_lea.vmem %s335, 16 [#allocation10]
          %2483 = vst [vmem:[%s2482] sm:$0xff] %v2481
          %v2484 = vsel %vm2480, %v2472, %v2359
          %v2485 = vsel %vm2480, %v2470, %v2360
          %s2486 = scalar_lea.vmem %s299, 16 [#allocation7]
          %v2487 = vld [vmem:[%s2486] sm:$0xff]
          %v2488 = vld [vmem:[%s2486 + $0x8] sm:$0xff]
          %v2489 = vunpack.c.l.bf16 %v2487
          %v2490 = vunpack.c.h.bf16 %v2487
          %v2491 = vunpack.c.l.bf16 %v2488
          %v2492 = vunpack.c.h.bf16 %v2488
          %v2493 = vpack.c.bf16 %v2484, %v2484
          %2494 = vmatprep.subr.bf16.mxu0 %v1681
          %2495 = vmatpush1.bf16.msra.mxu0 %v1680
          %2496 = vmatprep.subr.bf16.mxu0 %v1685
          %2497 = vmatpush1.bf16.msra.mxu0 %v1684
          %2498 = vmatprep.subr.bf16.mxu0 %v1689
          %2499 = vmatpush1.bf16.msra.mxu0 %v1688
          %2500 = vmatprep.subr.bf16.mxu0 %v1693
          %2501 = vmatpush1.bf16.msra.mxu0 %v1692
          %2502 = vmatprep.subr.bf16.mxu0 %v1697
          %2503 = vmatpush1.bf16.msra.mxu0 %v1696
          %2504 = vmatprep.subr.bf16.mxu0 %v1701
          %2505 = vmatpush1.bf16.msra.mxu0 %v1700
          %2506 = vmatprep.subr.bf16.mxu0 %v1705
          %2507 = vmatpush1.bf16.msra.mxu0 %v1704
          %2508 = vmatprep.subr.bf16.mxu0 %v1709
          %2509 = vmatpush1.bf16.msra.mxu0 %v1708
          %2510 = vmatprep.subr.bf16.mxu0 0
          %2511 = vmatpush1.bf16.msra.mxu0 0
          %2512 = vmatprep.subr.bf16.mxu0 0
          %2513 = vmatpush1.bf16.msra.mxu0 0
          %2514 = vmatprep.subr.bf16.mxu0 0
          %2515 = vmatpush1.bf16.msra.mxu0 0
          %2516 = vmatprep.subr.bf16.mxu0 0
          %2517 = vmatpush1.bf16.msra.mxu0 0
          %2518 = vmatprep.subr.bf16.mxu0 0
          %2519 = vmatpush1.bf16.msra.mxu0 0
          %2520 = vmatprep.subr.bf16.mxu0 0
          %2521 = vmatpush1.bf16.msra.mxu0 0
          %2522 = vmatprep.subr.bf16.mxu0 0
          %2523 = vmatpush1.bf16.msra.mxu0 0
          %2524 = vmatprep.subr.bf16.mxu0 0
          %2525 = vmatpush1.bf16.msra.mxu0 0
          %2526 = vmatprep.mubr.bf16.mxu0 0
          %2527 = vmatmul.mubr.bf16.gmra.mrb[0].mxu0 %v2493
          %v2528 = vpop.f32.mrb[0].mxu0
          %v2529 = vadd.f32 0.0, %v2528
          %v2530 = vpop.f32.mrb[0].mxu0
          %v2531 = vadd.f32 0.0, %v2530
          %v2532 = vpop.f32.mrb[0].mxu0
          %v2533 = vpop.f32.mrb[0].mxu0
          %2534 = vdwg.mxu0
          %2535 = vmatprep.subr.bf16.mxu0 %v1683
          %2536 = vmatpush1.bf16.msra.mxu0 %v1682
          %2537 = vmatprep.subr.bf16.mxu0 %v1687
          %2538 = vmatpush1.bf16.msra.mxu0 %v1686
          %2539 = vmatprep.subr.bf16.mxu0 %v1691
          %2540 = vmatpush1.bf16.msra.mxu0 %v1690
          %2541 = vmatprep.subr.bf16.mxu0 %v1695
          %2542 = vmatpush1.bf16.msra.mxu0 %v1694
          %2543 = vmatprep.subr.bf16.mxu0 %v1699
          %2544 = vmatpush1.bf16.msra.mxu0 %v1698
          %2545 = vmatprep.subr.bf16.mxu0 %v1703
          %2546 = vmatpush1.bf16.msra.mxu0 %v1702
          %2547 = vmatprep.subr.bf16.mxu0 %v1707
          %2548 = vmatpush1.bf16.msra.mxu0 %v1706
          %2549 = vmatprep.subr.bf16.mxu0 %v1711
          %2550 = vmatpush1.bf16.msra.mxu0 %v1710
          %2551 = vmatprep.subr.bf16.mxu0 0
          %2552 = vmatpush1.bf16.msra.mxu0 0
          %2553 = vmatprep.subr.bf16.mxu0 0
          %2554 = vmatpush1.bf16.msra.mxu0 0
          %2555 = vmatprep.subr.bf16.mxu0 0
          %2556 = vmatpush1.bf16.msra.mxu0 0
          %2557 = vmatprep.subr.bf16.mxu0 0
          %2558 = vmatpush1.bf16.msra.mxu0 0
          %2559 = vmatprep.subr.bf16.mxu0 0
          %2560 = vmatpush1.bf16.msra.mxu0 0
          %2561 = vmatprep.subr.bf16.mxu0 0
          %2562 = vmatpush1.bf16.msra.mxu0 0
          %2563 = vmatprep.subr.bf16.mxu0 0
          %2564 = vmatpush1.bf16.msra.mxu0 0
          %2565 = vmatprep.subr.bf16.mxu0 0
          %2566 = vmatpush1.bf16.msra.mxu0 0
          %2567 = vmatprep.mubr.bf16.mxu0 0
          %2568 = vmatmul.mubr.bf16.gmra.mrb[0].mxu0 %v2493
          %v2569 = vpop.f32.mrb[0].mxu0
          %v2570 = vadd.f32 0.0, %v2569
          %v2571 = vpop.f32.mrb[0].mxu0
          %v2572 = vadd.f32 0.0, %v2571
          %v2573 = vpop.f32.mrb[0].mxu0
          %v2574 = vpop.f32.mrb[0].mxu0
          %2575 = vdwg.mxu0
          %v2576 = vadd.f32 %v2489, %v2529
          %v2577 = vadd.f32 %v2490, %v2531
          %v2578 = vadd.f32 %v2491, %v2570
          %v2579 = vadd.f32 %v2492, %v2572
          %v2580 = vmul.f32 %v2576, 0.5
          %v2581 = vtanh.pop %v2580
          %v2582 = vadd.f32 %v2581, 1.0
          %v2583 = vmul.f32 %v2582, 0.5
          %v2584 = vmul.f32 %v2577, 0.5
          %v2585 = vtanh.pop %v2584
          %v2586 = vadd.f32 %v2585, 1.0
          %v2587 = vmul.f32 %v2586, 0.5
          %v2588 = vtanh.pop %v2578
          %v2589 = vmul.f32 %v2579, 0.5
          %v2590 = vtanh.pop %v2589
          %v2591 = vadd.f32 %v2590, 1.0
          %v2592 = vmul.f32 %v2591, 0.5
          %v2593 = vmul.f32 %v2587, %v2485
          %v2594 = vmul.f32 %v2583, %v2588
          %v2595 = vadd.f32 %v2593, %v2594
          %v2596 = vtanh.pop %v2595
          %v2597 = vmul.f32 %v2592, %v2596
          %s2598 = sadd.s32 %s404, 1
          %v2599 = vstv %s2598
          %vm2600 = vcmp.lt.s32.totalorder %v2599, %v367
          %v2601 = vsel %vm2600, 1, 0
          %2602 = vset.pattern.permute.xlu0 0
          %2603 = vperm.xlu0 %2602, %v2601
          %v2604 = vpop.permute.xlu0 %2603
          %vm2605 = vcmp.eq.s32.totalorder %v2604, 1
          %v2606 = vsel %vm2605, %v2597, 0.0
          %s2607 = scalar_lea.vmem %s335, 8 [#allocation10]
          %2608 = vst [vmem:[%s2607] sm:$0xff] %v2606
          %v2609 = vsel %vm2605, %v2597, %v2484
          %v2610 = vsel %vm2605, %v2595, %v2485
          %v2611 = vld [vmem:[%s299] sm:$0xff]
          %v2612 = vld [vmem:[%s299 + $0x8] sm:$0xff]
          %v2613 = vunpack.c.l.bf16 %v2611
          %v2614 = vunpack.c.h.bf16 %v2611
          %v2615 = vunpack.c.l.bf16 %v2612
          %v2616 = vunpack.c.h.bf16 %v2612
          %v2617 = vpack.c.bf16 %v2609, %v2609
          %2618 = vmatprep.subr.bf16.mxu0 %v1681
          %2619 = vmatpush1.bf16.msra.mxu0 %v1680
          %2620 = vmatprep.subr.bf16.mxu0 %v1685
          %2621 = vmatpush1.bf16.msra.mxu0 %v1684
          %2622 = vmatprep.subr.bf16.mxu0 %v1689
          %2623 = vmatpush1.bf16.msra.mxu0 %v1688
          %2624 = vmatprep.subr.bf16.mxu0 %v1693
          %2625 = vmatpush1.bf16.msra.mxu0 %v1692
          %2626 = vmatprep.subr.bf16.mxu0 %v1697
          %2627 = vmatpush1.bf16.msra.mxu0 %v1696
          %2628 = vmatprep.subr.bf16.mxu0 %v1701
          %2629 = vmatpush1.bf16.msra.mxu0 %v1700
          %2630 = vmatprep.subr.bf16.mxu0 %v1705
          %2631 = vmatpush1.bf16.msra.mxu0 %v1704
          %2632 = vmatprep.subr.bf16.mxu0 %v1709
          %2633 = vmatpush1.bf16.msra.mxu0 %v1708
          %2634 = vmatprep.subr.bf16.mxu0 0
          %2635 = vmatpush1.bf16.msra.mxu0 0
          %2636 = vmatprep.subr.bf16.mxu0 0
          %2637 = vmatpush1.bf16.msra.mxu0 0
          %2638 = vmatprep.subr.bf16.mxu0 0
          %2639 = vmatpush1.bf16.msra.mxu0 0
          %2640 = vmatprep.subr.bf16.mxu0 0
          %2641 = vmatpush1.bf16.msra.mxu0 0
          %2642 = vmatprep.subr.bf16.mxu0 0
          %2643 = vmatpush1.bf16.msra.mxu0 0
          %2644 = vmatprep.subr.bf16.mxu0 0
          %2645 = vmatpush1.bf16.msra.mxu0 0
          %2646 = vmatprep.subr.bf16.mxu0 0
          %2647 = vmatpush1.bf16.msra.mxu0 0
          %2648 = vmatprep.subr.bf16.mxu0 0
          %2649 = vmatpush1.bf16.msra.mxu0 0
          %2650 = vmatprep.mubr.bf16.mxu0 0
          %2651 = vmatmul.mubr.bf16.gmra.mrb[0].mxu0 %v2617
          %v2652 = vpop.f32.mrb[0].mxu0
          %v2653 = vadd.f32 0.0, %v2652
          %v2654 = vpop.f32.mrb[0].mxu0
          %v2655 = vadd.f32 0.0, %v2654
          %v2656 = vpop.f32.mrb[0].mxu0
          %v2657 = vpop.f32.mrb[0].mxu0
          %2658 = vdwg.mxu0
          %2659 = vmatprep.subr.bf16.mxu0 %v1683
          %2660 = vmatpush1.bf16.msra.mxu0 %v1682
          %2661 = vmatprep.subr.bf16.mxu0 %v1687
          %2662 = vmatpush1.bf16.msra.mxu0 %v1686
          %2663 = vmatprep.subr.bf16.mxu0 %v1691
          %2664 = vmatpush1.bf16.msra.mxu0 %v1690
          %2665 = vmatprep.subr.bf16.mxu0 %v1695
          %2666 = vmatpush1.bf16.msra.mxu0 %v1694
          %2667 = vmatprep.subr.bf16.mxu0 %v1699
          %2668 = vmatpush1.bf16.msra.mxu0 %v1698
          %2669 = vmatprep.subr.bf16.mxu0 %v1703
          %2670 = vmatpush1.bf16.msra.mxu0 %v1702
          %2671 = vmatprep.subr.bf16.mxu0 %v1707
          %2672 = vmatpush1.bf16.msra.mxu0 %v1706
          %2673 = vmatprep.subr.bf16.mxu0 %v1711
          %2674 = vmatpush1.bf16.msra.mxu0 %v1710
          %2675 = vmatprep.subr.bf16.mxu0 0
          %2676 = vmatpush1.bf16.msra.mxu0 0
          %2677 = vmatprep.subr.bf16.mxu0 0
          %2678 = vmatpush1.bf16.msra.mxu0 0
          %2679 = vmatprep.subr.bf16.mxu0 0
          %2680 = vmatpush1.bf16.msra.mxu0 0
          %2681 = vmatprep.subr.bf16.mxu0 0
          %2682 = vmatpush1.bf16.msra.mxu0 0
          %2683 = vmatprep.subr.bf16.mxu0 0
          %2684 = vmatpush1.bf16.msra.mxu0 0
          %2685 = vmatprep.subr.bf16.mxu0 0
          %2686 = vmatpush1.bf16.msra.mxu0 0
          %2687 = vmatprep.subr.bf16.mxu0 0
          %2688 = vmatpush1.bf16.msra.mxu0 0
          %2689 = vmatprep.subr.bf16.mxu0 0
          %2690 = vmatpush1.bf16.msra.mxu0 0
          %2691 = vmatprep.mubr.bf16.mxu0 0
          %2692 = vmatmul.mubr.bf16.gmra.mrb[0].mxu0 %v2617
          %v2693 = vpop.f32.mrb[0].mxu0
          %v2694 = vadd.f32 0.0, %v2693
          %v2695 = vpop.f32.mrb[0].mxu0
          %v2696 = vadd.f32 0.0, %v2695
          %v2697 = vpop.f32.mrb[0].mxu0
          %v2698 = vpop.f32.mrb[0].mxu0
          %2699 = vdwg.mxu0
          %v2700 = vadd.f32 %v2613, %v2653
          %v2701 = vadd.f32 %v2614, %v2655
          %v2702 = vadd.f32 %v2615, %v2694
          %v2703 = vadd.f32 %v2616, %v2696
          %v2704 = vmul.f32 %v2700, 0.5
          %v2705 = vtanh.pop %v2704
          %v2706 = vadd.f32 %v2705, 1.0
          %v2707 = vmul.f32 %v2706, 0.5
          %v2708 = vmul.f32 %v2701, 0.5
          %v2709 = vtanh.pop %v2708
          %v2710 = vadd.f32 %v2709, 1.0
          %v2711 = vmul.f32 %v2710, 0.5
          %v2712 = vtanh.pop %v2702
          %v2713 = vmul.f32 %v2703, 0.5
          %v2714 = vtanh.pop %v2713
          %v2715 = vadd.f32 %v2714, 1.0
          %v2716 = vmul.f32 %v2715, 0.5
          %v2717 = vmul.f32 %v2711, %v2610
          %v2718 = vmul.f32 %v2707, %v2712
          %v2719 = vadd.f32 %v2717, %v2718
          %v2720 = vtanh.pop %v2719
          %v2721 = vmul.f32 %v2716, %v2720
          %v2722 = vstv %s404
          %vm2723 = vcmp.lt.s32.totalorder %v2722, %v367
          %v2724 = vsel %vm2723, 1, 0
          %2725 = vset.pattern.permute.xlu0 0
          %2726 = vperm.xlu0 %2725, %v2724
          %v2727 = vpop.permute.xlu0 %2726
          %vm2728 = vcmp.eq.s32.totalorder %v2727, 1
          %v2729 = vsel %vm2728, %v2721, 0.0
          %2730 = vst [vmem:[%s335] sm:$0xff] %v2729
          %v2731 = vsel %vm2728, %v2721, %v2609
          %v2732 = vsel %vm2728, %v2719, %v2610
          %2733 = vst [vmem:[#allocation2] sm:$0xff] %v2731
          %2734 = vst [vmem:[#allocation3] sm:$0xff] %v2732
        $region56: #{encoder_rnn_forward.2} parent=31 // pred_fallthru
          _
        %v2735 = vld [vmem:[#allocation2] sm:$0xff]
        %2736 = vst [vmem:[%s342] sm:$0xff] %v2735
        %v2737 = vld [vmem:[#allocation3] sm:$0xff]
        %2738 = vst [vmem:[%s349] sm:$0xff] %v2737
        %s2739 = sand.u32 %s140, 1
        %s2740 = scalar_lea.sflag [#allocation6], %s2739
        %s2741 = sand.u32 %s140, 1
        %s2742 = smul.addr %s2741, 64
        %s2743 = scalar_lea.vmem [#allocation10], %s2742
        %s2744 = sand.u32 %s27, 1
        %s2745 = scalar_lea.sflag [#allocation12], %s2744
        %s2746 = sand.u32 %s166, 1
        %s2747 = smul.addr %s2746, 8
        %s2748 = scalar_lea.vmem [#allocation11], %s2747
        %s2749 = sand.u32 %s27, 1
        %s2750 = scalar_lea.sflag [#allocation12], %s2749
        %s2751 = sand.u32 %s192, 1
        %s2752 = smul.addr %s2751, 8
        %s2753 = scalar_lea.vmem [#allocation13], %s2752
        // Predicated region
        $region57: #{encoder_rnn_forward.2} parent=31 // pred_check
          %p2754 = pneg %p150
        $region58: #{encoder_rnn_forward.2} parent=31 // pred_check_branch
          %2756 = sbr.rel (%p2754) target = $region60
        $region59: #{encoder_rnn_forward.2} parent=31 // pred_region
          %s2757 = smul.u32 %s32, 2
          %s2758 = ssub.s32 0, %s2757
          %s2759 = smul.u32 %s31, %s2758
          %s2760 = sadd.s32 %s32, %s2759
          %s2761 = smul.u32 8, %s2760
          %s2763 = ssub.s32 1024, 1024
          %2764 = vsyncadd %s2740, %s2763
          %s2765 = smul.addr %s31, 8
          %s2766 = sadd.s32 %s2761, %s2765
          %s2767 = smul.addr %s2766, 128
          %s2768 = scalar_lea.hbm %s3, %s2767
          %s2769 = sshll.u32 %s2743, 4
          %s2770 = int_to_ptr.vmem [resolvable:$true] %s2769
          %2775 = dma.vmem_to_hbm [thread:$0]  %s2770, 1024, %s2768, %s2740, 128, 128, 8
        $region60: #{encoder_rnn_forward.2} parent=31 // pred_fallthru
          _
        // Predicated region
        $region61: #{encoder_rnn_forward.2} parent=31 // pred_check
          %p2776 = pneg %p176
        $region62: #{encoder_rnn_forward.2} parent=31 // pred_check_branch
          %2778 = sbr.rel (%p2776) target = $region64
        $region63: #{encoder_rnn_forward.2} parent=31 // pred_region
          %s2780 = ssub.s32 128, 128
          %2781 = vsyncadd %s2745, %s2780
          %s2782 = smul.addr %s31, 128
          %s2783 = scalar_lea.hbm %s4, %s2782
          %s2785 = sshll.u32 %s2748, 4
          %s2786 = int_to_ptr.vmem [resolvable:$true] %s2785
          %2788 = dma.vmem_to_hbm [thread:$0]  %s2786, 128, %s2783, %s2745
        $region64: #{encoder_rnn_forward.2} parent=31 // pred_fallthru
          _
        // Predicated region
        $region65: #{encoder_rnn_forward.2} parent=31 // pred_check
          %p2789 = pneg %p202
        $region66: #{encoder_rnn_forward.2} parent=31 // pred_check_branch
          %2791 = sbr.rel (%p2789) target = $region68
        $region67: #{encoder_rnn_forward.2} parent=31 // pred_region
          %s2793 = ssub.s32 128, 128
          %2794 = vsyncadd %s2750, %s2793
          %s2795 = smul.addr %s31, 128
          %s2796 = scalar_lea.hbm %s5, %s2795
          %s2798 = sshll.u32 %s2753, 4
          %s2799 = int_to_ptr.vmem [resolvable:$true] %s2798
          %2801 = dma.vmem_to_hbm [thread:$0]  %s2799, 128, %s2796, %s2750
        $region68: #{encoder_rnn_forward.2} parent=31 // pred_fallthru
          _
      $region32: #{encoder_rnn_forward.2} parent=5 // pred_fallthru
        _
      %p2802 = scmp.le.s32.totalorder 2, %s22
      // Predicated region
      $region69: #{encoder_rnn_forward.2} parent=5 // pred_check
        %p2803 = pneg %p2802
      $region70: #{encoder_rnn_forward.2} parent=5 // pred_check_branch
        %2805 = sbr.rel (%p2803) target = $region72
      $region71: #{encoder_rnn_forward.2} parent=5 // pred_region
        %s2806 = ssub.s32 %s22, 2
        // Predicated region
        $region73: #{encoder_rnn_forward.2} parent=71 // pred_check
          %p2807 = pneg %p156
        $region74: #{encoder_rnn_forward.2} parent=71 // pred_check_branch
          %2809 = sbr.rel (%p2807) target = $region76
        $region75: #{encoder_rnn_forward.2} parent=71 // pred_region
          %s2810 = sand.u32 %s141, 1
          %s2811 = scalar_lea.sflag [#allocation6], %s2810
          %s2812 = sand.u32 %s141, 1
          %s2813 = smul.addr %s2812, 64
          %s2814 = scalar_lea.vmem [#allocation10], %s2813
          %2815 = dma.done %s2811, 1024
        $region76: #{encoder_rnn_forward.2} parent=71 // pred_fallthru
          _
        // Predicated region
        $region77: #{encoder_rnn_forward.2} parent=71 // pred_check
          %p2816 = pneg %p182
        $region78: #{encoder_rnn_forward.2} parent=71 // pred_check_branch
          %2818 = sbr.rel (%p2816) target = $region80
        $region79: #{encoder_rnn_forward.2} parent=71 // pred_region
          %s2819 = sand.u32 %s28, 1
          %s2820 = scalar_lea.sflag [#allocation12], %s2819
          %s2821 = sand.u32 %s167, 1
          %s2822 = smul.addr %s2821, 8
          %s2823 = scalar_lea.vmem [#allocation11], %s2822
          %2824 = dma.done %s2820, 128
        $region80: #{encoder_rnn_forward.2} parent=71 // pred_fallthru
          _
        // Predicated region
        $region81: #{encoder_rnn_forward.2} parent=71 // pred_check
          %p2825 = pneg %p208
        $region82: #{encoder_rnn_forward.2} parent=71 // pred_check_branch
          %2827 = sbr.rel (%p2825) target = $region84
        $region83: #{encoder_rnn_forward.2} parent=71 // pred_region
          %s2828 = sand.u32 %s28, 1
          %s2829 = scalar_lea.sflag [#allocation12], %s2828
          %s2830 = sand.u32 %s193, 1
          %s2831 = smul.addr %s2830, 8
          %s2832 = scalar_lea.vmem [#allocation13], %s2831
          %2833 = dma.done %s2829, 128
        $region84: #{encoder_rnn_forward.2} parent=71 // pred_fallthru
          _
      $region72: #{encoder_rnn_forward.2} parent=5 // pred_fallthru
        _
    $region6: #{encoder_rnn_forward.2} parent=1 // loop_footer
      %s26 = sadd.s32 1, %s22
    $region7: #{encoder_rnn_forward.2} parent=1 // loop_footer_branch
      %21 = sbr.rel target = $region3
    $region8: #{encoder_rnn_forward.2} parent=1 // loop_exit
      _
    %2834 = vsyncpa [#allocation5], 1
    %s2835 = scalar_lea.sflag [#allocation5], 1
    %2836 = vsyncpa %s2835, 1
    %2837 = vsyncpa [#allocation8], 1
    %s2838 = scalar_lea.sflag [#allocation8], 1
    %2839 = vsyncpa %s2838, 1
    %2840 = vsyncpa [#allocation6], 1
    %s2841 = scalar_lea.sflag [#allocation6], 1
    %2842 = vsyncpa %s2841, 1
    %2843 = vsyncpa [#allocation12], 1
    %s2844 = scalar_lea.sflag [#allocation12], 1
    %2845 = vsyncpa %s2844, 1

</llo_original>
